<compile_context>
chip_gen: v5e
topology: v5e:2x2
jax: 0.10.0
libtpu: 0.0.40
codegen_flags: <defaults>
</compile_context>

<pallas_src>
import functools

import jax
import jax.numpy as jnp
from jax import lax
from jax.experimental import pallas as pl
from jax.experimental.pallas import tpu as pltpu


# ---------------------------------------------------------------------------
# Fused feature-extractor kernel.
# grid=(3,) over branches (pcc / cosine / gfk), sequential ("arbitrary").
# Branch-invariant work is cached in VMEM scratch on the first grid step.
# ---------------------------------------------------------------------------
def _feature_kernel(x_ref, w1b_ref, w2b_ref, w1ct_ref, w2ct_ref, rep_ref,
                    gfk_ref, w_ref, wt_ref, gamma_ref, beta_ref, cheb_ref,
                    out_ref,
                    xatt_s, pcc_s, cos_s, mean_s, rstd_s, stack_s,
                    *, B, C, F, D, K, O):
    FD = F * D
    branch = pl.program_id(0)
    dn = (((1,), (1,)), ((), ()))                    # X @ Y^T : contract last dims

    # ---- branch-invariant work: computed once, cached in VMEM scratch --------
    @pl.when(branch == 0)
    def _init():
        inv_f = 1.0 / float(F)
        for b in range(B):        # small B; every result goes straight to scratch
            xb = x_ref[b]                                            # (C, FD)

            # band SE: pool over (channel, feature), gate per band.
            pooled = jnp.mean(xb, axis=0, keepdims=True)             # (1, FD)
            pb = lax.dot_general(pooled, rep_ref[...], dn,
                                 preferred_element_type=jnp.float32) * inv_f  # (1, D)
            hb = jnp.maximum(
                jnp.dot(pb, w1b_ref[...], preferred_element_type=jnp.float32), 0.0)
            sb = jax.nn.sigmoid(
                jnp.dot(hb, w2b_ref[...], preferred_element_type=jnp.float32))  # (1, D)
            sb_fd = jnp.dot(sb, rep_ref[...],
                            preferred_element_type=jnp.float32)      # (1, FD)
            xs = xb * sb_fd

            # channel SE: pool over (feature, band), gate per channel.
            pc = jnp.mean(xs, axis=1, keepdims=True)                 # (C, 1)
            hc = jnp.maximum(
                jnp.dot(w1ct_ref[...], pc, preferred_element_type=jnp.float32), 0.0)
            sc = jax.nn.sigmoid(
                jnp.dot(w2ct_ref[...], hc, preferred_element_type=jnp.float32))  # (C, 1)
            xa = xs * sc
            xatt_s[b] = xa

            # batch_pcc (reference has no epsilon).
            xm = xa - jnp.mean(xa, axis=1, keepdims=True)
            c1 = lax.dot_general(xm, xm, dn, preferred_element_type=jnp.float32)
            c2 = jnp.sqrt(jnp.sum(xm * xm, axis=1, keepdims=True))
            pcc_s[b] = c1 / lax.dot_general(c2, c2, dn,
                                            preferred_element_type=jnp.float32)

            # batch_cosine_similarity (F.normalize, p=2, eps=1e-8).
            nrm = jnp.sqrt(jnp.sum(xa * xa, axis=1, keepdims=True))
            xn = xa / jnp.maximum(nrm, 1e-8)
            cos_s[b] = lax.dot_general(xn, xn, dn,
                                       preferred_element_type=jnp.float32)

        # BatchNorm1d(FD): training-mode stats over (batch, channel).
        xa_all = xatt_s[...]                                         # (B, C, FD)
        mean = jnp.mean(jnp.mean(xa_all, axis=0, keepdims=True),
                        axis=1, keepdims=True)                       # (1, 1, FD)
        d0 = xa_all - mean
        var = jnp.mean(jnp.mean(d0 * d0, axis=0, keepdims=True),
                       axis=1, keepdims=True)                        # biased var
        mean_s[...] = mean
        rstd_s[...] = lax.rsqrt(var + 1e-5)

    # ---- per-branch DGCNN (runs every grid step; fully batched over B) -------
    ri = lax.broadcasted_iota(jnp.int32, (C, C), 0)
    ci = lax.broadcasted_iota(jnp.int32, (C, C), 1)
    one_minus_eye = (ri != ci).astype(jnp.float32)                   # (C, C)

    m0 = (branch == 0).astype(jnp.float32)
    m1 = (branch == 1).astype(jnp.float32)
    m2 = 1.0 - m0 - m1
    adj = (m0 * pcc_s[...] + m1 * cos_s[...]
           + m2 * jnp.broadcast_to(gfk_ref[...], (B, C, C)))         # (B, C, C)

    # normalize_A(adj @ W, lmax=2).  adj is exactly symmetric, so the transposed
    # term relu((adj@W)^T)*(1-I) == relu(W^T @ adj)*(1-I): avoids an XLU transpose.
    w_b = jnp.broadcast_to(w_ref[...], (B, C, C))
    wt_b = jnp.broadcast_to(wt_ref[...], (B, C, C))
    m = jnp.maximum(jnp.einsum('bij,bjk->bik', adj, w_b,
                               preferred_element_type=jnp.float32), 0.0) * one_minus_eye
    mt = jnp.maximum(jnp.einsum('bij,bjk->bik', wt_b, adj,
                                preferred_element_type=jnp.float32), 0.0) * one_minus_eye
    a_sym = m + mt                                                   # A + A^T
    dinv_c = lax.rsqrt(jnp.sum(a_sym, axis=2, keepdims=True) + 1e-10)  # (B, C, 1)
    # column sums == row sums because a_sym is symmetric (matches torch reference).
    dinv_r = lax.rsqrt(jnp.sum(a_sym, axis=1, keepdims=True) + 1e-10)  # (B, 1, C)
    # Lnorm = 2*(I - D A D)/lmax - I  with lmax=2  ==>  -D A D.
    lnorm = -(dinv_c * a_sym * dinv_r)                               # (B, C, C)

    # BatchNorm apply with this branch's gamma/beta (stats are shared).
    bn_scale = gamma_ref[...] * rstd_s[...]                          # (1, 1, FD)
    bn_shift = beta_ref[...] - mean_s[...] * bn_scale
    xbn = xatt_s[...] * bn_scale + bn_shift                          # (B, C, FD)

    # Chebynet, fused: stage [T0 x | T1 x | ... | T_{K-1} x] for all batches as a
    # (B*C, K*FD) operand and hit the MXU once with cheb reshaped to (K*FD, O).
    for b in range(B):
        stack_s[b * C:(b + 1) * C, 0:FD] = xbn[b]
    tx = xbn
    for k in range(1, K):
        tx = jnp.einsum('bij,bjf->bif', lnorm, tx,
                        preferred_element_type=jnp.float32)          # T_k @ x
        for b in range(B):
            stack_s[b * C:(b + 1) * C, k * FD:(k + 1) * FD] = tx[b]
    feat2 = jnp.dot(stack_s[...], cheb_ref[0],
                    preferred_element_type=jnp.float32)              # (B*C, O)
    feat2 = jnp.maximum(feat2, 0.0)                                  # F.relu

    # lane-dense write: branch block is a 128-lane slab of the (B, 3*C*O) output.
    for b in range(B):
        for c in range(C):
            out_ref[b:b + 1, c * O:(c + 1) * O] = feat2[b * C + c:b * C + c + 1, :]


def feature_extractor(x, params, k_adj):
    """x: [B, C, F, D] -> concatenated branch features [B, 3*C*graph_out]."""
    B, C, F, D = x.shape
    FD = F * D
    O = params["pcc"]["cheb_w"].shape[-1]
    K = k_adj

    x_c_fd = x.reshape(B, C, FD)                       # free row-major view

    names = ("pcc", "mi", "gfk")
    w_stack = jnp.stack([params[n]["W"] for n in names])                 # (3, C, C)
    wt_stack = jnp.transpose(w_stack, (0, 2, 1))                         # (3, C, C)
    gamma = jnp.stack([params[n]["bn_gamma"] for n in names]).reshape(3, 1, FD)
    beta = jnp.stack([params[n]["bn_beta"] for n in names]).reshape(3, 1, FD)
    cheb = jnp.stack([params[n]["cheb_w"] for n in names]).reshape(3, K * FD, O)

    # channel-SE weights in column-vector orientation (avoids in-kernel transposes)
    w1ct = params["chan_w1"].T                                           # (hidden, C)
    w2ct = params["chan_w2"].T                                           # (C, hidden)
    # constant replication matrix: (1, D) band scale <-> (1, F*D) flattened layout
    band_rep = jnp.tile(jnp.eye(D, dtype=jnp.float32), (1, F))           # (D, FD)

    out = pl.pallas_call(
        functools.partial(_feature_kernel, B=B, C=C, F=F, D=D, K=K, O=O),
        out_shape=jax.ShapeDtypeStruct((B, 3 * C * O), jnp.float32),
        grid=(3,),
        in_specs=[
            pl.BlockSpec((B, C, FD), lambda i: (0, 0, 0)),
            pl.BlockSpec(params["band_w1"].shape, lambda i: (0, 0)),
            pl.BlockSpec(params["band_w2"].shape, lambda i: (0, 0)),
            pl.BlockSpec(w1ct.shape, lambda i: (0, 0)),
            pl.BlockSpec(w2ct.shape, lambda i: (0, 0)),
            pl.BlockSpec((D, FD), lambda i: (0, 0)),
            pl.BlockSpec((C, C), lambda i: (0, 0)),
            pl.BlockSpec((1, C, C), lambda i: (i, 0, 0)),
            pl.BlockSpec((1, C, C), lambda i: (i, 0, 0)),
            pl.BlockSpec((1, 1, FD), lambda i: (i, 0, 0)),
            pl.BlockSpec((1, 1, FD), lambda i: (i, 0, 0)),
            pl.BlockSpec((1, K * FD, O), lambda i: (i, 0, 0)),
        ],
        out_specs=pl.BlockSpec((B, C * O), lambda i: (0, i)),
        scratch_shapes=[
            pltpu.VMEM((B, C, FD), jnp.float32),       # attended x
            pltpu.VMEM((B, C, C), jnp.float32),        # pcc adjacency
            pltpu.VMEM((B, C, C), jnp.float32),        # cosine adjacency
            pltpu.VMEM((1, 1, FD), jnp.float32),       # BN mean
            pltpu.VMEM((1, 1, FD), jnp.float32),       # BN rstd
            pltpu.VMEM((B * C, K * FD), jnp.float32),  # stacked Chebyshev operand
        ],
        compiler_params=pltpu.CompilerParams(
            # "arbitrary": sequential grid so the branch-0 shared work cached in
            # scratch persists across branches (required for correctness here;
            # also removes 3x recompute on single-TC v5e/v6e).
            dimension_semantics=("arbitrary",)),
    )(x_c_fd, params["band_w1"], params["band_w2"], w1ct, w2ct, band_rep,
      params["gfk_adj"], w_stack, wt_stack, gamma, beta, cheb)

    return out                                          # (B, 3*C*O), torch.cat layout


# ---------------------------------------------------------------------------
# Classifier kernel: Linear(384,4096) + Dropout(id) + LeakyReLU + Linear(4096,nclass)
# Hidden dim streamed in 2048-wide tiles; bf16 weights, f32 accumulation in the
# resident output block; fc2 stored transposed (nclass, H) for dense tiles.
# ---------------------------------------------------------------------------
def _mlp_kernel(x_ref, w1_ref, b1_ref, w2t_ref, b2_ref, out_ref):
    h = pl.program_id(0)
    xb = x_ref[...].astype(jnp.bfloat16)                                 # (B, Fin)
    a = jnp.dot(xb, w1_ref[...], preferred_element_type=jnp.float32) + b1_ref[...]
    a = jnp.where(a > 0, a, 0.01 * a)                                    # LeakyReLU(0.01)
    part = lax.dot_general(a.astype(jnp.bfloat16), w2t_ref[...],
                           (((1,), (1,)), ((), ())),
                           preferred_element_type=jnp.float32)           # (B, Nc)

    @pl.when(h == 0)
    def _():
        out_ref[...] = jnp.broadcast_to(b2_ref[...], out_ref.shape)

    out_ref[...] += part


def classifier(x, w1, b1, w2t, b2, *, h_tile=2048):
    B, Fin = x.shape
    H = w1.shape[1]
    Nc = w2t.shape[0]
    assert H % h_tile == 0
    return pl.pallas_call(
        _mlp_kernel,
        out_shape=jax.ShapeDtypeStruct((B, Nc), jnp.float32),
        grid=(H // h_tile,),
        in_specs=[
            pl.BlockSpec((B, Fin), lambda h: (0, 0)),
            pl.BlockSpec((Fin, h_tile), lambda h: (0, h)),
            pl.BlockSpec((1, h_tile), lambda h: (0, h)),
            pl.BlockSpec((Nc, h_tile), lambda h: (0, h)),
            pl.BlockSpec((1, Nc), lambda h: (0, 0)),
        ],
        out_specs=pl.BlockSpec((B, Nc), lambda h: (0, 0)),
        compiler_params=pltpu.CompilerParams(dimension_semantics=("arbitrary",)),
    )(x, w1, b1, w2t, b2)


# ---------------------------------------------------------------------------
# MAGCN forward (glue = parameter stacking / free reshapes only)
# ---------------------------------------------------------------------------
def magcn_forward(params, x, *, k_adj):
    feat = feature_extractor(x, params, k_adj)              # (B, 3*C*graph_out)
    return classifier(feat, params["fc1_w"], params["fc1_b"],
                      params["fc2_w_t"], params["fc2_b"])


# ---------------------------------------------------------------------------
# Deterministic parameter construction
# ---------------------------------------------------------------------------
def init_params(key, C, F, D, k_adj, graph_out, nclass, se_squeeze_ratio=4):
    FD = F * D
    band_hidden = max(D // 2, 1)                    # SELayer(bands, 2)
    chan_red = max(C // se_squeeze_ratio, 1)        # SELayer(C, C // se_squeeze_ratio)
    chan_hidden = max(C // chan_red, 1)
    keys = jax.random.split(key, 12)

    def u(k, shape, lo, hi):
        return jax.random.uniform(k, shape, jnp.float32, lo, hi)

    g = u(keys[6], (C, C), 0.0, 1.0)
    params = {
        "band_w1": u(keys[0], (D, band_hidden), -0.3, 0.3),
        "band_w2": u(keys[1], (band_hidden, D), -0.3, 0.3),
        "chan_w1": u(keys[2], (C, chan_hidden), -0.3, 0.3),
        "chan_w2": u(keys[3], (chan_hidden, C), -0.3, 0.3),
        "gfk_adj": (g + g.T) * 0.5,                 # synthetic spatial adjacency
        # fc weights stored in bf16: halves HBM traffic of the bandwidth-bound MLP
        # (matmul inputs bf16, accumulation in f32).  fc2 stored transposed.
        "fc1_w": u(keys[4], (graph_out * C * 3, 4096), -0.05, 0.05).astype(jnp.bfloat16),
        "fc1_b": jnp.zeros((1, 4096), jnp.float32),
        "fc2_w_t": u(keys[5], (nclass, 4096), -0.02, 0.02).astype(jnp.bfloat16),
        "fc2_b": jnp.zeros((1, nclass), jnp.float32),
    }
    for i, name in enumerate(("pcc", "mi", "gfk")):
        k1, k2 = jax.random.split(keys[7 + i])
        params[name] = {
            "bn_gamma": jnp.ones((FD,), jnp.float32),
            "bn_beta": jnp.zeros((FD,), jnp.float32),
            "W": u(k1, (C, C), 0.01, 0.5),          # nn.init.uniform_(W, 0.01, 0.5)
            "cheb_w": u(k2, (k_adj, FD, graph_out), -0.25, 0.25),
        }
    return params


if __name__ == "__main__":
    # small config consistent with the module:
    # batch=2, channels_num=8, feature_len=8, bands=5, kadj=3, graph_out=16, nclass=3
    B, C, F, D = 2, 8, 8, 5
    k_adj, graph_out, nclass = 3, 16, 3

    key = jax.random.PRNGKey(0)
    kx, kp = jax.random.split(key)
    x = jax.random.normal(kx, (B, C, F, D), jnp.float32)
    params = init_params(kp, C, F, D, k_adj, graph_out, nclass)

    fwd = jax.jit(functools.partial(magcn_forward, k_adj=k_adj))
    out = jax.block_until_ready(fwd(params, x))
    assert out.shape == (B, nclass), out.shape
    assert bool(jnp.all(jnp.isfinite(out)))
    print("KERNEL_OK")
</pallas_src>

<mosaic_0001>
module attributes {stable_mosaic.version = 11 : i64} {
  func.func @_mlp_kernel(%arg0: i32, %arg1: memref<2x384xf32, #tpu.memory_space<vmem>>, %arg2: memref<384x2048xbf16, #tpu.memory_space<vmem>>, %arg3: memref<1x2048xf32, #tpu.memory_space<vmem>>, %arg4: memref<3x2048xbf16, #tpu.memory_space<vmem>>, %arg5: memref<1x3xf32, #tpu.memory_space<vmem>>, %arg6: memref<2x3xf32, #tpu.memory_space<vmem>>) attributes {dimension_semantics = [#tpu.dimension_semantics<arbitrary>], iteration_bounds = array<i64: 2>, scalar_prefetch = 0 : i64, scratch_operands = 0 : i64, tpu.core_type = #tpu.core_type<tc>, window_params = [{pipeline_mode = #tpu.pipeline_mode<synchronous>, transform_indices = @transform_0, window_bounds = array<i64: 2, 384>}, {transform_indices = @transform_1, window_bounds = array<i64: 384, 2048>}, {transform_indices = @transform_2, window_bounds = array<i64: 1, 2048>}, {transform_indices = @transform_3, window_bounds = array<i64: 3, 2048>}, {pipeline_mode = #tpu.pipeline_mode<synchronous>, transform_indices = @transform_4, window_bounds = array<i64: 1, 3>}, {pipeline_mode = #tpu.pipeline_mode<synchronous>, transform_indices = @transform_5, window_bounds = array<i64: 2, 3>}]} {
    %c0 = arith.constant 0 : index
    %c0_0 = arith.constant 0 : index
    %0 = vector.load %arg1[%c0, %c0_0] : memref<2x384xf32, #tpu.memory_space<vmem>>, vector<2x384xf32>
    %1 = arith.truncf %0 : vector<2x384xf32> to vector<2x384xbf16>
    %c0_1 = arith.constant 0 : index
    %c0_2 = arith.constant 0 : index
    %2 = vector.load %arg2[%c0_1, %c0_2] : memref<384x2048xbf16, #tpu.memory_space<vmem>>, vector<384x2048xbf16>
    %cst = arith.constant dense<0.000000e+00> : vector<2x2048xf32>
    %3 = tpu.matmul %1, %2, %cst {dimension_numbers = #tpu.dot_dimension_numbers<[1], [0], [0], [1], [0, 0, 1, 1], [], []>} : vector<2x384xbf16>, vector<384x2048xbf16>, vector<2x2048xf32> -> vector<2x2048xf32>
    %c0_3 = arith.constant 0 : index
    %c0_4 = arith.constant 0 : index
    %4 = vector.load %arg3[%c0_3, %c0_4] : memref<1x2048xf32, #tpu.memory_space<vmem>>, vector<1x2048xf32>
    %5 = vector.broadcast %4 : vector<1x2048xf32> to vector<2x2048xf32>
    %6 = arith.addf %3, %5 : vector<2x2048xf32>
    %cst_5 = arith.constant 0.000000e+00 : f32
    %7 = vector.broadcast %cst_5 : f32 to vector<2x2048xf32>
    %8 = arith.cmpf ogt, %6, %7 : vector<2x2048xf32>
    %cst_6 = arith.constant 0.00999999977 : f32
    %9 = vector.broadcast %cst_6 : f32 to vector<2x2048xf32>
    %10 = arith.mulf %9, %6 : vector<2x2048xf32>
    %11 = arith.select %8, %6, %10 : vector<2x2048xi1>, vector<2x2048xf32>
    %12 = arith.truncf %11 : vector<2x2048xf32> to vector<2x2048xbf16>
    %c0_7 = arith.constant 0 : index
    %c0_8 = arith.constant 0 : index
    %13 = vector.load %arg4[%c0_7, %c0_8] : memref<3x2048xbf16, #tpu.memory_space<vmem>>, vector<3x2048xbf16>
    %cst_9 = arith.constant dense<0.000000e+00> : vector<2x3xf32>
    %14 = tpu.matmul %12, %13, %cst_9 {dimension_numbers = #tpu.dot_dimension_numbers<[1], [1], [0], [0], [0, 0, 1, 0], [], []>} : vector<2x2048xbf16>, vector<3x2048xbf16>, vector<2x3xf32> -> vector<2x3xf32>
    %c0_i32 = arith.constant 0 : i32
    %15 = arith.cmpi eq, %arg0, %c0_i32 : i32
    %16 = arith.extui %15 : i1 to i32
    %c0_i32_10 = arith.constant 0 : i32
    %17 = arith.cmpi ne, %16, %c0_i32_10 : i32
    scf.if %17 {
      %c0_15 = arith.constant 0 : index
      %c0_16 = arith.constant 0 : index
      %21 = vector.load %arg5[%c0_15, %c0_16] : memref<1x3xf32, #tpu.memory_space<vmem>>, vector<1x3xf32>
      %22 = vector.shape_cast %21 : vector<1x3xf32> to vector<1x3xf32>
      %23 = vector.broadcast %22 : vector<1x3xf32> to vector<2x3xf32>
      %c0_17 = arith.constant 0 : index
      %c0_18 = arith.constant 0 : index
      %24 = vector.load %arg6[%c0_17, %c0_18] : memref<2x3xf32, #tpu.memory_space<vmem>>, vector<2x3xf32>
      tpu.vector_store %arg6[%c0_17, %c0_18], %23 {strides = array<i32>} : memref<2x3xf32, #tpu.memory_space<vmem>>, vector<2x3xf32>,
    } else {
    }
    %c0_11 = arith.constant 0 : index
    %c0_12 = arith.constant 0 : index
    %18 = vector.load %arg6[%c0_11, %c0_12] : memref<2x3xf32, #tpu.memory_space<vmem>>, vector<2x3xf32>
    %19 = arith.addf %18, %14 : vector<2x3xf32>
    %c0_13 = arith.constant 0 : index
    %c0_14 = arith.constant 0 : index
    %20 = vector.load %arg6[%c0_13, %c0_14] : memref<2x3xf32, #tpu.memory_space<vmem>>, vector<2x3xf32>
    tpu.vector_store %arg6[%c0_13, %c0_14], %19 {strides = array<i32>} : memref<2x3xf32, #tpu.memory_space<vmem>>, vector<2x3xf32>,
    return
  }
  func.func @transform_0(%arg0: i32) -> (i32, i32) {
    %c0_i32 = arith.constant 0 : i32
    %c0_i32_0 = arith.constant 0 : i32
    %c0_i32_1 = arith.constant 0 : i32
    return %c0_i32, %c0_i32_0 : i32, i32
  }
  func.func @transform_1(%arg0: i32) -> (i32, i32) {
    %c0_i32 = arith.constant 0 : i32
    %c0_i32_0 = arith.constant 0 : i32
    return %c0_i32, %arg0 : i32, i32
  }
  func.func @transform_2(%arg0: i32) -> (i32, i32) {
    %c0_i32 = arith.constant 0 : i32
    %c0_i32_0 = arith.constant 0 : i32
    return %c0_i32, %arg0 : i32, i32
  }
  func.func @transform_3(%arg0: i32) -> (i32, i32) {
    %c0_i32 = arith.constant 0 : i32
    %c0_i32_0 = arith.constant 0 : i32
    return %c0_i32, %arg0 : i32, i32
  }
  func.func @transform_4(%arg0: i32) -> (i32, i32) {
    %c0_i32 = arith.constant 0 : i32
    %c0_i32_0 = arith.constant 0 : i32
    %c0_i32_1 = arith.constant 0 : i32
    return %c0_i32, %c0_i32_0 : i32, i32
  }
  func.func @transform_5(%arg0: i32) -> (i32, i32) {
    %c0_i32 = arith.constant 0 : i32
    %c0_i32_0 = arith.constant 0 : i32
    %c0_i32_1 = arith.constant 0 : i32
    return %c0_i32, %c0_i32_0 : i32, i32
  }
}

module attributes {stable_mosaic.version = 11 : i64} {
  func.func @_feature_kernel(%arg0: i32, %arg1: memref<2x8x40xf32, #tpu.memory_space<vmem>>, %arg2: memref<5x2xf32, #tpu.memory_space<vmem>>, %arg3: memref<2x5xf32, #tpu.memory_space<vmem>>, %arg4: memref<4x8xf32, #tpu.memory_space<vmem>>, %arg5: memref<8x4xf32, #tpu.memory_space<vmem>>, %arg6: memref<5x40xf32, #tpu.memory_space<vmem>>, %arg7: memref<8x8xf32, #tpu.memory_space<vmem>>, %arg8: memref<1x8x8xf32, #tpu.memory_space<vmem>>, %arg9: memref<1x8x8xf32, #tpu.memory_space<vmem>>, %arg10: memref<1x1x40xf32, #tpu.memory_space<vmem>>, %arg11: memref<1x1x40xf32, #tpu.memory_space<vmem>>, %arg12: memref<1x120x16xf32, #tpu.memory_space<vmem>>, %arg13: memref<2x128xf32, #tpu.memory_space<vmem>>, %arg14: memref<2x8x40xf32, #tpu.memory_space<vmem>>, %arg15: memref<2x8x8xf32, #tpu.memory_space<vmem>>, %arg16: memref<2x8x8xf32, #tpu.memory_space<vmem>>, %arg17: memref<1x1x40xf32, #tpu.memory_space<vmem>>, %arg18: memref<1x1x40xf32, #tpu.memory_space<vmem>>, %arg19: memref<16x120xf32, #tpu.memory_space<vmem>>) attributes {dimension_semantics = [#tpu.dimension_semantics<arbitrary>], iteration_bounds = array<i64: 3>, scalar_prefetch = 0 : i64, scratch_operands = 6 : i64, tpu.core_type = #tpu.core_type<tc>, window_params = [{pipeline_mode = #tpu.pipeline_mode<synchronous>, transform_indices = @transform_0, window_bounds = array<i64: 2, 8, 40>}, {pipeline_mode = #tpu.pipeline_mode<synchronous>, transform_indices = @transform_1, window_bounds = array<i64: 5, 2>}, {pipeline_mode = #tpu.pipeline_mode<synchronous>, transform_indices = @transform_2, window_bounds = array<i64: 2, 5>}, {pipeline_mode = #tpu.pipeline_mode<synchronous>, transform_indices = @transform_3, window_bounds = array<i64: 4, 8>}, {pipeline_mode = #tpu.pipeline_mode<synchronous>, transform_indices = @transform_4, window_bounds = array<i64: 8, 4>}, {pipeline_mode = #tpu.pipeline_mode<synchronous>, transform_indices = @transform_5, window_bounds = array<i64: 5, 40>}, {pipeline_mode = #tpu.pipeline_mode<synchronous>, transform_indices = @transform_6, window_bounds = array<i64: 8, 8>}, {transform_indices = @transform_7, window_bounds = array<i64: 1, 8, 8>}, {transform_indices = @transform_8, window_bounds = array<i64: 1, 8, 8>}, {transform_indices = @transform_9, window_bounds = array<i64: 1, 1, 40>}, {transform_indices = @transform_10, window_bounds = array<i64: 1, 1, 40>}, {transform_indices = @transform_11, window_bounds = array<i64: 1, 120, 16>}, {transform_indices = @transform_12, window_bounds = array<i64: 2, 128>}]} {
    %c0_i32 = arith.constant 0 : i32
    %0 = arith.cmpi eq, %arg0, %c0_i32 : i32
    %1 = arith.extui %0 : i1 to i32
    %c0_i32_0 = arith.constant 0 : i32
    %2 = arith.cmpi ne, %1, %c0_i32_0 : i32
    scf.if %2 {
      %c0_82 = arith.constant 0 : index
      %c0_83 = arith.constant 0 : index
      %c0_84 = arith.constant 0 : index
      %134 = vector.load %arg1[%c0_82, %c0_83, %c0_84] : memref<2x8x40xf32, #tpu.memory_space<vmem>>, vector<1x8x40xf32>
      %135 = vector.shape_cast %134 : vector<1x8x40xf32> to vector<8x40xf32>
      %cst_85 = arith.constant dense<0.000000e+00> : vector<40xf32>
      %136 = vector.multi_reduction <add>, %135, %cst_85 [0] : vector<8x40xf32> to vector<40xf32>
      %137 = vector.shape_cast %136 : vector<40xf32> to vector<1x40xf32>
      %cst_86 = arith.constant 8.000000e+00 : f32
      %138 = vector.broadcast %cst_86 : f32 to vector<1x40xf32>
      %139 = arith.divf %137, %138 : vector<1x40xf32>
      %c0_87 = arith.constant 0 : index
      %c0_88 = arith.constant 0 : index
      %140 = vector.load %arg6[%c0_87, %c0_88] : memref<5x40xf32, #tpu.memory_space<vmem>>, vector<5x40xf32>
      %cst_89 = arith.constant dense<0.000000e+00> : vector<1x5xf32>
      %141 = tpu.matmul %139, %140, %cst_89 {dimension_numbers = #tpu.dot_dimension_numbers<[1], [1], [0], [0], [0, 0, 1, 0], [], []>} : vector<1x40xf32>, vector<5x40xf32>, vector<1x5xf32> -> vector<1x5xf32>
      %cst_90 = arith.constant 1.250000e-01 : f32
      %142 = vector.broadcast %cst_90 : f32 to vector<1x5xf32>
      %143 = arith.mulf %141, %142 : vector<1x5xf32>
      %c0_91 = arith.constant 0 : index
      %c0_92 = arith.constant 0 : index
      %144 = vector.load %arg2[%c0_91, %c0_92] : memref<5x2xf32, #tpu.memory_space<vmem>>, vector<5x2xf32>
      %cst_93 = arith.constant dense<0.000000e+00> : vector<1x2xf32>
      %145 = tpu.matmul %143, %144, %cst_93 {dimension_numbers = #tpu.dot_dimension_numbers<[1], [0], [0], [1], [0, 0, 1, 1], [], []>} : vector<1x5xf32>, vector<5x2xf32>, vector<1x2xf32> -> vector<1x2xf32>
      %cst_94 = arith.constant 0.000000e+00 : f32
      %146 = vector.broadcast %cst_94 : f32 to vector<1x2xf32>
      %147 = arith.maximumf %145, %146 : vector<1x2xf32>
      %c0_95 = arith.constant 0 : index
      %c0_96 = arith.constant 0 : index
      %148 = vector.load %arg3[%c0_95, %c0_96] : memref<2x5xf32, #tpu.memory_space<vmem>>, vector<2x5xf32>
      %cst_97 = arith.constant dense<0.000000e+00> : vector<1x5xf32>
      %149 = tpu.matmul %147, %148, %cst_97 {dimension_numbers = #tpu.dot_dimension_numbers<[1], [0], [0], [1], [0, 0, 1, 1], [], []>} : vector<1x2xf32>, vector<2x5xf32>, vector<1x5xf32> -> vector<1x5xf32>
      %150 = arith.negf %149 : vector<1x5xf32>
      %151 = math.exp %150 : vector<1x5xf32>
      %cst_98 = arith.constant 1.000000e+00 : f32
      %152 = vector.broadcast %cst_98 : f32 to vector<1x5xf32>
      %153 = arith.addf %152, %151 : vector<1x5xf32>
      %154 = arith.divf %152, %153 : vector<1x5xf32>
      %c0_99 = arith.constant 0 : index
      %c0_100 = arith.constant 0 : index
      %155 = vector.load %arg6[%c0_99, %c0_100] : memref<5x40xf32, #tpu.memory_space<vmem>>, vector<5x40xf32>
      %cst_101 = arith.constant dense<0.000000e+00> : vector<1x40xf32>
      %156 = tpu.matmul %154, %155, %cst_101 {dimension_numbers = #tpu.dot_dimension_numbers<[1], [0], [0], [1], [0, 0, 1, 1], [], []>} : vector<1x5xf32>, vector<5x40xf32>, vector<1x40xf32> -> vector<1x40xf32>
      %157 = vector.broadcast %156 : vector<1x40xf32> to vector<8x40xf32>
      %158 = arith.mulf %135, %157 : vector<8x40xf32>
      %cst_102 = arith.constant dense<0.000000e+00> : vector<8xf32>
      %159 = vector.multi_reduction <add>, %158, %cst_102 [1] : vector<8x40xf32> to vector<8xf32>
      %160 = vector.shape_cast %159 : vector<8xf32> to vector<8x1xf32>
      %cst_103 = arith.constant 4.000000e+01 : f32
      %161 = vector.broadcast %cst_103 : f32 to vector<8x1xf32>
      %162 = arith.divf %160, %161 : vector<8x1xf32>
      %c0_104 = arith.constant 0 : index
      %c0_105 = arith.constant 0 : index
      %163 = vector.load %arg4[%c0_104, %c0_105] : memref<4x8xf32, #tpu.memory_space<vmem>>, vector<4x8xf32>
      %cst_106 = arith.constant dense<0.000000e+00> : vector<4x1xf32>
      %164 = tpu.matmul %163, %162, %cst_106 {dimension_numbers = #tpu.dot_dimension_numbers<[1], [0], [0], [1], [0, 0, 1, 1], [], []>} : vector<4x8xf32>, vector<8x1xf32>, vector<4x1xf32> -> vector<4x1xf32>
      %cst_107 = arith.constant 0.000000e+00 : f32
      %165 = vector.broadcast %cst_107 : f32 to vector<4x1xf32>
      %166 = arith.maximumf %164, %165 : vector<4x1xf32>
      %c0_108 = arith.constant 0 : index
      %c0_109 = arith.constant 0 : index
      %167 = vector.load %arg5[%c0_108, %c0_109] : memref<8x4xf32, #tpu.memory_space<vmem>>, vector<8x4xf32>
      %cst_110 = arith.constant dense<0.000000e+00> : vector<8x1xf32>
      %168 = tpu.matmul %167, %166, %cst_110 {dimension_numbers = #tpu.dot_dimension_numbers<[1], [0], [0], [1], [0, 0, 1, 1], [], []>} : vector<8x4xf32>, vector<4x1xf32>, vector<8x1xf32> -> vector<8x1xf32>
      %169 = arith.negf %168 : vector<8x1xf32>
      %170 = math.exp %169 : vector<8x1xf32>
      %cst_111 = arith.constant 1.000000e+00 : f32
      %171 = vector.broadcast %cst_111 : f32 to vector<8x1xf32>
      %172 = arith.addf %171, %170 : vector<8x1xf32>
      %173 = arith.divf %171, %172 : vector<8x1xf32>
      %174 = vector.broadcast %173 : vector<8x1xf32> to vector<8x40xf32>
      %175 = arith.mulf %158, %174 : vector<8x40xf32>
      %c0_112 = arith.constant 0 : index
      %c0_113 = arith.constant 0 : index
      %c0_114 = arith.constant 0 : index
      %176 = vector.load %arg14[%c0_112, %c0_113, %c0_114] : memref<2x8x40xf32, #tpu.memory_space<vmem>>, vector<1x8x40xf32>
      %177 = vector.shape_cast %176 : vector<1x8x40xf32> to vector<8x40xf32>
      %178 = vector.shape_cast %175 : vector<8x40xf32> to vector<1x8x40xf32>
      tpu.vector_store %arg14[%c0_112, %c0_113, %c0_114], %178 {strides = array<i32>} : memref<2x8x40xf32, #tpu.memory_space<vmem>>, vector<1x8x40xf32>,
      %cst_115 = arith.constant dense<0.000000e+00> : vector<8xf32>
      %179 = vector.multi_reduction <add>, %175, %cst_115 [1] : vector<8x40xf32> to vector<8xf32>
      %180 = vector.shape_cast %179 : vector<8xf32> to vector<8x1xf32>
      %cst_116 = arith.constant 4.000000e+01 : f32
      %181 = vector.broadcast %cst_116 : f32 to vector<8x1xf32>
      %182 = arith.divf %180, %181 : vector<8x1xf32>
      %183 = vector.broadcast %182 : vector<8x1xf32> to vector<8x40xf32>
      %184 = arith.subf %175, %183 : vector<8x40xf32>
      %cst_117 = arith.constant dense<0.000000e+00> : vector<8x8xf32>
      %185 = tpu.matmul %184, %184, %cst_117 {dimension_numbers = #tpu.dot_dimension_numbers<[1], [1], [0], [0], [0, 0, 1, 0], [], []>} : vector<8x40xf32>, vector<8x40xf32>, vector<8x8xf32> -> vector<8x8xf32>
      %186 = arith.mulf %184, %184 : vector<8x40xf32>
      %cst_118 = arith.constant dense<0.000000e+00> : vector<8xf32>
      %187 = vector.multi_reduction <add>, %186, %cst_118 [1] : vector<8x40xf32> to vector<8xf32>
      %188 = vector.shape_cast %187 : vector<8xf32> to vector<8x1xf32>
      %189 = math.sqrt %188 : vector<8x1xf32>
      %cst_119 = arith.constant dense<0.000000e+00> : vector<8x8xf32>
      %190 = tpu.matmul %189, %189, %cst_119 {dimension_numbers = #tpu.dot_dimension_numbers<[1], [1], [0], [0], [0, 0, 1, 0], [], []>} : vector<8x1xf32>, vector<8x1xf32>, vector<8x8xf32> -> vector<8x8xf32>
      %191 = arith.divf %185, %190 : vector<8x8xf32>
      %c0_120 = arith.constant 0 : index
      %c0_121 = arith.constant 0 : index
      %c0_122 = arith.constant 0 : index
      %192 = vector.load %arg15[%c0_120, %c0_121, %c0_122] : memref<2x8x8xf32, #tpu.memory_space<vmem>>, vector<1x8x8xf32>
      %193 = vector.shape_cast %192 : vector<1x8x8xf32> to vector<8x8xf32>
      %194 = vector.shape_cast %191 : vector<8x8xf32> to vector<1x8x8xf32>
      tpu.vector_store %arg15[%c0_120, %c0_121, %c0_122], %194 {strides = array<i32>} : memref<2x8x8xf32, #tpu.memory_space<vmem>>, vector<1x8x8xf32>,
      %195 = arith.mulf %175, %175 : vector<8x40xf32>
      %cst_123 = arith.constant dense<0.000000e+00> : vector<8xf32>
      %196 = vector.multi_reduction <add>, %195, %cst_123 [1] : vector<8x40xf32> to vector<8xf32>
      %197 = vector.shape_cast %196 : vector<8xf32> to vector<8x1xf32>
      %198 = math.sqrt %197 : vector<8x1xf32>
      %cst_124 = arith.constant 9.99999993E-9 : f32
      %199 = vector.broadcast %cst_124 : f32 to vector<8x1xf32>
      %200 = arith.maximumf %198, %199 : vector<8x1xf32>
      %201 = vector.broadcast %200 : vector<8x1xf32> to vector<8x40xf32>
      %202 = arith.divf %175, %201 : vector<8x40xf32>
      %cst_125 = arith.constant dense<0.000000e+00> : vector<8x8xf32>
      %203 = tpu.matmul %202, %202, %cst_125 {dimension_numbers = #tpu.dot_dimension_numbers<[1], [1], [0], [0], [0, 0, 1, 0], [], []>} : vector<8x40xf32>, vector<8x40xf32>, vector<8x8xf32> -> vector<8x8xf32>
      %c0_126 = arith.constant 0 : index
      %c0_127 = arith.constant 0 : index
      %c0_128 = arith.constant 0 : index
      %204 = vector.load %arg16[%c0_126, %c0_127, %c0_128] : memref<2x8x8xf32, #tpu.memory_space<vmem>>, vector<1x8x8xf32>
      %205 = vector.shape_cast %204 : vector<1x8x8xf32> to vector<8x8xf32>
      %206 = vector.shape_cast %203 : vector<8x8xf32> to vector<1x8x8xf32>
      tpu.vector_store %arg16[%c0_126, %c0_127, %c0_128], %206 {strides = array<i32>} : memref<2x8x8xf32, #tpu.memory_space<vmem>>, vector<1x8x8xf32>,
      %c1_129 = arith.constant 1 : index
      %c0_130 = arith.constant 0 : index
      %c0_131 = arith.constant 0 : index
      %207 = vector.load %arg1[%c1_129, %c0_130, %c0_131] : memref<2x8x40xf32, #tpu.memory_space<vmem>>, vector<1x8x40xf32>
      %208 = vector.shape_cast %207 : vector<1x8x40xf32> to vector<8x40xf32>
      %cst_132 = arith.constant dense<0.000000e+00> : vector<40xf32>
      %209 = vector.multi_reduction <add>, %208, %cst_132 [0] : vector<8x40xf32> to vector<40xf32>
      %210 = vector.shape_cast %209 : vector<40xf32> to vector<1x40xf32>
      %cst_133 = arith.constant 8.000000e+00 : f32
      %211 = vector.broadcast %cst_133 : f32 to vector<1x40xf32>
      %212 = arith.divf %210, %211 : vector<1x40xf32>
      %c0_134 = arith.constant 0 : index
      %c0_135 = arith.constant 0 : index
      %213 = vector.load %arg6[%c0_134, %c0_135] : memref<5x40xf32, #tpu.memory_space<vmem>>, vector<5x40xf32>
      %cst_136 = arith.constant dense<0.000000e+00> : vector<1x5xf32>
      %214 = tpu.matmul %212, %213, %cst_136 {dimension_numbers = #tpu.dot_dimension_numbers<[1], [1], [0], [0], [0, 0, 1, 0], [], []>} : vector<1x40xf32>, vector<5x40xf32>, vector<1x5xf32> -> vector<1x5xf32>
      %cst_137 = arith.constant 1.250000e-01 : f32
      %215 = vector.broadcast %cst_137 : f32 to vector<1x5xf32>
      %216 = arith.mulf %214, %215 : vector<1x5xf32>
      %c0_138 = arith.constant 0 : index
      %c0_139 = arith.constant 0 : index
      %217 = vector.load %arg2[%c0_138, %c0_139] : memref<5x2xf32, #tpu.memory_space<vmem>>, vector<5x2xf32>
      %cst_140 = arith.constant dense<0.000000e+00> : vector<1x2xf32>
      %218 = tpu.matmul %216, %217, %cst_140 {dimension_numbers = #tpu.dot_dimension_numbers<[1], [0], [0], [1], [0, 0, 1, 1], [], []>} : vector<1x5xf32>, vector<5x2xf32>, vector<1x2xf32> -> vector<1x2xf32>
      %cst_141 = arith.constant 0.000000e+00 : f32
      %219 = vector.broadcast %cst_141 : f32 to vector<1x2xf32>
      %220 = arith.maximumf %218, %219 : vector<1x2xf32>
      %c0_142 = arith.constant 0 : index
      %c0_143 = arith.constant 0 : index
      %221 = vector.load %arg3[%c0_142, %c0_143] : memref<2x5xf32, #tpu.memory_space<vmem>>, vector<2x5xf32>
      %cst_144 = arith.constant dense<0.000000e+00> : vector<1x5xf32>
      %222 = tpu.matmul %220, %221, %cst_144 {dimension_numbers = #tpu.dot_dimension_numbers<[1], [0], [0], [1], [0, 0, 1, 1], [], []>} : vector<1x2xf32>, vector<2x5xf32>, vector<1x5xf32> -> vector<1x5xf32>
      %223 = arith.negf %222 : vector<1x5xf32>
      %224 = math.exp %223 : vector<1x5xf32>
      %cst_145 = arith.constant 1.000000e+00 : f32
      %225 = vector.broadcast %cst_145 : f32 to vector<1x5xf32>
      %226 = arith.addf %225, %224 : vector<1x5xf32>
      %227 = arith.divf %225, %226 : vector<1x5xf32>
      %c0_146 = arith.constant 0 : index
      %c0_147 = arith.constant 0 : index
      %228 = vector.load %arg6[%c0_146, %c0_147] : memref<5x40xf32, #tpu.memory_space<vmem>>, vector<5x40xf32>
      %cst_148 = arith.constant dense<0.000000e+00> : vector<1x40xf32>
      %229 = tpu.matmul %227, %228, %cst_148 {dimension_numbers = #tpu.dot_dimension_numbers<[1], [0], [0], [1], [0, 0, 1, 1], [], []>} : vector<1x5xf32>, vector<5x40xf32>, vector<1x40xf32> -> vector<1x40xf32>
      %230 = vector.broadcast %229 : vector<1x40xf32> to vector<8x40xf32>
      %231 = arith.mulf %208, %230 : vector<8x40xf32>
      %cst_149 = arith.constant dense<0.000000e+00> : vector<8xf32>
      %232 = vector.multi_reduction <add>, %231, %cst_149 [1] : vector<8x40xf32> to vector<8xf32>
      %233 = vector.shape_cast %232 : vector<8xf32> to vector<8x1xf32>
      %cst_150 = arith.constant 4.000000e+01 : f32
      %234 = vector.broadcast %cst_150 : f32 to vector<8x1xf32>
      %235 = arith.divf %233, %234 : vector<8x1xf32>
      %c0_151 = arith.constant 0 : index
      %c0_152 = arith.constant 0 : index
      %236 = vector.load %arg4[%c0_151, %c0_152] : memref<4x8xf32, #tpu.memory_space<vmem>>, vector<4x8xf32>
      %cst_153 = arith.constant dense<0.000000e+00> : vector<4x1xf32>
      %237 = tpu.matmul %236, %235, %cst_153 {dimension_numbers = #tpu.dot_dimension_numbers<[1], [0], [0], [1], [0, 0, 1, 1], [], []>} : vector<4x8xf32>, vector<8x1xf32>, vector<4x1xf32> -> vector<4x1xf32>
      %cst_154 = arith.constant 0.000000e+00 : f32
      %238 = vector.broadcast %cst_154 : f32 to vector<4x1xf32>
      %239 = arith.maximumf %237, %238 : vector<4x1xf32>
      %c0_155 = arith.constant 0 : index
      %c0_156 = arith.constant 0 : index
      %240 = vector.load %arg5[%c0_155, %c0_156] : memref<8x4xf32, #tpu.memory_space<vmem>>, vector<8x4xf32>
      %cst_157 = arith.constant dense<0.000000e+00> : vector<8x1xf32>
      %241 = tpu.matmul %240, %239, %cst_157 {dimension_numbers = #tpu.dot_dimension_numbers<[1], [0], [0], [1], [0, 0, 1, 1], [], []>} : vector<8x4xf32>, vector<4x1xf32>, vector<8x1xf32> -> vector<8x1xf32>
      %242 = arith.negf %241 : vector<8x1xf32>
      %243 = math.exp %242 : vector<8x1xf32>
      %cst_158 = arith.constant 1.000000e+00 : f32
      %244 = vector.broadcast %cst_158 : f32 to vector<8x1xf32>
      %245 = arith.addf %244, %243 : vector<8x1xf32>
      %246 = arith.divf %244, %245 : vector<8x1xf32>
      %247 = vector.broadcast %246 : vector<8x1xf32> to vector<8x40xf32>
      %248 = arith.mulf %231, %247 : vector<8x40xf32>
      %c1_159 = arith.constant 1 : index
      %c0_160 = arith.constant 0 : index
      %c0_161 = arith.constant 0 : index
      %249 = vector.load %arg14[%c1_159, %c0_160, %c0_161] : memref<2x8x40xf32, #tpu.memory_space<vmem>>, vector<1x8x40xf32>
      %250 = vector.shape_cast %249 : vector<1x8x40xf32> to vector<8x40xf32>
      %251 = vector.shape_cast %248 : vector<8x40xf32> to vector<1x8x40xf32>
      tpu.vector_store %arg14[%c1_159, %c0_160, %c0_161], %251 {strides = array<i32>} : memref<2x8x40xf32, #tpu.memory_space<vmem>>, vector<1x8x40xf32>,
      %cst_162 = arith.constant dense<0.000000e+00> : vector<8xf32>
      %252 = vector.multi_reduction <add>, %248, %cst_162 [1] : vector<8x40xf32> to vector<8xf32>
      %253 = vector.shape_cast %252 : vector<8xf32> to vector<8x1xf32>
      %cst_163 = arith.constant 4.000000e+01 : f32
      %254 = vector.broadcast %cst_163 : f32 to vector<8x1xf32>
      %255 = arith.divf %253, %254 : vector<8x1xf32>
      %256 = vector.broadcast %255 : vector<8x1xf32> to vector<8x40xf32>
      %257 = arith.subf %248, %256 : vector<8x40xf32>
      %cst_164 = arith.constant dense<0.000000e+00> : vector<8x8xf32>
      %258 = tpu.matmul %257, %257, %cst_164 {dimension_numbers = #tpu.dot_dimension_numbers<[1], [1], [0], [0], [0, 0, 1, 0], [], []>} : vector<8x40xf32>, vector<8x40xf32>, vector<8x8xf32> -> vector<8x8xf32>
      %259 = arith.mulf %257, %257 : vector<8x40xf32>
      %cst_165 = arith.constant dense<0.000000e+00> : vector<8xf32>
      %260 = vector.multi_reduction <add>, %259, %cst_165 [1] : vector<8x40xf32> to vector<8xf32>
      %261 = vector.shape_cast %260 : vector<8xf32> to vector<8x1xf32>
      %262 = math.sqrt %261 : vector<8x1xf32>
      %cst_166 = arith.constant dense<0.000000e+00> : vector<8x8xf32>
      %263 = tpu.matmul %262, %262, %cst_166 {dimension_numbers = #tpu.dot_dimension_numbers<[1], [1], [0], [0], [0, 0, 1, 0], [], []>} : vector<8x1xf32>, vector<8x1xf32>, vector<8x8xf32> -> vector<8x8xf32>
      %264 = arith.divf %258, %263 : vector<8x8xf32>
      %c1_167 = arith.constant 1 : index
      %c0_168 = arith.constant 0 : index
      %c0_169 = arith.constant 0 : index
      %265 = vector.load %arg15[%c1_167, %c0_168, %c0_169] : memref<2x8x8xf32, #tpu.memory_space<vmem>>, vector<1x8x8xf32>
      %266 = vector.shape_cast %265 : vector<1x8x8xf32> to vector<8x8xf32>
      %267 = vector.shape_cast %264 : vector<8x8xf32> to vector<1x8x8xf32>
      tpu.vector_store %arg15[%c1_167, %c0_168, %c0_169], %267 {strides = array<i32>} : memref<2x8x8xf32, #tpu.memory_space<vmem>>, vector<1x8x8xf32>,
      %268 = arith.mulf %248, %248 : vector<8x40xf32>
      %cst_170 = arith.constant dense<0.000000e+00> : vector<8xf32>
      %269 = vector.multi_reduction <add>, %268, %cst_170 [1] : vector<8x40xf32> to vector<8xf32>
      %270 = vector.shape_cast %269 : vector<8xf32> to vector<8x1xf32>
      %271 = math.sqrt %270 : vector<8x1xf32>
      %cst_171 = arith.constant 9.99999993E-9 : f32
      %272 = vector.broadcast %cst_171 : f32 to vector<8x1xf32>
      %273 = arith.maximumf %271, %272 : vector<8x1xf32>
      %274 = vector.broadcast %273 : vector<8x1xf32> to vector<8x40xf32>
      %275 = arith.divf %248, %274 : vector<8x40xf32>
      %cst_172 = arith.constant dense<0.000000e+00> : vector<8x8xf32>
      %276 = tpu.matmul %275, %275, %cst_172 {dimension_numbers = #tpu.dot_dimension_numbers<[1], [1], [0], [0], [0, 0, 1, 0], [], []>} : vector<8x40xf32>, vector<8x40xf32>, vector<8x8xf32> -> vector<8x8xf32>
      %c1_173 = arith.constant 1 : index
      %c0_174 = arith.constant 0 : index
      %c0_175 = arith.constant 0 : index
      %277 = vector.load %arg16[%c1_173, %c0_174, %c0_175] : memref<2x8x8xf32, #tpu.memory_space<vmem>>, vector<1x8x8xf32>
      %278 = vector.shape_cast %277 : vector<1x8x8xf32> to vector<8x8xf32>
      %279 = vector.shape_cast %276 : vector<8x8xf32> to vector<1x8x8xf32>
      tpu.vector_store %arg16[%c1_173, %c0_174, %c0_175], %279 {strides = array<i32>} : memref<2x8x8xf32, #tpu.memory_space<vmem>>, vector<1x8x8xf32>,
      %c0_176 = arith.constant 0 : index
      %c0_177 = arith.constant 0 : index
      %c0_178 = arith.constant 0 : index
      %280 = vector.load %arg14[%c0_176, %c0_177, %c0_178] : memref<2x8x40xf32, #tpu.memory_space<vmem>>, vector<2x8x40xf32>
      %cst_179 = arith.constant dense<0.000000e+00> : vector<8x40xf32>
      %281 = vector.multi_reduction <add>, %280, %cst_179 [0] : vector<2x8x40xf32> to vector<8x40xf32>
      %282 = vector.shape_cast %281 : vector<8x40xf32> to vector<1x8x40xf32>
      %cst_180 = arith.constant 2.000000e+00 : f32
      %283 = vector.broadcast %cst_180 : f32 to vector<1x8x40xf32>
      %284 = arith.divf %282, %283 : vector<1x8x40xf32>
      %cst_181 = arith.constant dense<0.000000e+00> : vector<1x40xf32>
      %285 = vector.multi_reduction <add>, %284, %cst_181 [1] : vector<1x8x40xf32> to vector<1x40xf32>
      %286 = vector.shape_cast %285 : vector<1x40xf32> to vector<1x1x40xf32>
      %cst_182 = arith.constant 8.000000e+00 : f32
      %287 = vector.broadcast %cst_182 : f32 to vector<1x1x40xf32>
      %288 = arith.divf %286, %287 : vector<1x1x40xf32>
      %289 = vector.broadcast %288 : vector<1x1x40xf32> to vector<2x8x40xf32>
      %290 = arith.subf %280, %289 : vector<2x8x40xf32>
      %291 = arith.mulf %290, %290 : vector<2x8x40xf32>
      %cst_183 = arith.constant dense<0.000000e+00> : vector<8x40xf32>
      %292 = vector.multi_reduction <add>, %291, %cst_183 [0] : vector<2x8x40xf32> to vector<8x40xf32>
      %293 = vector.shape_cast %292 : vector<8x40xf32> to vector<1x8x40xf32>
      %cst_184 = arith.constant 2.000000e+00 : f32
      %294 = vector.broadcast %cst_184 : f32 to vector<1x8x40xf32>
      %295 = arith.divf %293, %294 : vector<1x8x40xf32>
      %cst_185 = arith.constant dense<0.000000e+00> : vector<1x40xf32>
      %296 = vector.multi_reduction <add>, %295, %cst_185 [1] : vector<1x8x40xf32> to vector<1x40xf32>
      %297 = vector.shape_cast %296 : vector<1x40xf32> to vector<1x1x40xf32>
      %cst_186 = arith.constant 8.000000e+00 : f32
      %298 = vector.broadcast %cst_186 : f32 to vector<1x1x40xf32>
      %299 = arith.divf %297, %298 : vector<1x1x40xf32>
      %c0_187 = arith.constant 0 : index
      %c0_188 = arith.constant 0 : index
      %c0_189 = arith.constant 0 : index
      %300 = vector.load %arg17[%c0_187, %c0_188, %c0_189] : memref<1x1x40xf32, #tpu.memory_space<vmem>>, vector<1x1x40xf32>
      tpu.vector_store %arg17[%c0_187, %c0_188, %c0_189], %288 {strides = array<i32>} : memref<1x1x40xf32, #tpu.memory_space<vmem>>, vector<1x1x40xf32>,
      %cst_190 = arith.constant 9.99999974E-6 : f32
      %301 = vector.broadcast %cst_190 : f32 to vector<1x1x40xf32>
      %302 = arith.addf %299, %301 : vector<1x1x40xf32>
      %303 = math.rsqrt %302 : vector<1x1x40xf32>
      %c0_191 = arith.constant 0 : index
      %c0_192 = arith.constant 0 : index
      %c0_193 = arith.constant 0 : index
      %304 = vector.load %arg18[%c0_191, %c0_192, %c0_193] : memref<1x1x40xf32, #tpu.memory_space<vmem>>, vector<1x1x40xf32>
      tpu.vector_store %arg18[%c0_191, %c0_192, %c0_193], %303 {strides = array<i32>} : memref<1x1x40xf32, #tpu.memory_space<vmem>>, vector<1x1x40xf32>,
    } else {
    }
    %3 = tpu.iota {dimensions = array<i32: 0>} : vector<8x8xi32>
    %4 = tpu.iota {dimensions = array<i32: 1>} : vector<8x8xi32>
    %5 = arith.cmpi ne, %3, %4 : vector<8x8xi32>
    %6 = arith.extui %5 : vector<8x8xi1> to vector<8x8xi32>
    %7 = arith.sitofp %6 : vector<8x8xi32> to vector<8x8xf32>
    %c0_i32_1 = arith.constant 0 : i32
    %8 = arith.cmpi eq, %arg0, %c0_i32_1 : i32
    %9 = arith.extui %8 : i1 to i32
    %10 = arith.sitofp %9 : i32 to f32
    %c1_i32 = arith.constant 1 : i32
    %11 = arith.cmpi eq, %arg0, %c1_i32 : i32
    %12 = arith.extui %11 : i1 to i32
    %13 = arith.sitofp %12 : i32 to f32
    %cst = arith.constant 1.000000e+00 : f32
    %14 = arith.subf %cst, %10 : f32
    %15 = arith.subf %14, %13 : f32
    %c0 = arith.constant 0 : index
    %c0_2 = arith.constant 0 : index
    %c0_3 = arith.constant 0 : index
    %16 = vector.load %arg15[%c0, %c0_2, %c0_3] : memref<2x8x8xf32, #tpu.memory_space<vmem>>, vector<2x8x8xf32>
    %17 = vector.broadcast %10 : f32 to vector<2x8x8xf32>
    %18 = arith.mulf %17, %16 : vector<2x8x8xf32>
    %c0_4 = arith.constant 0 : index
    %c0_5 = arith.constant 0 : index
    %c0_6 = arith.constant 0 : index
    %19 = vector.load %arg16[%c0_4, %c0_5, %c0_6] : memref<2x8x8xf32, #tpu.memory_space<vmem>>, vector<2x8x8xf32>
    %20 = vector.broadcast %13 : f32 to vector<2x8x8xf32>
    %21 = arith.mulf %20, %19 : vector<2x8x8xf32>
    %22 = arith.addf %18, %21 : vector<2x8x8xf32>
    %c0_7 = arith.constant 0 : index
    %c0_8 = arith.constant 0 : index
    %23 = vector.load %arg7[%c0_7, %c0_8] : memref<8x8xf32, #tpu.memory_space<vmem>>, vector<8x8xf32>
    %24 = vector.shape_cast %23 : vector<8x8xf32> to vector<1x8x8xf32>
    %25 = vector.broadcast %24 : vector<1x8x8xf32> to vector<2x8x8xf32>
    %26 = vector.broadcast %15 : f32 to vector<2x8x8xf32>
    %27 = arith.mulf %26, %25 : vector<2x8x8xf32>
    %28 = arith.addf %22, %27 : vector<2x8x8xf32>
    %c0_9 = arith.constant 0 : index
    %c0_10 = arith.constant 0 : index
    %c0_11 = arith.constant 0 : index
    %29 = vector.load %arg8[%c0_9, %c0_10, %c0_11] : memref<1x8x8xf32, #tpu.memory_space<vmem>>, vector<1x8x8xf32>
    %30 = vector.shape_cast %29 : vector<1x8x8xf32> to vector<1x8x8xf32>
    %31 = vector.broadcast %30 : vector<1x8x8xf32> to vector<2x8x8xf32>
    %c0_12 = arith.constant 0 : index
    %c0_13 = arith.constant 0 : index
    %c0_14 = arith.constant 0 : index
    %32 = vector.load %arg9[%c0_12, %c0_13, %c0_14] : memref<1x8x8xf32, #tpu.memory_space<vmem>>, vector<1x8x8xf32>
    %33 = vector.shape_cast %32 : vector<1x8x8xf32> to vector<1x8x8xf32>
    %34 = vector.broadcast %33 : vector<1x8x8xf32> to vector<2x8x8xf32>
    "tpu.trace_start"() <{level = 10 : i32, message = "bij,bjk->bik"}> : () -> ()
    %cst_15 = arith.constant dense<0.000000e+00> : vector<2x8x8xf32>
    %35 = tpu.matmul %28, %31, %cst_15 {dimension_numbers = #tpu.dot_dimension_numbers<[2], [1], [1], [2], [0, 0, 0, 1, 1, 2], [0], [0]>} : vector<2x8x8xf32>, vector<2x8x8xf32>, vector<2x8x8xf32> -> vector<2x8x8xf32>
    "tpu.trace_stop"() : () -> ()
    %cst_16 = arith.constant 0.000000e+00 : f32
    %36 = vector.broadcast %cst_16 : f32 to vector<2x8x8xf32>
    %37 = arith.maximumf %35, %36 : vector<2x8x8xf32>
    %38 = vector.shape_cast %7 : vector<8x8xf32> to vector<1x8x8xf32>
    %39 = vector.broadcast %38 : vector<1x8x8xf32> to vector<2x8x8xf32>
    %40 = arith.mulf %37, %39 : vector<2x8x8xf32>
    "tpu.trace_start"() <{level = 10 : i32, message = "bij,bjk->bik"}> : () -> ()
    %cst_17 = arith.constant dense<0.000000e+00> : vector<2x8x8xf32>
    %41 = tpu.matmul %34, %28, %cst_17 {dimension_numbers = #tpu.dot_dimension_numbers<[2], [1], [1], [2], [0, 0, 0, 1, 1, 2], [0], [0]>} : vector<2x8x8xf32>, vector<2x8x8xf32>, vector<2x8x8xf32> -> vector<2x8x8xf32>
    "tpu.trace_stop"() : () -> ()
    %cst_18 = arith.constant 0.000000e+00 : f32
    %42 = vector.broadcast %cst_18 : f32 to vector<2x8x8xf32>
    %43 = arith.maximumf %41, %42 : vector<2x8x8xf32>
    %44 = vector.shape_cast %7 : vector<8x8xf32> to vector<1x8x8xf32>
    %45 = vector.broadcast %44 : vector<1x8x8xf32> to vector<2x8x8xf32>
    %46 = arith.mulf %43, %45 : vector<2x8x8xf32>
    %47 = arith.addf %40, %46 : vector<2x8x8xf32>
    %cst_19 = arith.constant dense<0.000000e+00> : vector<2x8xf32>
    %48 = vector.multi_reduction <add>, %47, %cst_19 [2] : vector<2x8x8xf32> to vector<2x8xf32>
    %49 = vector.shape_cast %48 : vector<2x8xf32> to vector<2x8x1xf32>
    %cst_20 = arith.constant 1.000000e-10 : f32
    %50 = vector.broadcast %cst_20 : f32 to vector<2x8x1xf32>
    %51 = arith.addf %49, %50 : vector<2x8x1xf32>
    %52 = math.rsqrt %51 : vector<2x8x1xf32>
    %cst_21 = arith.constant dense<0.000000e+00> : vector<2x8xf32>
    %53 = vector.multi_reduction <add>, %47, %cst_21 [1] : vector<2x8x8xf32> to vector<2x8xf32>
    %54 = vector.shape_cast %53 : vector<2x8xf32> to vector<2x1x8xf32>
    %cst_22 = arith.constant 1.000000e-10 : f32
    %55 = vector.broadcast %cst_22 : f32 to vector<2x1x8xf32>
    %56 = arith.addf %54, %55 : vector<2x1x8xf32>
    %57 = math.rsqrt %56 : vector<2x1x8xf32>
    %58 = vector.broadcast %52 : vector<2x8x1xf32> to vector<2x8x8xf32>
    %59 = arith.mulf %58, %47 : vector<2x8x8xf32>
    %60 = vector.broadcast %57 : vector<2x1x8xf32> to vector<2x8x8xf32>
    %61 = arith.mulf %59, %60 : vector<2x8x8xf32>
    %cst_23 = arith.constant 0.000000e+00 : f32
    %62 = vector.broadcast %cst_23 : f32 to vector<2x8x8xf32>
    %63 = arith.subf %62, %61 : vector<2x8x8xf32>
    %c0_24 = arith.constant 0 : index
    %c0_25 = arith.constant 0 : index
    %c0_26 = arith.constant 0 : index
    %64 = vector.load %arg10[%c0_24, %c0_25, %c0_26] : memref<1x1x40xf32, #tpu.memory_space<vmem>>, vector<1x1x40xf32>
    %c0_27 = arith.constant 0 : index
    %c0_28 = arith.constant 0 : index
    %c0_29 = arith.constant 0 : index
    %65 = vector.load %arg18[%c0_27, %c0_28, %c0_29] : memref<1x1x40xf32, #tpu.memory_space<vmem>>, vector<1x1x40xf32>
    %66 = arith.mulf %64, %65 : vector<1x1x40xf32>
    %c0_30 = arith.constant 0 : index
    %c0_31 = arith.constant 0 : index
    %c0_32 = arith.constant 0 : index
    %67 = vector.load %arg11[%c0_30, %c0_31, %c0_32] : memref<1x1x40xf32, #tpu.memory_space<vmem>>, vector<1x1x40xf32>
    %c0_33 = arith.constant 0 : index
    %c0_34 = arith.constant 0 : index
    %c0_35 = arith.constant 0 : index
    %68 = vector.load %arg17[%c0_33, %c0_34, %c0_35] : memref<1x1x40xf32, #tpu.memory_space<vmem>>, vector<1x1x40xf32>
    %69 = arith.mulf %68, %66 : vector<1x1x40xf32>
    %70 = arith.subf %67, %69 : vector<1x1x40xf32>
    %c0_36 = arith.constant 0 : index
    %c0_37 = arith.constant 0 : index
    %c0_38 = arith.constant 0 : index
    %71 = vector.load %arg14[%c0_36, %c0_37, %c0_38] : memref<2x8x40xf32, #tpu.memory_space<vmem>>, vector<2x8x40xf32>
    %72 = vector.broadcast %66 : vector<1x1x40xf32> to vector<2x8x40xf32>
    %73 = arith.mulf %71, %72 : vector<2x8x40xf32>
    %74 = vector.broadcast %70 : vector<1x1x40xf32> to vector<2x8x40xf32>
    %75 = arith.addf %73, %74 : vector<2x8x40xf32>
    %76 = vector.extract_strided_slice %75 {offsets = [0, 0, 0], sizes = [1, 8, 40], strides = [1, 1, 1]} : vector<2x8x40xf32> to vector<1x8x40xf32>
    %77 = vector.shape_cast %76 : vector<1x8x40xf32> to vector<8x40xf32>
    %c0_39 = arith.constant 0 : index
    %c0_40 = arith.constant 0 : index
    %78 = vector.load %arg19[%c0_39, %c0_40] : memref<16x120xf32, #tpu.memory_space<vmem>>, vector<8x40xf32>
    tpu.vector_store %arg19[%c0_39, %c0_40], %77 {strides = array<i32>} : memref<16x120xf32, #tpu.memory_space<vmem>>, vector<8x40xf32>,
    %79 = vector.extract_strided_slice %75 {offsets = [1, 0, 0], sizes = [1, 8, 40], strides = [1, 1, 1]} : vector<2x8x40xf32> to vector<1x8x40xf32>
    %80 = vector.shape_cast %79 : vector<1x8x40xf32> to vector<8x40xf32>
    %c8 = arith.constant 8 : index
    %c0_41 = arith.constant 0 : index
    %81 = vector.load %arg19[%c8, %c0_41] : memref<16x120xf32, #tpu.memory_space<vmem>>, vector<8x40xf32>
    tpu.vector_store %arg19[%c8, %c0_41], %80 {strides = array<i32>} : memref<16x120xf32, #tpu.memory_space<vmem>>, vector<8x40xf32>,
    "tpu.trace_start"() <{level = 10 : i32, message = "bij,bjf->bif"}> : () -> ()
    %cst_42 = arith.constant dense<0.000000e+00> : vector<2x8x40xf32>
    %82 = tpu.matmul %63, %75, %cst_42 {dimension_numbers = #tpu.dot_dimension_numbers<[2], [1], [1], [2], [0, 0, 0, 1, 1, 2], [0], [0]>} : vector<2x8x8xf32>, vector<2x8x40xf32>, vector<2x8x40xf32> -> vector<2x8x40xf32>
    "tpu.trace_stop"() : () -> ()
    %83 = vector.extract_strided_slice %82 {offsets = [0, 0, 0], sizes = [1, 8, 40], strides = [1, 1, 1]} : vector<2x8x40xf32> to vector<1x8x40xf32>
    %84 = vector.shape_cast %83 : vector<1x8x40xf32> to vector<8x40xf32>
    %c0_43 = arith.constant 0 : index
    %c40 = arith.constant 40 : index
    %85 = vector.load %arg19[%c0_43, %c40] : memref<16x120xf32, #tpu.memory_space<vmem>>, vector<8x40xf32>
    tpu.vector_store %arg19[%c0_43, %c40], %84 {strides = array<i32>} : memref<16x120xf32, #tpu.memory_space<vmem>>, vector<8x40xf32>,
    %86 = vector.extract_strided_slice %82 {offsets = [1, 0, 0], sizes = [1, 8, 40], strides = [1, 1, 1]} : vector<2x8x40xf32> to vector<1x8x40xf32>
    %87 = vector.shape_cast %86 : vector<1x8x40xf32> to vector<8x40xf32>
    %c8_44 = arith.constant 8 : index
    %c40_45 = arith.constant 40 : index
    %88 = vector.load %arg19[%c8_44, %c40_45] : memref<16x120xf32, #tpu.memory_space<vmem>>, vector<8x40xf32>
    tpu.vector_store %arg19[%c8_44, %c40_45], %87 {strides = array<i32>} : memref<16x120xf32, #tpu.memory_space<vmem>>, vector<8x40xf32>,
    "tpu.trace_start"() <{level = 10 : i32, message = "bij,bjf->bif"}> : () -> ()
    %cst_46 = arith.constant dense<0.000000e+00> : vector<2x8x40xf32>
    %89 = tpu.matmul %63, %82, %cst_46 {dimension_numbers = #tpu.dot_dimension_numbers<[2], [1], [1], [2], [0, 0, 0, 1, 1, 2], [0], [0]>} : vector<2x8x8xf32>, vector<2x8x40xf32>, vector<2x8x40xf32> -> vector<2x8x40xf32>
    "tpu.trace_stop"() : () -> ()
    %90 = vector.extract_strided_slice %89 {offsets = [0, 0, 0], sizes = [1, 8, 40], strides = [1, 1, 1]} : vector<2x8x40xf32> to vector<1x8x40xf32>
    %91 = vector.shape_cast %90 : vector<1x8x40xf32> to vector<8x40xf32>
    %c0_47 = arith.constant 0 : index
    %c80 = arith.constant 80 : index
    %92 = vector.load %arg19[%c0_47, %c80] : memref<16x120xf32, #tpu.memory_space<vmem>>, vector<8x40xf32>
    tpu.vector_store %arg19[%c0_47, %c80], %91 {strides = array<i32>} : memref<16x120xf32, #tpu.memory_space<vmem>>, vector<8x40xf32>,
    %93 = vector.extract_strided_slice %89 {offsets = [1, 0, 0], sizes = [1, 8, 40], strides = [1, 1, 1]} : vector<2x8x40xf32> to vector<1x8x40xf32>
    %94 = vector.shape_cast %93 : vector<1x8x40xf32> to vector<8x40xf32>
    %c8_48 = arith.constant 8 : index
    %c80_49 = arith.constant 80 : index
    %95 = vector.load %arg19[%c8_48, %c80_49] : memref<16x120xf32, #tpu.memory_space<vmem>>, vector<8x40xf32>
    tpu.vector_store %arg19[%c8_48, %c80_49], %94 {strides = array<i32>} : memref<16x120xf32, #tpu.memory_space<vmem>>, vector<8x40xf32>,
    %c0_50 = arith.constant 0 : index
    %c0_51 = arith.constant 0 : index
    %96 = vector.load %arg19[%c0_50, %c0_51] : memref<16x120xf32, #tpu.memory_space<vmem>>, vector<16x120xf32>
    %c0_52 = arith.constant 0 : index
    %c0_53 = arith.constant 0 : index
    %c0_54 = arith.constant 0 : index
    %97 = vector.load %arg12[%c0_52, %c0_53, %c0_54] : memref<1x120x16xf32, #tpu.memory_space<vmem>>, vector<1x120x16xf32>
    %98 = vector.shape_cast %97 : vector<1x120x16xf32> to vector<120x16xf32>
    %cst_55 = arith.constant dense<0.000000e+00> : vector<16x16xf32>
    %99 = tpu.matmul %96, %98, %cst_55 {dimension_numbers = #tpu.dot_dimension_numbers<[1], [0], [0], [1], [0, 0, 1, 1], [], []>} : vector<16x120xf32>, vector<120x16xf32>, vector<16x16xf32> -> vector<16x16xf32>
    %cst_56 = arith.constant 0.000000e+00 : f32
    %100 = vector.broadcast %cst_56 : f32 to vector<16x16xf32>
    %101 = arith.maximumf %99, %100 : vector<16x16xf32>
    %102 = vector.extract_strided_slice %101 {offsets = [0, 0], sizes = [1, 16], strides = [1, 1]} : vector<16x16xf32> to vector<1x16xf32>
    %c0_57 = arith.constant 0 : index
    %c0_58 = arith.constant 0 : index
    %103 = vector.load %arg13[%c0_57, %c0_58] : memref<2x128xf32, #tpu.memory_space<vmem>>, vector<1x16xf32>
    tpu.vector_store %arg13[%c0_57, %c0_58], %102 {strides = array<i32>} : memref<2x128xf32, #tpu.memory_space<vmem>>, vector<1x16xf32>,
    %104 = vector.extract_strided_slice %101 {offsets = [1, 0], sizes = [1, 16], strides = [1, 1]} : vector<16x16xf32> to vector<1x16xf32>
    %c0_59 = arith.constant 0 : index
    %c16 = arith.constant 16 : index
    %105 = vector.load %arg13[%c0_59, %c16] : memref<2x128xf32, #tpu.memory_space<vmem>>, vector<1x16xf32>
    tpu.vector_store %arg13[%c0_59, %c16], %104 {strides = array<i32>} : memref<2x128xf32, #tpu.memory_space<vmem>>, vector<1x16xf32>,
    %106 = vector.extract_strided_slice %101 {offsets = [2, 0], sizes = [1, 16], strides = [1, 1]} : vector<16x16xf32> to vector<1x16xf32>
    %c0_60 = arith.constant 0 : index
    %c32 = arith.constant 32 : index
    %107 = vector.load %arg13[%c0_60, %c32] : memref<2x128xf32, #tpu.memory_space<vmem>>, vector<1x16xf32>
    tpu.vector_store %arg13[%c0_60, %c32], %106 {strides = array<i32>} : memref<2x128xf32, #tpu.memory_space<vmem>>, vector<1x16xf32>,
    %108 = vector.extract_strided_slice %101 {offsets = [3, 0], sizes = [1, 16], strides = [1, 1]} : vector<16x16xf32> to vector<1x16xf32>
    %c0_61 = arith.constant 0 : index
    %c48 = arith.constant 48 : index
    %109 = vector.load %arg13[%c0_61, %c48] : memref<2x128xf32, #tpu.memory_space<vmem>>, vector<1x16xf32>
    tpu.vector_store %arg13[%c0_61, %c48], %108 {strides = array<i32>} : memref<2x128xf32, #tpu.memory_space<vmem>>, vector<1x16xf32>,
    %110 = vector.extract_strided_slice %101 {offsets = [4, 0], sizes = [1, 16], strides = [1, 1]} : vector<16x16xf32> to vector<1x16xf32>
    %c0_62 = arith.constant 0 : index
    %c64 = arith.constant 64 : index
    %111 = vector.load %arg13[%c0_62, %c64] : memref<2x128xf32, #tpu.memory_space<vmem>>, vector<1x16xf32>
    tpu.vector_store %arg13[%c0_62, %c64], %110 {strides = array<i32>} : memref<2x128xf32, #tpu.memory_space<vmem>>, vector<1x16xf32>,
    %112 = vector.extract_strided_slice %101 {offsets = [5, 0], sizes = [1, 16], strides = [1, 1]} : vector<16x16xf32> to vector<1x16xf32>
    %c0_63 = arith.constant 0 : index
    %c80_64 = arith.constant 80 : index
    %113 = vector.load %arg13[%c0_63, %c80_64] : memref<2x128xf32, #tpu.memory_space<vmem>>, vector<1x16xf32>
    tpu.vector_store %arg13[%c0_63, %c80_64], %112 {strides = array<i32>} : memref<2x128xf32, #tpu.memory_space<vmem>>, vector<1x16xf32>,
    %114 = vector.extract_strided_slice %101 {offsets = [6, 0], sizes = [1, 16], strides = [1, 1]} : vector<16x16xf32> to vector<1x16xf32>
    %c0_65 = arith.constant 0 : index
    %c96 = arith.constant 96 : index
    %115 = vector.load %arg13[%c0_65, %c96] : memref<2x128xf32, #tpu.memory_space<vmem>>, vector<1x16xf32>
    tpu.vector_store %arg13[%c0_65, %c96], %114 {strides = array<i32>} : memref<2x128xf32, #tpu.memory_space<vmem>>, vector<1x16xf32>,
    %116 = vector.extract_strided_slice %101 {offsets = [7, 0], sizes = [1, 16], strides = [1, 1]} : vector<16x16xf32> to vector<1x16xf32>
    %c0_66 = arith.constant 0 : index
    %c112 = arith.constant 112 : index
    %117 = vector.load %arg13[%c0_66, %c112] : memref<2x128xf32, #tpu.memory_space<vmem>>, vector<1x16xf32>
    tpu.vector_store %arg13[%c0_66, %c112], %116 {strides = array<i32>} : memref<2x128xf32, #tpu.memory_space<vmem>>, vector<1x16xf32>,
    %118 = vector.extract_strided_slice %101 {offsets = [8, 0], sizes = [1, 16], strides = [1, 1]} : vector<16x16xf32> to vector<1x16xf32>
    %c1 = arith.constant 1 : index
    %c0_67 = arith.constant 0 : index
    %119 = vector.load %arg13[%c1, %c0_67] : memref<2x128xf32, #tpu.memory_space<vmem>>, vector<1x16xf32>
    tpu.vector_store %arg13[%c1, %c0_67], %118 {strides = array<i32>} : memref<2x128xf32, #tpu.memory_space<vmem>>, vector<1x16xf32>,
    %120 = vector.extract_strided_slice %101 {offsets = [9, 0], sizes = [1, 16], strides = [1, 1]} : vector<16x16xf32> to vector<1x16xf32>
    %c1_68 = arith.constant 1 : index
    %c16_69 = arith.constant 16 : index
    %121 = vector.load %arg13[%c1_68, %c16_69] : memref<2x128xf32, #tpu.memory_space<vmem>>, vector<1x16xf32>
    tpu.vector_store %arg13[%c1_68, %c16_69], %120 {strides = array<i32>} : memref<2x128xf32, #tpu.memory_space<vmem>>, vector<1x16xf32>,
    %122 = vector.extract_strided_slice %101 {offsets = [10, 0], sizes = [1, 16], strides = [1, 1]} : vector<16x16xf32> to vector<1x16xf32>
    %c1_70 = arith.constant 1 : index
    %c32_71 = arith.constant 32 : index
    %123 = vector.load %arg13[%c1_70, %c32_71] : memref<2x128xf32, #tpu.memory_space<vmem>>, vector<1x16xf32>
    tpu.vector_store %arg13[%c1_70, %c32_71], %122 {strides = array<i32>} : memref<2x128xf32, #tpu.memory_space<vmem>>, vector<1x16xf32>,
    %124 = vector.extract_strided_slice %101 {offsets = [11, 0], sizes = [1, 16], strides = [1, 1]} : vector<16x16xf32> to vector<1x16xf32>
    %c1_72 = arith.constant 1 : index
    %c48_73 = arith.constant 48 : index
    %125 = vector.load %arg13[%c1_72, %c48_73] : memref<2x128xf32, #tpu.memory_space<vmem>>, vector<1x16xf32>
    tpu.vector_store %arg13[%c1_72, %c48_73], %124 {strides = array<i32>} : memref<2x128xf32, #tpu.memory_space<vmem>>, vector<1x16xf32>,
    %126 = vector.extract_strided_slice %101 {offsets = [12, 0], sizes = [1, 16], strides = [1, 1]} : vector<16x16xf32> to vector<1x16xf32>
    %c1_74 = arith.constant 1 : index
    %c64_75 = arith.constant 64 : index
    %127 = vector.load %arg13[%c1_74, %c64_75] : memref<2x128xf32, #tpu.memory_space<vmem>>, vector<1x16xf32>
    tpu.vector_store %arg13[%c1_74, %c64_75], %126 {strides = array<i32>} : memref<2x128xf32, #tpu.memory_space<vmem>>, vector<1x16xf32>,
    %128 = vector.extract_strided_slice %101 {offsets = [13, 0], sizes = [1, 16], strides = [1, 1]} : vector<16x16xf32> to vector<1x16xf32>
    %c1_76 = arith.constant 1 : index
    %c80_77 = arith.constant 80 : index
    %129 = vector.load %arg13[%c1_76, %c80_77] : memref<2x128xf32, #tpu.memory_space<vmem>>, vector<1x16xf32>
    tpu.vector_store %arg13[%c1_76, %c80_77], %128 {strides = array<i32>} : memref<2x128xf32, #tpu.memory_space<vmem>>, vector<1x16xf32>,
    %130 = vector.extract_strided_slice %101 {offsets = [14, 0], sizes = [1, 16], strides = [1, 1]} : vector<16x16xf32> to vector<1x16xf32>
    %c1_78 = arith.constant 1 : index
    %c96_79 = arith.constant 96 : index
    %131 = vector.load %arg13[%c1_78, %c96_79] : memref<2x128xf32, #tpu.memory_space<vmem>>, vector<1x16xf32>
    tpu.vector_store %arg13[%c1_78, %c96_79], %130 {strides = array<i32>} : memref<2x128xf32, #tpu.memory_space<vmem>>, vector<1x16xf32>,
    %132 = vector.extract_strided_slice %101 {offsets = [15, 0], sizes = [1, 16], strides = [1, 1]} : vector<16x16xf32> to vector<1x16xf32>
    %c1_80 = arith.constant 1 : index
    %c112_81 = arith.constant 112 : index
    %133 = vector.load %arg13[%c1_80, %c112_81] : memref<2x128xf32, #tpu.memory_space<vmem>>, vector<1x16xf32>
    tpu.vector_store %arg13[%c1_80, %c112_81], %132 {strides = array<i32>} : memref<2x128xf32, #tpu.memory_space<vmem>>, vector<1x16xf32>,
    return
  }
  func.func @transform_0(%arg0: i32) -> (i32, i32, i32) {
    %c0_i32 = arith.constant 0 : i32
    %c0_i32_0 = arith.constant 0 : i32
    %c0_i32_1 = arith.constant 0 : i32
    %c0_i32_2 = arith.constant 0 : i32
    return %c0_i32, %c0_i32_0, %c0_i32_1 : i32, i32, i32
  }
  func.func @transform_1(%arg0: i32) -> (i32, i32) {
    %c0_i32 = arith.constant 0 : i32
    %c0_i32_0 = arith.constant 0 : i32
    %c0_i32_1 = arith.constant 0 : i32
    return %c0_i32, %c0_i32_0 : i32, i32
  }
  func.func @transform_2(%arg0: i32) -> (i32, i32) {
    %c0_i32 = arith.constant 0 : i32
    %c0_i32_0 = arith.constant 0 : i32
    %c0_i32_1 = arith.constant 0 : i32
    return %c0_i32, %c0_i32_0 : i32, i32
  }
  func.func @transform_3(%arg0: i32) -> (i32, i32) {
    %c0_i32 = arith.constant 0 : i32
    %c0_i32_0 = arith.constant 0 : i32
    %c0_i32_1 = arith.constant 0 : i32
    return %c0_i32, %c0_i32_0 : i32, i32
  }
  func.func @transform_4(%arg0: i32) -> (i32, i32) {
    %c0_i32 = arith.constant 0 : i32
    %c0_i32_0 = arith.constant 0 : i32
    %c0_i32_1 = arith.constant 0 : i32
    return %c0_i32, %c0_i32_0 : i32, i32
  }
  func.func @transform_5(%arg0: i32) -> (i32, i32) {
    %c0_i32 = arith.constant 0 : i32
    %c0_i32_0 = arith.constant 0 : i32
    %c0_i32_1 = arith.constant 0 : i32
    return %c0_i32, %c0_i32_0 : i32, i32
  }
  func.func @transform_6(%arg0: i32) -> (i32, i32) {
    %c0_i32 = arith.constant 0 : i32
    %c0_i32_0 = arith.constant 0 : i32
    %c0_i32_1 = arith.constant 0 : i32
    return %c0_i32, %c0_i32_0 : i32, i32
  }
  func.func @transform_7(%arg0: i32) -> (i32, i32, i32) {
    %c0_i32 = arith.constant 0 : i32
    %c0_i32_0 = arith.constant 0 : i32
    %c0_i32_1 = arith.constant 0 : i32
    return %arg0, %c0_i32, %c0_i32_0 : i32, i32, i32
  }
  func.func @transform_8(%arg0: i32) -> (i32, i32, i32) {
    %c0_i32 = arith.constant 0 : i32
    %c0_i32_0 = arith.constant 0 : i32
    %c0_i32_1 = arith.constant 0 : i32
    return %arg0, %c0_i32, %c0_i32_0 : i32, i32, i32
  }
  func.func @transform_9(%arg0: i32) -> (i32, i32, i32) {
    %c0_i32 = arith.constant 0 : i32
    %c0_i32_0 = arith.constant 0 : i32
    %c0_i32_1 = arith.constant 0 : i32
    return %arg0, %c0_i32, %c0_i32_0 : i32, i32, i32
  }
  func.func @transform_10(%arg0: i32) -> (i32, i32, i32) {
    %c0_i32 = arith.constant 0 : i32
    %c0_i32_0 = arith.constant 0 : i32
    %c0_i32_1 = arith.constant 0 : i32
    return %arg0, %c0_i32, %c0_i32_0 : i32, i32, i32
  }
  func.func @transform_11(%arg0: i32) -> (i32, i32, i32) {
    %c0_i32 = arith.constant 0 : i32
    %c0_i32_0 = arith.constant 0 : i32
    %c0_i32_1 = arith.constant 0 : i32
    return %arg0, %c0_i32, %c0_i32_0 : i32, i32, i32
  }
  func.func @transform_12(%arg0: i32) -> (i32, i32) {
    %c0_i32 = arith.constant 0 : i32
    %c0_i32_0 = arith.constant 0 : i32
    return %c0_i32, %arg0 : i32, i32
  }
}

</mosaic_0001>

<llo_original>
// kernel: tile.9
$region0: #{tile.9}
  %s0 = inlined_call_operand.vmem [shape: f32[5,8,5], index: 0, kind: input, shape index: {}]
  %s1 = inlined_call_operand.vmem [shape: f32[5,40], index: 1, kind: output, shape index: {}]
  %v2 = vld [vmem:[%s0] ss:$8 sm:$0xf]
  %s3 = scalar_lea.vmem %s0, 28
  %v4 = vld [vmem:[%s3] sm:$0x10]
  %vm5 = vcmask 1044484
  %v6 = vsel %vm5, %v4, %v2
  %vm7 = vcmask 39936
  %8 = vst.msk [vmem:[%s1] sm:$0x1f] %vm7, %v6
  %s9 = scalar_lea.vmem %s0, 7
  %v10 = vld [vmem:[%s9] ss:$8 sm:$0xf]
  %s11 = scalar_lea.vmem %s0, 35
  %v12 = vld [vmem:[%s11] sm:$0x10]
  %vm13 = vcmask 1044484
  %v14 = vsel %vm13, %v12, %v10
  %15 = vrot.lane.b32.xlu0 %v14, 35
  %v16 = vpop.permute.xlu0 %15
  %vm17 = vcmask 326936
  %18 = vst.msk [vmem:[%s1] sm:$0x1f] %vm17, %v16
  %s19 = scalar_lea.vmem %s0, 6
  %v20 = vld [vmem:[%s19] ss:$8 sm:$0xf]
  %s21 = scalar_lea.vmem %s0, 34
  %v22 = vld [vmem:[%s21] sm:$0x10]
  %vm23 = vcmask 1044484
  %v24 = vsel %vm23, %v22, %v20
  %25 = vrot.lane.b32.xlu0 %v24, 30
  %v26 = vpop.permute.xlu0 %25
  %vm27 = vcmask 285936
  %28 = vst.msk [vmem:[%s1] sm:$0x1f] %vm27, %v26
  %s29 = scalar_lea.vmem %s0, 5
  %v30 = vld [vmem:[%s29] ss:$8 sm:$0xf]
  %s31 = scalar_lea.vmem %s0, 33
  %v32 = vld [vmem:[%s31] sm:$0x10]
  %vm33 = vcmask 1044484
  %v34 = vsel %vm33, %v32, %v30
  %35 = vrot.lane.b32.xlu0 %v34, 25
  %v36 = vpop.permute.xlu0 %35
  %vm37 = vcmask 244936
  %38 = vst.msk [vmem:[%s1] sm:$0x1f] %vm37, %v36
  %s39 = scalar_lea.vmem %s0, 4
  %v40 = vld [vmem:[%s39] ss:$8 sm:$0xf]
  %s41 = scalar_lea.vmem %s0, 32
  %v42 = vld [vmem:[%s41] sm:$0x10]
  %vm43 = vcmask 1044484
  %v44 = vsel %vm43, %v42, %v40
  %45 = vrot.lane.b32.xlu0 %v44, 20
  %v46 = vpop.permute.xlu0 %45
  %vm47 = vcmask 203936
  %48 = vst.msk [vmem:[%s1] sm:$0x1f] %vm47, %v46
  %s49 = scalar_lea.vmem %s0, 3
  %v50 = vld [vmem:[%s49] ss:$8 sm:$0xf]
  %s51 = scalar_lea.vmem %s0, 31
  %v52 = vld [vmem:[%s51] sm:$0x10]
  %vm53 = vcmask 1044484
  %v54 = vsel %vm53, %v52, %v50
  %55 = vrot.lane.b32.xlu0 %v54, 15
  %v56 = vpop.permute.xlu0 %55
  %vm57 = vcmask 162936
  %58 = vst.msk [vmem:[%s1] sm:$0x1f] %vm57, %v56
  %s59 = scalar_lea.vmem %s0, 2
  %v60 = vld [vmem:[%s59] ss:$8 sm:$0xf]
  %s61 = scalar_lea.vmem %s0, 30
  %v62 = vld [vmem:[%s61] sm:$0x10]
  %vm63 = vcmask 1044484
  %v64 = vsel %vm63, %v62, %v60
  %65 = vrot.lane.b32.xlu0 %v64, 10
  %v66 = vpop.permute.xlu0 %65
  %vm67 = vcmask 121936
  %68 = vst.msk [vmem:[%s1] sm:$0x1f] %vm67, %v66
  %s69 = scalar_lea.vmem %s0, 1
  %v70 = vld [vmem:[%s69] ss:$8 sm:$0xf]
  %s71 = scalar_lea.vmem %s0, 29
  %v72 = vld [vmem:[%s71] sm:$0x10]
  %vm73 = vcmask 1044484
  %v74 = vsel %vm73, %v72, %v70
  %75 = vrot.lane.b32.xlu0 %v74, 5
  %v76 = vpop.permute.xlu0 %75
  %vm77 = vcmask 80936
  %78 = vst.msk [vmem:[%s1] sm:$0x1f] %vm77, %v76

// kernel: magcn_forward.2
$region0: #{magcn_forward.2}
  #allocation0 [shape = 'u32[]', space=smem, size = 0x4, offset = 0x4, fixed_abs, tag = 'smem constant byte address 0x4 - core index']
  #allocation1 [shape = 'u32[72,128]{1,0:T(1,128)}', space=vmem, size = 0x9000, scoped, tag = 'internal scratch']
  #allocation2 [shape = 'f32[2,8,40]{2,1,0:T(8,128)}', space=vmem, size = 0x2000, scoped, tag = 'scratch operand']
  #allocation3 [shape = 'f32[2,8,8]{2,1,0:T(8,128)}', space=vmem, size = 0x2000, scoped, tag = 'scratch operand']
  #allocation4 [shape = 'f32[2,8,8]{2,1,0:T(8,128)}', space=vmem, size = 0x2000, scoped, tag = 'scratch operand']
  #allocation5 [shape = 'f32[1,1,40]{2,1,0:T(1,128)}', space=vmem, size = 0x200, scoped, tag = 'scratch operand']
  #allocation6 [shape = 'f32[1,1,40]{2,1,0:T(1,128)}', space=vmem, size = 0x200, scoped, tag = 'scratch operand']
  #allocation7 [shape = 'f32[16,120]{1,0:T(8,128)}', space=vmem, size = 0x2000, scoped, tag = 'scratch operand']
  %s0 = inlined_call_operand.vmem [shape: f32[2,8,40], index: 0, kind: input, shape index: {}]
  %s1 = inlined_call_operand.vmem [shape: f32[5,2], index: 1, kind: input, shape index: {}]
  %s2 = inlined_call_operand.hbm [shape: f32[2,5], index: 2, kind: input, shape index: {}]
  %s3 = inlined_call_operand.hbm [shape: f32[4,8], index: 3, kind: input, shape index: {}]
  %s4 = inlined_call_operand.vmem [shape: f32[8,4], index: 4, kind: input, shape index: {}]
  %s5 = inlined_call_operand.vmem [shape: f32[5,40], index: 5, kind: input, shape index: {}]
  %s6 = inlined_call_operand.hbm [shape: f32[8,8], index: 6, kind: input, shape index: {}]
  %s7 = inlined_call_operand.vmem [shape: f32[3,8,8], index: 7, kind: input, shape index: {}]
  %s8 = inlined_call_operand.vmem [shape: f32[3,8,8], index: 8, kind: input, shape index: {}]
  %s9 = inlined_call_operand.vmem [shape: f32[3,1,40], index: 9, kind: input, shape index: {}]
  %s10 = inlined_call_operand.vmem [shape: f32[3,1,40], index: 10, kind: input, shape index: {}]
  %s11 = inlined_call_operand.vmem [shape: f32[3,120,16], index: 11, kind: input, shape index: {}]
  %s12 = inlined_call_operand.vmem [shape: f32[2,384], index: 12, kind: output, shape index: {}]
  %s13 = sld [smem:[#allocation0]]
  $region97: #{magcn_forward.2} parent=0
    _
  %s15 = ssub.s32 1, %s13
  %s16 = scalar_select 0, %s15, %s13
  $region1: #{magcn_forward.2} parent=0
    #allocation8 [shape = 'u8[1024]{0}', space=vmem, size = 0x400, scoped, tag = 'input window, operand 2, single buffered']
    #allocation9 [shape = 's32[2]{0}', space=sflag, size = 0x8, scoped, tag = 'scoped memory for magcn_forward.2']
    #allocation10 [shape = 'u8[2048]{0}', space=vmem, size = 0x800, scoped, tag = 'input window, operand 3, single buffered']
    #allocation11 [shape = 's32[1]{0}', space=sflag, size = 0x4, scoped, tag = 'scoped memory for magcn_forward.2']
    #allocation12 [shape = 'u8[4096]{0}', space=vmem, size = 0x1000, scoped, tag = 'input window, operand 6, single buffered']
    %17 = vsyncpa [#allocation9], 0
    %18 = vsyncpa [#allocation11], 0
    loop: start=0, step=1, limit=5
    $region2: #{magcn_forward.2} parent=1 // loop_pre_header
      _
    $region3: #{magcn_forward.2} parent=1 // loop_header
      %s20 = sphi 0, %s24
      %p21 = scmp.ge.s32.totalorder %s20, 5
      %s28 = sphi 0, %s28
      %s30 = sphi 0, %s28
      %s31 = sphi 0, %s30
      %s45 = sphi 0, %s31
      %s49 = sphi 0, %s49
      %s51 = sphi 0, %s49
      %s52 = sphi 0, %s51
      %s66 = sphi 0, %s52
      %s70 = sphi 0, %s70
      %s72 = sphi 0, %s70
      %s73 = sphi 0, %s72
      %s87 = sphi 0, %s73
      %s91 = sphi 0, %s91
      %s93 = sphi 0, %s91
      %s94 = sphi 0, %s93
      %s108 = sphi 0, %s94
      %s112 = sphi 0, %s112
      %s114 = sphi 0, %s112
      %s115 = sphi 0, %s114
      %s129 = sphi 0, %s115
      %s133 = sphi 0, %s133
      %s135 = sphi 0, %s133
      %s136 = sphi 0, %s135
      %s150 = sphi 0, %s136
      %s154 = sphi 0, %s154
      %s156 = sphi 0, %s154
      %s157 = sphi 0, %s156
      %s171 = sphi 0, %s157
      %s177 = sphi 0, %s179
      %s180 = sphi 0, %s177
      %s181 = sphi 0, %s180
      %s197 = sphi 0, %s181
      %s203 = sphi 0, %s205
      %s206 = sphi 0, %s203
      %s207 = sphi 0, %s206
      %s223 = sphi 0, %s207
      %s229 = sphi 0, %s231
      %s232 = sphi 0, %s229
      %s233 = sphi 0, %s232
      %s249 = sphi 0, %s233
      %s255 = sphi 0, %s257
      %s258 = sphi 0, %s255
      %s259 = sphi 0, %s258
      %s275 = sphi 0, %s259
      %s281 = sphi 0, %s283
      %s284 = sphi 0, %s281
      %s285 = sphi 0, %s284
      %s301 = sphi 0, %s285
      %s307 = sphi 0, %s309
      %s310 = sphi 0, %s307
      %s311 = sphi 0, %s310
      %s327 = sphi 0, %s311
    $region4: #{magcn_forward.2} parent=1 // loop_header_branch
      %23 = sbr.rel (%p21) target = $region8
    $region5: #{magcn_forward.2} parent=1 // loop_body
      %s25 = ssub.s32 %s20, 1
      %s26 = ssub.s32 %s20, 2
      %s27 = sadd.s32 %s20, 1
      %s29 = sadd.s32 %s28, 1
      %p32 = scmp.eq.s32.totalorder %s20, 2
      %p33 = scmp.ne.s32.totalorder %s28, %s30
      %p34 = scmp.eq.s32.totalorder %s20, 0
      %p35 = por %p33, %p34
      %p36 = scmp.ne.s32.totalorder %s28, %s30
      %p37 = scmp.eq.s32.totalorder %s25, 2
      %p38 = por %p36, %p37
      %p39 = scmp.ne.s32.totalorder %s30, %s31
      %p40 = scmp.eq.s32.totalorder %s25, 0
      %p41 = por %p39, %p40
      %p42 = scmp.ne.s32.totalorder %s30, %s31
      %p43 = scmp.eq.s32.totalorder %s26, 2
      %p44 = por %p42, %p43
      %p46 = scmp.ne.s32.totalorder %s31, %s45
      %p47 = scmp.eq.s32.totalorder %s26, 0
      %p48 = por %p46, %p47
      %s50 = sadd.s32 %s49, 1
      %p53 = scmp.eq.s32.totalorder %s20, 2
      %p54 = scmp.ne.s32.totalorder %s49, %s51
      %p55 = scmp.eq.s32.totalorder %s20, 0
      %p56 = por %p54, %p55
      %p57 = scmp.ne.s32.totalorder %s49, %s51
      %p58 = scmp.eq.s32.totalorder %s25, 2
      %p59 = por %p57, %p58
      %p60 = scmp.ne.s32.totalorder %s51, %s52
      %p61 = scmp.eq.s32.totalorder %s25, 0
      %p62 = por %p60, %p61
      %p63 = scmp.ne.s32.totalorder %s51, %s52
      %p64 = scmp.eq.s32.totalorder %s26, 2
      %p65 = por %p63, %p64
      %p67 = scmp.ne.s32.totalorder %s52, %s66
      %p68 = scmp.eq.s32.totalorder %s26, 0
      %p69 = por %p67, %p68
      %s71 = sadd.s32 %s70, 1
      %p74 = scmp.eq.s32.totalorder %s20, 2
      %p75 = scmp.ne.s32.totalorder %s70, %s72
      %p76 = scmp.eq.s32.totalorder %s20, 0
      %p77 = por %p75, %p76
      %p78 = scmp.ne.s32.totalorder %s70, %s72
      %p79 = scmp.eq.s32.totalorder %s25, 2
      %p80 = por %p78, %p79
      %p81 = scmp.ne.s32.totalorder %s72, %s73
      %p82 = scmp.eq.s32.totalorder %s25, 0
      %p83 = por %p81, %p82
      %p84 = scmp.ne.s32.totalorder %s72, %s73
      %p85 = scmp.eq.s32.totalorder %s26, 2
      %p86 = por %p84, %p85
      %p88 = scmp.ne.s32.totalorder %s73, %s87
      %p89 = scmp.eq.s32.totalorder %s26, 0
      %p90 = por %p88, %p89
      %s92 = sadd.s32 %s91, 1
      %p95 = scmp.eq.s32.totalorder %s20, 2
      %p96 = scmp.ne.s32.totalorder %s91, %s93
      %p97 = scmp.eq.s32.totalorder %s20, 0
      %p98 = por %p96, %p97
      %p99 = scmp.ne.s32.totalorder %s91, %s93
      %p100 = scmp.eq.s32.totalorder %s25, 2
      %p101 = por %p99, %p100
      %p102 = scmp.ne.s32.totalorder %s93, %s94
      %p103 = scmp.eq.s32.totalorder %s25, 0
      %p104 = por %p102, %p103
      %p105 = scmp.ne.s32.totalorder %s93, %s94
      %p106 = scmp.eq.s32.totalorder %s26, 2
      %p107 = por %p105, %p106
      %p109 = scmp.ne.s32.totalorder %s94, %s108
      %p110 = scmp.eq.s32.totalorder %s26, 0
      %p111 = por %p109, %p110
      %s113 = sadd.s32 %s112, 1
      %p116 = scmp.eq.s32.totalorder %s20, 2
      %p117 = scmp.ne.s32.totalorder %s112, %s114
      %p118 = scmp.eq.s32.totalorder %s20, 0
      %p119 = por %p117, %p118
      %p120 = scmp.ne.s32.totalorder %s112, %s114
      %p121 = scmp.eq.s32.totalorder %s25, 2
      %p122 = por %p120, %p121
      %p123 = scmp.ne.s32.totalorder %s114, %s115
      %p124 = scmp.eq.s32.totalorder %s25, 0
      %p125 = por %p123, %p124
      %p126 = scmp.ne.s32.totalorder %s114, %s115
      %p127 = scmp.eq.s32.totalorder %s26, 2
      %p128 = por %p126, %p127
      %p130 = scmp.ne.s32.totalorder %s115, %s129
      %p131 = scmp.eq.s32.totalorder %s26, 0
      %p132 = por %p130, %p131
      %s134 = sadd.s32 %s133, 1
      %p137 = scmp.eq.s32.totalorder %s20, 2
      %p138 = scmp.ne.s32.totalorder %s133, %s135
      %p139 = scmp.eq.s32.totalorder %s20, 0
      %p140 = por %p138, %p139
      %p141 = scmp.ne.s32.totalorder %s133, %s135
      %p142 = scmp.eq.s32.totalorder %s25, 2
      %p143 = por %p141, %p142
      %p144 = scmp.ne.s32.totalorder %s135, %s136
      %p145 = scmp.eq.s32.totalorder %s25, 0
      %p146 = por %p144, %p145
      %p147 = scmp.ne.s32.totalorder %s135, %s136
      %p148 = scmp.eq.s32.totalorder %s26, 2
      %p149 = por %p147, %p148
      %p151 = scmp.ne.s32.totalorder %s136, %s150
      %p152 = scmp.eq.s32.totalorder %s26, 0
      %p153 = por %p151, %p152
      %s155 = sadd.s32 %s154, 1
      %p158 = scmp.eq.s32.totalorder %s20, 2
      %p159 = scmp.ne.s32.totalorder %s154, %s156
      %p160 = scmp.eq.s32.totalorder %s20, 0
      %p161 = por %p159, %p160
      %p162 = scmp.ne.s32.totalorder %s154, %s156
      %p163 = scmp.eq.s32.totalorder %s25, 2
      %p164 = por %p162, %p163
      %p165 = scmp.ne.s32.totalorder %s156, %s157
      %p166 = scmp.eq.s32.totalorder %s25, 0
      %p167 = por %p165, %p166
      %p168 = scmp.ne.s32.totalorder %s156, %s157
      %p169 = scmp.eq.s32.totalorder %s26, 2
      %p170 = por %p168, %p169
      %p172 = scmp.ne.s32.totalorder %s157, %s171
      %p173 = scmp.eq.s32.totalorder %s26, 0
      %p174 = por %p172, %p173
      %s175 = ssub.s32 %s20, %s27
      %p176 = scmp.eq.s32.totalorder %s175, 0
      %s178 = sadd.s32 %s177, 1
      %s179 = scalar_select %p176, %s177, %s178
      %p182 = pneg %p176
      %p183 = scmp.eq.s32.totalorder %s20, 2
      %p184 = por %p182, %p183
      %p185 = scmp.ne.s32.totalorder %s177, %s180
      %p186 = scmp.eq.s32.totalorder %s20, 0
      %p187 = por %p185, %p186
      %p188 = scmp.ne.s32.totalorder %s177, %s180
      %p189 = scmp.eq.s32.totalorder %s25, 2
      %p190 = por %p188, %p189
      %p191 = scmp.ne.s32.totalorder %s180, %s181
      %p192 = scmp.eq.s32.totalorder %s25, 0
      %p193 = por %p191, %p192
      %p194 = scmp.ne.s32.totalorder %s180, %s181
      %p195 = scmp.eq.s32.totalorder %s26, 2
      %p196 = por %p194, %p195
      %p198 = scmp.ne.s32.totalorder %s181, %s197
      %p199 = scmp.eq.s32.totalorder %s26, 0
      %p200 = por %p198, %p199
      %s201 = ssub.s32 %s20, %s27
      %p202 = scmp.eq.s32.totalorder %s201, 0
      %s204 = sadd.s32 %s203, 1
      %s205 = scalar_select %p202, %s203, %s204
      %p208 = pneg %p202
      %p209 = scmp.eq.s32.totalorder %s20, 2
      %p210 = por %p208, %p209
      %p211 = scmp.ne.s32.totalorder %s203, %s206
      %p212 = scmp.eq.s32.totalorder %s20, 0
      %p213 = por %p211, %p212
      %p214 = scmp.ne.s32.totalorder %s203, %s206
      %p215 = scmp.eq.s32.totalorder %s25, 2
      %p216 = por %p214, %p215
      %p217 = scmp.ne.s32.totalorder %s206, %s207
      %p218 = scmp.eq.s32.totalorder %s25, 0
      %p219 = por %p217, %p218
      %p220 = scmp.ne.s32.totalorder %s206, %s207
      %p221 = scmp.eq.s32.totalorder %s26, 2
      %p222 = por %p220, %p221
      %p224 = scmp.ne.s32.totalorder %s207, %s223
      %p225 = scmp.eq.s32.totalorder %s26, 0
      %p226 = por %p224, %p225
      %s227 = ssub.s32 %s20, %s27
      %p228 = scmp.eq.s32.totalorder %s227, 0
      %s230 = sadd.s32 %s229, 1
      %s231 = scalar_select %p228, %s229, %s230
      %p234 = pneg %p228
      %p235 = scmp.eq.s32.totalorder %s20, 2
      %p236 = por %p234, %p235
      %p237 = scmp.ne.s32.totalorder %s229, %s232
      %p238 = scmp.eq.s32.totalorder %s20, 0
      %p239 = por %p237, %p238
      %p240 = scmp.ne.s32.totalorder %s229, %s232
      %p241 = scmp.eq.s32.totalorder %s25, 2
      %p242 = por %p240, %p241
      %p243 = scmp.ne.s32.totalorder %s232, %s233
      %p244 = scmp.eq.s32.totalorder %s25, 0
      %p245 = por %p243, %p244
      %p246 = scmp.ne.s32.totalorder %s232, %s233
      %p247 = scmp.eq.s32.totalorder %s26, 2
      %p248 = por %p246, %p247
      %p250 = scmp.ne.s32.totalorder %s233, %s249
      %p251 = scmp.eq.s32.totalorder %s26, 0
      %p252 = por %p250, %p251
      %s253 = ssub.s32 %s20, %s27
      %p254 = scmp.eq.s32.totalorder %s253, 0
      %s256 = sadd.s32 %s255, 1
      %s257 = scalar_select %p254, %s255, %s256
      %p260 = pneg %p254
      %p261 = scmp.eq.s32.totalorder %s20, 2
      %p262 = por %p260, %p261
      %p263 = scmp.ne.s32.totalorder %s255, %s258
      %p264 = scmp.eq.s32.totalorder %s20, 0
      %p265 = por %p263, %p264
      %p266 = scmp.ne.s32.totalorder %s255, %s258
      %p267 = scmp.eq.s32.totalorder %s25, 2
      %p268 = por %p266, %p267
      %p269 = scmp.ne.s32.totalorder %s258, %s259
      %p270 = scmp.eq.s32.totalorder %s25, 0
      %p271 = por %p269, %p270
      %p272 = scmp.ne.s32.totalorder %s258, %s259
      %p273 = scmp.eq.s32.totalorder %s26, 2
      %p274 = por %p272, %p273
      %p276 = scmp.ne.s32.totalorder %s259, %s275
      %p277 = scmp.eq.s32.totalorder %s26, 0
      %p278 = por %p276, %p277
      %s279 = ssub.s32 %s20, %s27
      %p280 = scmp.eq.s32.totalorder %s279, 0
      %s282 = sadd.s32 %s281, 1
      %s283 = scalar_select %p280, %s281, %s282
      %p286 = pneg %p280
      %p287 = scmp.eq.s32.totalorder %s20, 2
      %p288 = por %p286, %p287
      %p289 = scmp.ne.s32.totalorder %s281, %s284
      %p290 = scmp.eq.s32.totalorder %s20, 0
      %p291 = por %p289, %p290
      %p292 = scmp.ne.s32.totalorder %s281, %s284
      %p293 = scmp.eq.s32.totalorder %s25, 2
      %p294 = por %p292, %p293
      %p295 = scmp.ne.s32.totalorder %s284, %s285
      %p296 = scmp.eq.s32.totalorder %s25, 0
      %p297 = por %p295, %p296
      %p298 = scmp.ne.s32.totalorder %s284, %s285
      %p299 = scmp.eq.s32.totalorder %s26, 2
      %p300 = por %p298, %p299
      %p302 = scmp.ne.s32.totalorder %s285, %s301
      %p303 = scmp.eq.s32.totalorder %s26, 0
      %p304 = por %p302, %p303
      %s305 = ssub.s32 %s20, %s27
      %p306 = scmp.eq.s32.totalorder %s305, 0
      %s308 = sadd.s32 %s307, 1
      %s309 = scalar_select %p306, %s307, %s308
      %p312 = pneg %p306
      %p313 = scmp.eq.s32.totalorder %s20, 2
      %p314 = por %p312, %p313
      %p315 = scmp.ne.s32.totalorder %s307, %s310
      %p316 = scmp.eq.s32.totalorder %s20, 0
      %p317 = por %p315, %p316
      %p318 = scmp.ne.s32.totalorder %s307, %s310
      %p319 = scmp.eq.s32.totalorder %s25, 2
      %p320 = por %p318, %p319
      %p321 = scmp.ne.s32.totalorder %s310, %s311
      %p322 = scmp.eq.s32.totalorder %s25, 0
      %p323 = por %p321, %p322
      %p324 = scmp.ne.s32.totalorder %s310, %s311
      %p325 = scmp.eq.s32.totalorder %s26, 2
      %p326 = por %p324, %p325
      %p328 = scmp.ne.s32.totalorder %s311, %s327
      %p329 = scmp.eq.s32.totalorder %s26, 0
      %p330 = por %p328, %p329
      %p331 = scmp.le.s32.totalorder 1, %s20
      %p332 = scmp.lt.s32.totalorder %s20, 4
      %p333 = pnand %p331, %p332
      %p334 = pneg %p333
      // Predicated region
      $region9: #{magcn_forward.2} parent=5 // pred_check
        _
      $region10: #{magcn_forward.2} parent=5 // pred_check_branch
        %336 = sbr.rel (%p333) target = $region12
      $region11: #{magcn_forward.2} parent=5 // pred_region
        %s337 = ssub.s32 %s20, 1
        // Predicated region
        $region13: #{magcn_forward.2} parent=11 // pred_check
          %p338 = pneg %p41
        $region14: #{magcn_forward.2} parent=11 // pred_check_branch
          %340 = sbr.rel (%p338) target = $region16
        $region15: #{magcn_forward.2} parent=11 // pred_region
          _
        $region16: #{magcn_forward.2} parent=11 // pred_fallthru
          _
        // Predicated region
        $region17: #{magcn_forward.2} parent=11 // pred_check
          %p341 = pneg %p62
        $region18: #{magcn_forward.2} parent=11 // pred_check_branch
          %343 = sbr.rel (%p341) target = $region20
        $region19: #{magcn_forward.2} parent=11 // pred_region
          _
        $region20: #{magcn_forward.2} parent=11 // pred_fallthru
          _
        // Predicated region
        $region21: #{magcn_forward.2} parent=11 // pred_check
          %p344 = pneg %p83
        $region22: #{magcn_forward.2} parent=11 // pred_check_branch
          %346 = sbr.rel (%p344) target = $region24
        $region23: #{magcn_forward.2} parent=11 // pred_region
          %348 = vsyncadd [#allocation9], 0
          %s350 = sshll.u32 %s2, 4
          %s351 = int_to_ptr.hbm [resolvable:$true] %s350
          %s352 = sshll.u32 [#allocation8], 4
          %s353 = int_to_ptr.vmem [resolvable:$true] %s352
          %355 = dma.hbm_to_vmem [thread:$0]  %s351, 32, %s353, [#allocation9]
        $region24: #{magcn_forward.2} parent=11 // pred_fallthru
          _
        // Predicated region
        $region25: #{magcn_forward.2} parent=11 // pred_check
          %p356 = pneg %p104
        $region26: #{magcn_forward.2} parent=11 // pred_check_branch
          %358 = sbr.rel (%p356) target = $region28
        $region27: #{magcn_forward.2} parent=11 // pred_region
          %360 = vsyncadd [#allocation11], 0
          %s362 = sshll.u32 %s3, 4
          %s363 = int_to_ptr.hbm [resolvable:$true] %s362
          %s364 = sshll.u32 [#allocation10], 4
          %s365 = int_to_ptr.vmem [resolvable:$true] %s364
          %367 = dma.hbm_to_vmem [thread:$0]  %s363, 64, %s365, [#allocation11]
        $region28: #{magcn_forward.2} parent=11 // pred_fallthru
          _
        // Predicated region
        $region29: #{magcn_forward.2} parent=11 // pred_check
          %p368 = pneg %p125
        $region30: #{magcn_forward.2} parent=11 // pred_check_branch
          %370 = sbr.rel (%p368) target = $region32
        $region31: #{magcn_forward.2} parent=11 // pred_region
          _
        $region32: #{magcn_forward.2} parent=11 // pred_fallthru
          _
        // Predicated region
        $region33: #{magcn_forward.2} parent=11 // pred_check
          %p371 = pneg %p146
        $region34: #{magcn_forward.2} parent=11 // pred_check_branch
          %373 = sbr.rel (%p371) target = $region36
        $region35: #{magcn_forward.2} parent=11 // pred_region
          _
        $region36: #{magcn_forward.2} parent=11 // pred_fallthru
          _
        // Predicated region
        $region37: #{magcn_forward.2} parent=11 // pred_check
          %p374 = pneg %p167
        $region38: #{magcn_forward.2} parent=11 // pred_check_branch
          %376 = sbr.rel (%p374) target = $region40
        $region39: #{magcn_forward.2} parent=11 // pred_region
          %378 = vsyncadd [#allocation11], 0
          %s380 = sshll.u32 %s6, 4
          %s381 = int_to_ptr.hbm [resolvable:$true] %s380
          %s382 = sshll.u32 [#allocation12], 4
          %s383 = int_to_ptr.vmem [resolvable:$true] %s382
          %385 = dma.hbm_to_vmem [thread:$0]  %s381, 128, %s383, [#allocation11]
        $region40: #{magcn_forward.2} parent=11 // pred_fallthru
          _
      $region12: #{magcn_forward.2} parent=5 // pred_fallthru
        _
      %p386 = scmp.lt.s32.totalorder %s20, 3
      // Predicated region
      $region41: #{magcn_forward.2} parent=5 // pred_check
        %p387 = pneg %p386
      $region42: #{magcn_forward.2} parent=5 // pred_check_branch
        %389 = sbr.rel (%p387) target = $region44
      $region43: #{magcn_forward.2} parent=5 // pred_region
        // Predicated region
        $region45: #{magcn_forward.2} parent=43 // pred_check
          %p390 = pneg %p187
        $region46: #{magcn_forward.2} parent=43 // pred_check_branch
          %392 = sbr.rel (%p390) target = $region48
        $region47: #{magcn_forward.2} parent=43 // pred_region
          %p393 = scmp.lt.s32.totalorder %s20, 2
          %s394 = scalar_select %p393, %s20, 2
          %s395 = smul.addr %s394, 8
          %s396 = scalar_lea.vmem %s7, %s395
        $region48: #{magcn_forward.2} parent=43 // pred_fallthru
          _
        // Predicated region
        $region49: #{magcn_forward.2} parent=43 // pred_check
          %p397 = pneg %p213
        $region50: #{magcn_forward.2} parent=43 // pred_check_branch
          %399 = sbr.rel (%p397) target = $region52
        $region51: #{magcn_forward.2} parent=43 // pred_region
          %p400 = scmp.lt.s32.totalorder %s20, 2
          %s401 = scalar_select %p400, %s20, 2
          %s402 = smul.addr %s401, 8
          %s403 = scalar_lea.vmem %s8, %s402
        $region52: #{magcn_forward.2} parent=43 // pred_fallthru
          _
        // Predicated region
        $region53: #{magcn_forward.2} parent=43 // pred_check
          %p404 = pneg %p239
        $region54: #{magcn_forward.2} parent=43 // pred_check_branch
          %406 = sbr.rel (%p404) target = $region56
        $region55: #{magcn_forward.2} parent=43 // pred_region
          %p407 = scmp.lt.s32.totalorder %s20, 2
          %s408 = scalar_select %p407, %s20, 2
          %s409 = scalar_lea.vmem %s9, %s408
        $region56: #{magcn_forward.2} parent=43 // pred_fallthru
          _
        // Predicated region
        $region57: #{magcn_forward.2} parent=43 // pred_check
          %p410 = pneg %p265
        $region58: #{magcn_forward.2} parent=43 // pred_check_branch
          %412 = sbr.rel (%p410) target = $region60
        $region59: #{magcn_forward.2} parent=43 // pred_region
          %p413 = scmp.lt.s32.totalorder %s20, 2
          %s414 = scalar_select %p413, %s20, 2
          %s415 = scalar_lea.vmem %s10, %s414
        $region60: #{magcn_forward.2} parent=43 // pred_fallthru
          _
        // Predicated region
        $region61: #{magcn_forward.2} parent=43 // pred_check
          %p416 = pneg %p291
        $region62: #{magcn_forward.2} parent=43 // pred_check_branch
          %418 = sbr.rel (%p416) target = $region64
        $region63: #{magcn_forward.2} parent=43 // pred_region
          %p419 = scmp.lt.s32.totalorder %s20, 2
          %s420 = scalar_select %p419, %s20, 2
          %s421 = smul.addr %s420, 15
          %s422 = smul.addr %s421, 8
          %s423 = scalar_lea.vmem %s11, %s422
        $region64: #{magcn_forward.2} parent=43 // pred_fallthru
          _
      $region44: #{magcn_forward.2} parent=5 // pred_fallthru
        _
      %p424 = scmp.le.s32.totalorder 1, %s20
      %p425 = scmp.lt.s32.totalorder %s20, 4
      %p426 = pnand %p424, %p425
      %p427 = pneg %p426
      // Predicated region
      $region65: #{magcn_forward.2} parent=5 // pred_check
        _
      $region66: #{magcn_forward.2} parent=5 // pred_check_branch
        %429 = sbr.rel (%p426) target = $region68
      $region67: #{magcn_forward.2} parent=5 // pred_region
        %s430 = ssub.s32 %s20, 1
        // Predicated region
        $region69: #{magcn_forward.2} parent=67 // pred_check
          %p431 = pneg %p83
        $region70: #{magcn_forward.2} parent=67 // pred_check_branch
          %433 = sbr.rel (%p431) target = $region72
        $region71: #{magcn_forward.2} parent=67 // pred_region
          %435 = dma.done [#allocation9], 32
        $region72: #{magcn_forward.2} parent=67 // pred_fallthru
          _
        // Predicated region
        $region73: #{magcn_forward.2} parent=67 // pred_check
          %p436 = pneg %p104
        $region74: #{magcn_forward.2} parent=67 // pred_check_branch
          %438 = sbr.rel (%p436) target = $region76
        $region75: #{magcn_forward.2} parent=67 // pred_region
          %440 = dma.done [#allocation11], 64
        $region76: #{magcn_forward.2} parent=67 // pred_fallthru
          _
        // Predicated region
        $region77: #{magcn_forward.2} parent=67 // pred_check
          %p441 = pneg %p167
        $region78: #{magcn_forward.2} parent=67 // pred_check_branch
          %443 = sbr.rel (%p441) target = $region80
        $region79: #{magcn_forward.2} parent=67 // pred_region
          %445 = dma.done [#allocation11], 128
        $region80: #{magcn_forward.2} parent=67 // pred_fallthru
          _
        %p446 = pneg %p41
        %p447 = pneg %p38
        %p448 = pneg %p62
        %p449 = pneg %p59
        %p450 = pneg %p83
        %p451 = pneg %p80
        %p452 = pneg %p104
        %p453 = pneg %p101
        %p454 = pneg %p125
        %p455 = pneg %p122
        %p456 = pneg %p146
        %p457 = pneg %p143
        %p458 = pneg %p167
        %p459 = pneg %p164
        %p460 = scmp.lt.s32.totalorder %s25, 2
        %s461 = scalar_select %p460, %s25, 2
        %s462 = smul.addr %s461, 8
        %s463 = scalar_lea.vmem %s7, %s462
        %p464 = pneg %p193
        %p465 = pneg %p190
        %p466 = scmp.lt.s32.totalorder %s25, 2
        %s467 = scalar_select %p466, %s25, 2
        %s468 = smul.addr %s467, 8
        %s469 = scalar_lea.vmem %s8, %s468
        %p470 = pneg %p219
        %p471 = pneg %p216
        %p472 = scmp.lt.s32.totalorder %s25, 2
        %s473 = scalar_select %p472, %s25, 2
        %s474 = scalar_lea.vmem %s9, %s473
        %p475 = pneg %p245
        %p476 = pneg %p242
        %p477 = scmp.lt.s32.totalorder %s25, 2
        %s478 = scalar_select %p477, %s25, 2
        %s479 = scalar_lea.vmem %s10, %s478
        %p480 = pneg %p271
        %p481 = pneg %p268
        %p482 = scmp.lt.s32.totalorder %s25, 2
        %s483 = scalar_select %p482, %s25, 2
        %s484 = smul.addr %s483, 15
        %s485 = smul.addr %s484, 8
        %s486 = scalar_lea.vmem %s11, %s485
        %p487 = pneg %p297
        %p488 = pneg %p294
        %p489 = pneg %p323
        %p490 = pneg %p320
        %p491 = scmp.lt.s32.totalorder %s25, 2
        %s492 = scalar_select %p491, %s25, 2
        %s493 = smul.addr %s492, 2
        %s494 = scalar_lea.vmem %s12, %s493
        %p495 = scmp.lt.s32.totalorder %s25, 2
        %s496 = scalar_select %p495, %s25, 2
        %s497 = smul.addr %s496, 8
        %s498 = scalar_lea.vmem %s7, %s497
        %p499 = scmp.lt.s32.totalorder %s25, 2
        %s500 = scalar_select %p499, %s25, 2
        %s501 = smul.addr %s500, 8
        %s502 = scalar_lea.vmem %s8, %s501
        %p503 = scmp.lt.s32.totalorder %s25, 2
        %s504 = scalar_select %p503, %s25, 2
        %s505 = scalar_lea.vmem %s9, %s504
        %p506 = scmp.lt.s32.totalorder %s25, 2
        %s507 = scalar_select %p506, %s25, 2
        %s508 = scalar_lea.vmem %s10, %s507
        %p509 = scmp.lt.s32.totalorder %s25, 2
        %s510 = scalar_select %p509, %s25, 2
        %s511 = smul.addr %s510, 15
        %s512 = smul.addr %s511, 8
        %s513 = scalar_lea.vmem %s11, %s512
        %p514 = scmp.lt.s32.totalorder %s25, 2
        %s515 = scalar_select %p514, %s25, 2
        %s516 = smul.addr %s515, 2
        %s517 = scalar_lea.vmem %s12, %s516
        %p518 = scmp.eq.s32.totalorder %s25, 0
        // Predicated region
        $region81: #{magcn_forward.2} parent=67 // pred_check
          %p519 = pneg %p518
        $region82: #{magcn_forward.2} parent=67 // pred_check_branch
          %521 = sbr.rel (%p519) target = $region84
        $region83: #{magcn_forward.2} parent=67 // pred_region
          %v522 = vld [vmem:[%s0] sm:$0xff]
          %vm523 = vcmask 326656
          %v524 = vsel %vm523, %v522, 0.0
          %v525 = vrot.slane %v524, 4
          %v526 = vadd.f32 %v524, %v525
          %v527 = vrot.slane %v526, 2
          %v528 = vadd.f32 %v526, %v527
          %v529 = vrot.slane %v528, 1
          %v530 = vadd.f32 %v528, %v529
          %v531 = vrcp.pop 8.0
          %v532 = vmul.f32 8.0, %v531
          %v533 = vsub.f32 1.0, %v532
          %v534 = vmul.f32 %v531, %v533
          %v535 = vadd.f32 %v531, %v534
          %vm536 = vweird.f32 %v531
          %v537 = vsel %vm536, %v531, %v535
          %v538 = vmul.f32 %v530, %v537
          %v539 = vld [vmem:[%s5] sm:$0x1f]
          %v541 = vsel %vm523, %v538, 0
          %v544 = vsel %vm523, %v539, 0
          %546 = vmatpush.xpose.msra.mxu0 0.0
          %547 = vmatpush.xpose.msra.mxu0 0.0
          %548 = vmatpush.xpose.msra.mxu0 0.0
          %549 = vmatpush.xpose.msra.mxu0 0.0
          %550 = vmatpush.xpose.msra.mxu0 0.0
          %551 = vmatpush.xpose.msra.mxu0 0.0
          %552 = vmatpush.xpose.msra.mxu0 0.0
          %553 = vmatpush.xpose.msra.mxu0 0.0
          %554 = vmatpush.xpose.msra.mxu0 0.0
          %555 = vmatpush.xpose.msra.mxu0 0.0
          %556 = vmatpush.xpose.msra.mxu0 0.0
          %557 = vmatpush.xpose.msra.mxu0 0.0
          %558 = vmatpush.xpose.msra.mxu0 0.0
          %559 = vmatpush.xpose.msra.mxu0 0.0
          %560 = vmatpush.xpose.msra.mxu0 0.0
          %561 = vmatpush.xpose.msra.mxu0 %v544
          %562 = vmatmul.f32.gmra.mxu0 %v541
          %v563 = vpop.f32.mrf.mxu0
          %v564 = vadd.f32 0.0, %v563
          %565 = vdwg.mxu0
          %v566 = vmul.f32 %v564, 0.125
          %v567 = vld [vmem:[%s1] sm:$0x1f]
          %vm568 = vcmask 39936
          %v570 = vsel %vm568, %v566, 0
          %vm572 = vcmask 1044480
          %v574 = vsel %vm572, %v567, 0
          %576 = vmatpush.msra.mxu0 0.0
          %577 = vmatpush.msra.mxu0 0.0
          %578 = vmatpush.msra.mxu0 0.0
          %579 = vmatpush.msra.mxu0 0.0
          %580 = vmatpush.msra.mxu0 0.0
          %581 = vmatpush.msra.mxu0 0.0
          %582 = vmatpush.msra.mxu0 0.0
          %583 = vmatpush.msra.mxu0 0.0
          %584 = vmatpush.msra.mxu0 0.0
          %585 = vmatpush.msra.mxu0 0.0
          %586 = vmatpush.msra.mxu0 0.0
          %587 = vmatpush.msra.mxu0 0.0
          %588 = vmatpush.msra.mxu0 0.0
          %589 = vmatpush.msra.mxu0 0.0
          %590 = vmatpush.msra.mxu0 0.0
          %591 = vmatpush.msra.mxu0 %v574
          %592 = vmatmul.f32.gmra.mxu0 %v570
          %v593 = vpop.f32.mrf.mxu0
          %v594 = vadd.f32 0.0, %v593
          %595 = vdwg.mxu0
          %v596 = vmax.f32 %v594, 0.0
          %v597 = vld [vmem:[#allocation8] sm:$0x3]
          %vm598 = vcmask 15360
          %v600 = vsel %vm598, %v596, 0
          %vm602 = vcmask 1041408
          %v604 = vsel %vm602, %v597, 0
          %606 = vmatpush.msra.mxu0 0.0
          %607 = vmatpush.msra.mxu0 0.0
          %608 = vmatpush.msra.mxu0 0.0
          %609 = vmatpush.msra.mxu0 0.0
          %610 = vmatpush.msra.mxu0 0.0
          %611 = vmatpush.msra.mxu0 0.0
          %612 = vmatpush.msra.mxu0 0.0
          %613 = vmatpush.msra.mxu0 0.0
          %614 = vmatpush.msra.mxu0 0.0
          %615 = vmatpush.msra.mxu0 0.0
          %616 = vmatpush.msra.mxu0 0.0
          %617 = vmatpush.msra.mxu0 0.0
          %618 = vmatpush.msra.mxu0 0.0
          %619 = vmatpush.msra.mxu0 0.0
          %620 = vmatpush.msra.mxu0 0.0
          %621 = vmatpush.msra.mxu0 %v604
          %622 = vmatmul.f32.gmra.mxu0 %v600
          %v623 = vpop.f32.mrf.mxu0
          %v624 = vadd.f32 0.0, %v623
          %625 = vdwg.mxu0
          %v626 = vxor.u32 %v624, 2147483648
          %v627 = vmul.f32 %v626, 1.442695
          %v628 = vpow.pop %v627
          %v629 = vadd.f32 %v628, 1.0
          %v630 = vrcp.pop %v629
          %v631 = vmul.f32 %v629, %v630
          %v632 = vsub.f32 1.0, %v631
          %v633 = vmul.f32 %v630, %v632
          %v634 = vadd.f32 %v630, %v633
          %vm635 = vweird.f32 %v629
          %vm636 = vweird.f32 %v630
          %vm637 = vmor %vm635, %vm636
          %v638 = vsel %vm637, %v630, %v634
          %v639 = vand.u32 2147483647, %v629
          %vm640 = vcmp.eq.f32.partialorder %v639, 8.507059e+37
          %v641 = vand.u32 %v629, 2147483648
          %v642 = vor.u32 1.1754944e-38, %v641
          %v643 = vsel %vm640, %v642, %v638
          %v644 = vmul.f32 1.0, %v643
          %v646 = vsel %vm568, %v644, 0
          %v648 = vsel %vm572, %v539, 0
          %650 = vmatpush.msra.mxu0 0.0
          %651 = vmatpush.msra.mxu0 0.0
          %652 = vmatpush.msra.mxu0 0.0
          %653 = vmatpush.msra.mxu0 0.0
          %654 = vmatpush.msra.mxu0 0.0
          %655 = vmatpush.msra.mxu0 0.0
          %656 = vmatpush.msra.mxu0 0.0
          %657 = vmatpush.msra.mxu0 0.0
          %658 = vmatpush.msra.mxu0 0.0
          %659 = vmatpush.msra.mxu0 0.0
          %660 = vmatpush.msra.mxu0 0.0
          %661 = vmatpush.msra.mxu0 0.0
          %662 = vmatpush.msra.mxu0 0.0
          %663 = vmatpush.msra.mxu0 0.0
          %664 = vmatpush.msra.mxu0 0.0
          %665 = vmatpush.msra.mxu0 %v648
          %666 = vmatmul.f32.gmra.mxu0 %v646
          %v667 = vpop.f32.mrf.mxu0
          %v668 = vadd.f32 0.0, %v667
          %669 = vdwg.mxu0
          %v670 = vperm.slane %v668, 0
          %v671 = vmul.f32 %v522, %v670
          %v672 = vsel %vm523, %v671, 0.0
          %673 = vadd.xlane.f32.xlu0 %v672
          %v674 = vpop.xlane.xlu0 %673
          %v675 = vrcp.pop 40.0
          %v676 = vmul.f32 40.0, %v675
          %v677 = vsub.f32 1.0, %v676
          %v678 = vmul.f32 %v675, %v677
          %v679 = vadd.f32 %v675, %v678
          %vm680 = vweird.f32 %v675
          %v681 = vsel %vm680, %v675, %v679
          %v682 = vmul.f32 %v674, %v681
          %v683 = vld [vmem:[#allocation10] sm:$0xf]
          %vm684 = vcmask 64512
          %v686 = vsel %vm684, %v683, 0
          %688 = vmatpush.msra.mxu0 0.0
          %689 = vmatpush.msra.mxu0 0.0
          %690 = vmatpush.msra.mxu0 0.0
          %691 = vmatpush.msra.mxu0 0.0
          %692 = vmatpush.msra.mxu0 0.0
          %693 = vmatpush.msra.mxu0 0.0
          %694 = vmatpush.msra.mxu0 0.0
          %695 = vmatpush.msra.mxu0 0.0
          %696 = vmatpush.msra.mxu0 0.0
          %697 = vmatpush.msra.mxu0 0.0
          %698 = vmatpush.msra.mxu0 0.0
          %699 = vmatpush.msra.mxu0 0.0
          %700 = vmatpush.msra.mxu0 0.0
          %701 = vmatpush.msra.mxu0 0.0
          %702 = vmatpush.msra.mxu0 0.0
          %703 = vmatpush.msra.mxu0 %v682
          %704 = vmatmul.f32.gmra.mxu0 %v686
          %v705 = vpop.f32.mrf.mxu0
          %v706 = vadd.f32 0.0, %v705
          %707 = vdwg.mxu0
          %v708 = vmax.f32 %v706, 0.0
          %v709 = vld [vmem:[%s4] sm:$0xff]
          %vm710 = vcmask 31744
          %v712 = vsel %vm710, %v709, 0
          %vm714 = vcmask 1043456
          %v716 = vsel %vm714, %v708, 0
          %718 = vmatpush.msra.mxu0 0.0
          %719 = vmatpush.msra.mxu0 0.0
          %720 = vmatpush.msra.mxu0 0.0
          %721 = vmatpush.msra.mxu0 0.0
          %722 = vmatpush.msra.mxu0 0.0
          %723 = vmatpush.msra.mxu0 0.0
          %724 = vmatpush.msra.mxu0 0.0
          %725 = vmatpush.msra.mxu0 0.0
          %726 = vmatpush.msra.mxu0 0.0
          %727 = vmatpush.msra.mxu0 0.0
          %728 = vmatpush.msra.mxu0 0.0
          %729 = vmatpush.msra.mxu0 0.0
          %730 = vmatpush.msra.mxu0 0.0
          %731 = vmatpush.msra.mxu0 0.0
          %732 = vmatpush.msra.mxu0 0.0
          %733 = vmatpush.msra.mxu0 %v716
          %734 = vmatmul.f32.gmra.mxu0 %v712
          %v735 = vpop.f32.mrf.mxu0
          %v736 = vadd.f32 0.0, %v735
          %737 = vdwg.mxu0
          %v738 = vxor.u32 %v736, 2147483648
          %v739 = vmul.f32 %v738, 1.442695
          %v740 = vpow.pop %v739
          %v741 = vadd.f32 %v740, 1.0
          %v742 = vrcp.pop %v741
          %v743 = vmul.f32 %v741, %v742
          %v744 = vsub.f32 1.0, %v743
          %v745 = vmul.f32 %v742, %v744
          %v746 = vadd.f32 %v742, %v745
          %vm747 = vweird.f32 %v741
          %vm748 = vweird.f32 %v742
          %vm749 = vmor %vm747, %vm748
          %v750 = vsel %vm749, %v742, %v746
          %v751 = vand.u32 2147483647, %v741
          %vm752 = vcmp.eq.f32.partialorder %v751, 8.507059e+37
          %v753 = vand.u32 %v741, 2147483648
          %v754 = vor.u32 1.1754944e-38, %v753
          %v755 = vsel %vm752, %v754, %v750
          %v756 = vmul.f32 1.0, %v755
          %758 = vset.pattern.permute.xlu0 0
          %759 = vperm.xlu0 %758, %v756
          %v760 = vpop.permute.xlu0 %759
          %v762 = vmul.f32 %v671, %v760
          %763 = vst.msk [vmem:[#allocation2] sm:$0xff] %vm523, %v762
          %v764 = vsel %vm523, %v762, 0.0
          %765 = vadd.xlane.f32.xlu0 %v764
          %v766 = vpop.xlane.xlu0 %765
          %v767 = vmul.f32 %v766, %v681
          %v768 = vsub.f32 %v762, %v767
          %v770 = vsel %vm523, %v768, 0
          %772 = vmatpush.xpose.msra.mxu0 0.0
          %773 = vmatpush.xpose.msra.mxu0 0.0
          %774 = vmatpush.xpose.msra.mxu0 0.0
          %775 = vmatpush.xpose.msra.mxu0 0.0
          %776 = vmatpush.xpose.msra.mxu0 0.0
          %777 = vmatpush.xpose.msra.mxu0 0.0
          %778 = vmatpush.xpose.msra.mxu0 0.0
          %779 = vmatpush.xpose.msra.mxu0 0.0
          %780 = vmatpush.xpose.msra.mxu0 0.0
          %781 = vmatpush.xpose.msra.mxu0 0.0
          %782 = vmatpush.xpose.msra.mxu0 0.0
          %783 = vmatpush.xpose.msra.mxu0 0.0
          %784 = vmatpush.xpose.msra.mxu0 0.0
          %785 = vmatpush.xpose.msra.mxu0 0.0
          %786 = vmatpush.xpose.msra.mxu0 0.0
          %787 = vmatpush.xpose.msra.mxu0 %v770
          %788 = vmatmul.f32.gmra.mxu0 %v770
          %v789 = vpop.f32.mrf.mxu0
          %v790 = vadd.f32 0.0, %v789
          %791 = vdwg.mxu0
          %v792 = vmul.f32 %v768, %v768
          %v793 = vsel %vm523, %v792, 0.0
          %794 = vadd.xlane.f32.xlu0 %v793
          %v795 = vpop.xlane.xlu0 %794
          %v796 = vrsqrt.pop %v795
          %v797 = vmul.f32 %v796, %v795
          %v798 = vmul.f32 %v797, %v796
          %v799 = vmul.f32 0.5, %v798
          %v800 = vsub.f32 1.5, %v799
          %v801 = vmul.f32 %v796, %v800
          %v802 = vmul.f32 %v795, %v801
          %vm803 = vcmp.eq.f32.partialorder %v795, inf
          %v804 = vsel %vm803, %v795, %v802
          %vm805 = vcmp.eq.f32.partialorder %v795, 0.0
          %v806 = vand.u32 %v795, 2147483648
          %v807 = vsel %vm805, %v806, %v804
          %vm808 = vcmask 7168
          %v810 = vsel %vm808, %v807, 0
          %812 = vmatpush.xpose.msra.mxu0 0.0
          %813 = vmatpush.xpose.msra.mxu0 0.0
          %814 = vmatpush.xpose.msra.mxu0 0.0
          %815 = vmatpush.xpose.msra.mxu0 0.0
          %816 = vmatpush.xpose.msra.mxu0 0.0
          %817 = vmatpush.xpose.msra.mxu0 0.0
          %818 = vmatpush.xpose.msra.mxu0 0.0
          %819 = vmatpush.xpose.msra.mxu0 0.0
          %820 = vmatpush.xpose.msra.mxu0 0.0
          %821 = vmatpush.xpose.msra.mxu0 0.0
          %822 = vmatpush.xpose.msra.mxu0 0.0
          %823 = vmatpush.xpose.msra.mxu0 0.0
          %824 = vmatpush.xpose.msra.mxu0 0.0
          %825 = vmatpush.xpose.msra.mxu0 0.0
          %826 = vmatpush.xpose.msra.mxu0 0.0
          %827 = vmatpush.xpose.msra.mxu0 %v810
          %828 = vmatmul.f32.gmra.mxu0 %v810
          %v829 = vpop.f32.mrf.mxu0
          %v830 = vadd.f32 0.0, %v829
          %831 = vdwg.mxu0
          %v832 = vrcp.pop %v830
          %v833 = vmul.f32 %v830, %v832
          %v834 = vsub.f32 1.0, %v833
          %v835 = vmul.f32 %v832, %v834
          %v836 = vadd.f32 %v832, %v835
          %vm837 = vweird.f32 %v830
          %vm838 = vweird.f32 %v832
          %vm839 = vmor %vm837, %vm838
          %v840 = vsel %vm839, %v832, %v836
          %v841 = vand.u32 2147483647, %v830
          %vm842 = vcmp.eq.f32.partialorder %v841, 8.507059e+37
          %v843 = vand.u32 %v830, 2147483648
          %v844 = vor.u32 1.1754944e-38, %v843
          %v845 = vsel %vm842, %v844, %v840
          %v846 = vmul.f32 %v790, %v845
          %847 = vst.msk [vmem:[#allocation3] sm:$0xff] %vm684, %v846
          %v848 = vmul.f32 %v762, %v762
          %v849 = vsel %vm523, %v848, 0.0
          %850 = vadd.xlane.f32.xlu0 %v849
          %v851 = vpop.xlane.xlu0 %850
          %v852 = vrsqrt.pop %v851
          %v853 = vmul.f32 %v852, %v851
          %v854 = vmul.f32 %v853, %v852
          %v855 = vmul.f32 0.5, %v854
          %v856 = vsub.f32 1.5, %v855
          %v857 = vmul.f32 %v852, %v856
          %v858 = vmul.f32 %v851, %v857
          %vm859 = vcmp.eq.f32.partialorder %v851, inf
          %v860 = vsel %vm859, %v851, %v858
          %vm861 = vcmp.eq.f32.partialorder %v851, 0.0
          %v862 = vand.u32 %v851, 2147483648
          %v863 = vsel %vm861, %v862, %v860
          %v864 = vmax.f32 %v863, 1e-08
          %v865 = vrcp.pop %v864
          %v866 = vmul.f32 %v864, %v865
          %v867 = vsub.f32 1.0, %v866
          %v868 = vmul.f32 %v865, %v867
          %v869 = vadd.f32 %v865, %v868
          %vm870 = vweird.f32 %v864
          %vm871 = vweird.f32 %v865
          %vm872 = vmor %vm870, %vm871
          %v873 = vsel %vm872, %v865, %v869
          %v874 = vand.u32 2147483647, %v864
          %vm875 = vcmp.eq.f32.partialorder %v874, 8.507059e+37
          %v876 = vand.u32 %v864, 2147483648
          %v877 = vor.u32 1.1754944e-38, %v876
          %v878 = vsel %vm875, %v877, %v873
          %v879 = vmul.f32 %v762, %v878
          %v881 = vsel %vm523, %v879, 0
          %883 = vmatpush.xpose.msra.mxu0 0.0
          %884 = vmatpush.xpose.msra.mxu0 0.0
          %885 = vmatpush.xpose.msra.mxu0 0.0
          %886 = vmatpush.xpose.msra.mxu0 0.0
          %887 = vmatpush.xpose.msra.mxu0 0.0
          %888 = vmatpush.xpose.msra.mxu0 0.0
          %889 = vmatpush.xpose.msra.mxu0 0.0
          %890 = vmatpush.xpose.msra.mxu0 0.0
          %891 = vmatpush.xpose.msra.mxu0 0.0
          %892 = vmatpush.xpose.msra.mxu0 0.0
          %893 = vmatpush.xpose.msra.mxu0 0.0
          %894 = vmatpush.xpose.msra.mxu0 0.0
          %895 = vmatpush.xpose.msra.mxu0 0.0
          %896 = vmatpush.xpose.msra.mxu0 0.0
          %897 = vmatpush.xpose.msra.mxu0 0.0
          %898 = vmatpush.xpose.msra.mxu0 %v881
          %899 = vmatmul.f32.gmra.mxu0 %v881
          %v900 = vpop.f32.mrf.mxu0
          %v901 = vadd.f32 0.0, %v900
          %902 = vdwg.mxu0
          %903 = vst.msk [vmem:[#allocation4] sm:$0xff] %vm684, %v901
          %s904 = scalar_lea.vmem %s0, 8
          %v905 = vld [vmem:[%s904] sm:$0xff]
          %v906 = vsel %vm523, %v905, 0.0
          %v907 = vrot.slane %v906, 4
          %v908 = vadd.f32 %v906, %v907
          %v909 = vrot.slane %v908, 2
          %v910 = vadd.f32 %v908, %v909
          %v911 = vrot.slane %v910, 1
          %v912 = vadd.f32 %v910, %v911
          %v913 = vmul.f32 %v912, %v537
          %v914 = vld [vmem:[%s5] sm:$0x1f]
          %v916 = vsel %vm523, %v913, 0
          %v919 = vsel %vm523, %v914, 0
          %921 = vmatpush.xpose.msra.mxu0 0.0
          %922 = vmatpush.xpose.msra.mxu0 0.0
          %923 = vmatpush.xpose.msra.mxu0 0.0
          %924 = vmatpush.xpose.msra.mxu0 0.0
          %925 = vmatpush.xpose.msra.mxu0 0.0
          %926 = vmatpush.xpose.msra.mxu0 0.0
          %927 = vmatpush.xpose.msra.mxu0 0.0
          %928 = vmatpush.xpose.msra.mxu0 0.0
          %929 = vmatpush.xpose.msra.mxu0 0.0
          %930 = vmatpush.xpose.msra.mxu0 0.0
          %931 = vmatpush.xpose.msra.mxu0 0.0
          %932 = vmatpush.xpose.msra.mxu0 0.0
          %933 = vmatpush.xpose.msra.mxu0 0.0
          %934 = vmatpush.xpose.msra.mxu0 0.0
          %935 = vmatpush.xpose.msra.mxu0 0.0
          %936 = vmatpush.xpose.msra.mxu0 %v919
          %937 = vmatmul.f32.gmra.mxu0 %v916
          %v938 = vpop.f32.mrf.mxu0
          %v939 = vadd.f32 0.0, %v938
          %940 = vdwg.mxu0
          %v941 = vmul.f32 %v939, 0.125
          %v942 = vld [vmem:[%s1] sm:$0x1f]
          %v944 = vsel %vm568, %v941, 0
          %v947 = vsel %vm572, %v942, 0
          %949 = vmatpush.msra.mxu0 0.0
          %950 = vmatpush.msra.mxu0 0.0
          %951 = vmatpush.msra.mxu0 0.0
          %952 = vmatpush.msra.mxu0 0.0
          %953 = vmatpush.msra.mxu0 0.0
          %954 = vmatpush.msra.mxu0 0.0
          %955 = vmatpush.msra.mxu0 0.0
          %956 = vmatpush.msra.mxu0 0.0
          %957 = vmatpush.msra.mxu0 0.0
          %958 = vmatpush.msra.mxu0 0.0
          %959 = vmatpush.msra.mxu0 0.0
          %960 = vmatpush.msra.mxu0 0.0
          %961 = vmatpush.msra.mxu0 0.0
          %962 = vmatpush.msra.mxu0 0.0
          %963 = vmatpush.msra.mxu0 0.0
          %964 = vmatpush.msra.mxu0 %v947
          %965 = vmatmul.f32.gmra.mxu0 %v944
          %v966 = vpop.f32.mrf.mxu0
          %v967 = vadd.f32 0.0, %v966
          %968 = vdwg.mxu0
          %v969 = vmax.f32 %v967, 0.0
          %v970 = vld [vmem:[#allocation8] sm:$0x3]
          %v972 = vsel %vm598, %v969, 0
          %v975 = vsel %vm602, %v970, 0
          %977 = vmatpush.msra.mxu0 0.0
          %978 = vmatpush.msra.mxu0 0.0
          %979 = vmatpush.msra.mxu0 0.0
          %980 = vmatpush.msra.mxu0 0.0
          %981 = vmatpush.msra.mxu0 0.0
          %982 = vmatpush.msra.mxu0 0.0
          %983 = vmatpush.msra.mxu0 0.0
          %984 = vmatpush.msra.mxu0 0.0
          %985 = vmatpush.msra.mxu0 0.0
          %986 = vmatpush.msra.mxu0 0.0
          %987 = vmatpush.msra.mxu0 0.0
          %988 = vmatpush.msra.mxu0 0.0
          %989 = vmatpush.msra.mxu0 0.0
          %990 = vmatpush.msra.mxu0 0.0
          %991 = vmatpush.msra.mxu0 0.0
          %992 = vmatpush.msra.mxu0 %v975
          %993 = vmatmul.f32.gmra.mxu0 %v972
          %v994 = vpop.f32.mrf.mxu0
          %v995 = vadd.f32 0.0, %v994
          %996 = vdwg.mxu0
          %v997 = vxor.u32 %v995, 2147483648
          %v998 = vmul.f32 %v997, 1.442695
          %v999 = vpow.pop %v998
          %v1000 = vadd.f32 %v999, 1.0
          %v1001 = vrcp.pop %v1000
          %v1002 = vmul.f32 %v1000, %v1001
          %v1003 = vsub.f32 1.0, %v1002
          %v1004 = vmul.f32 %v1001, %v1003
          %v1005 = vadd.f32 %v1001, %v1004
          %vm1006 = vweird.f32 %v1000
          %vm1007 = vweird.f32 %v1001
          %vm1008 = vmor %vm1006, %vm1007
          %v1009 = vsel %vm1008, %v1001, %v1005
          %v1010 = vand.u32 2147483647, %v1000
          %vm1011 = vcmp.eq.f32.partialorder %v1010, 8.507059e+37
          %v1012 = vand.u32 %v1000, 2147483648
          %v1013 = vor.u32 1.1754944e-38, %v1012
          %v1014 = vsel %vm1011, %v1013, %v1009
          %v1015 = vmul.f32 1.0, %v1014
          %v1017 = vsel %vm568, %v1015, 0
          %v1019 = vsel %vm572, %v914, 0
          %1021 = vmatpush.msra.mxu0 0.0
          %1022 = vmatpush.msra.mxu0 0.0
          %1023 = vmatpush.msra.mxu0 0.0
          %1024 = vmatpush.msra.mxu0 0.0
          %1025 = vmatpush.msra.mxu0 0.0
          %1026 = vmatpush.msra.mxu0 0.0
          %1027 = vmatpush.msra.mxu0 0.0
          %1028 = vmatpush.msra.mxu0 0.0
          %1029 = vmatpush.msra.mxu0 0.0
          %1030 = vmatpush.msra.mxu0 0.0
          %1031 = vmatpush.msra.mxu0 0.0
          %1032 = vmatpush.msra.mxu0 0.0
          %1033 = vmatpush.msra.mxu0 0.0
          %1034 = vmatpush.msra.mxu0 0.0
          %1035 = vmatpush.msra.mxu0 0.0
          %1036 = vmatpush.msra.mxu0 %v1019
          %1037 = vmatmul.f32.gmra.mxu0 %v1017
          %v1038 = vpop.f32.mrf.mxu0
          %v1039 = vadd.f32 0.0, %v1038
          %1040 = vdwg.mxu0
          %v1041 = vperm.slane %v1039, 0
          %v1042 = vmul.f32 %v905, %v1041
          %v1043 = vsel %vm523, %v1042, 0.0
          %1044 = vadd.xlane.f32.xlu0 %v1043
          %v1045 = vpop.xlane.xlu0 %1044
          %v1046 = vmul.f32 %v1045, %v681
          %v1047 = vld [vmem:[#allocation10] sm:$0xf]
          %v1049 = vsel %vm684, %v1047, 0
          %1051 = vmatpush.msra.mxu0 0.0
          %1052 = vmatpush.msra.mxu0 0.0
          %1053 = vmatpush.msra.mxu0 0.0
          %1054 = vmatpush.msra.mxu0 0.0
          %1055 = vmatpush.msra.mxu0 0.0
          %1056 = vmatpush.msra.mxu0 0.0
          %1057 = vmatpush.msra.mxu0 0.0
          %1058 = vmatpush.msra.mxu0 0.0
          %1059 = vmatpush.msra.mxu0 0.0
          %1060 = vmatpush.msra.mxu0 0.0
          %1061 = vmatpush.msra.mxu0 0.0
          %1062 = vmatpush.msra.mxu0 0.0
          %1063 = vmatpush.msra.mxu0 0.0
          %1064 = vmatpush.msra.mxu0 0.0
          %1065 = vmatpush.msra.mxu0 0.0
          %1066 = vmatpush.msra.mxu0 %v1046
          %1067 = vmatmul.f32.gmra.mxu0 %v1049
          %v1068 = vpop.f32.mrf.mxu0
          %v1069 = vadd.f32 0.0, %v1068
          %1070 = vdwg.mxu0
          %v1071 = vmax.f32 %v1069, 0.0
          %v1072 = vld [vmem:[%s4] sm:$0xff]
          %v1074 = vsel %vm710, %v1072, 0
          %v1077 = vsel %vm714, %v1071, 0
          %1079 = vmatpush.msra.mxu0 0.0
          %1080 = vmatpush.msra.mxu0 0.0
          %1081 = vmatpush.msra.mxu0 0.0
          %1082 = vmatpush.msra.mxu0 0.0
          %1083 = vmatpush.msra.mxu0 0.0
          %1084 = vmatpush.msra.mxu0 0.0
          %1085 = vmatpush.msra.mxu0 0.0
          %1086 = vmatpush.msra.mxu0 0.0
          %1087 = vmatpush.msra.mxu0 0.0
          %1088 = vmatpush.msra.mxu0 0.0
          %1089 = vmatpush.msra.mxu0 0.0
          %1090 = vmatpush.msra.mxu0 0.0
          %1091 = vmatpush.msra.mxu0 0.0
          %1092 = vmatpush.msra.mxu0 0.0
          %1093 = vmatpush.msra.mxu0 0.0
          %1094 = vmatpush.msra.mxu0 %v1077
          %1095 = vmatmul.f32.gmra.mxu0 %v1074
          %v1096 = vpop.f32.mrf.mxu0
          %v1097 = vadd.f32 0.0, %v1096
          %1098 = vdwg.mxu0
          %v1099 = vxor.u32 %v1097, 2147483648
          %v1100 = vmul.f32 %v1099, 1.442695
          %v1101 = vpow.pop %v1100
          %v1102 = vadd.f32 %v1101, 1.0
          %v1103 = vrcp.pop %v1102
          %v1104 = vmul.f32 %v1102, %v1103
          %v1105 = vsub.f32 1.0, %v1104
          %v1106 = vmul.f32 %v1103, %v1105
          %v1107 = vadd.f32 %v1103, %v1106
          %vm1108 = vweird.f32 %v1102
          %vm1109 = vweird.f32 %v1103
          %vm1110 = vmor %vm1108, %vm1109
          %v1111 = vsel %vm1110, %v1103, %v1107
          %v1112 = vand.u32 2147483647, %v1102
          %vm1113 = vcmp.eq.f32.partialorder %v1112, 8.507059e+37
          %v1114 = vand.u32 %v1102, 2147483648
          %v1115 = vor.u32 1.1754944e-38, %v1114
          %v1116 = vsel %vm1113, %v1115, %v1111
          %v1117 = vmul.f32 1.0, %v1116
          %1119 = vset.pattern.permute.xlu0 0
          %1120 = vperm.xlu0 %1119, %v1117
          %v1121 = vpop.permute.xlu0 %1120
          %v1123 = vmul.f32 %v1042, %v1121
          %s1124 = scalar_lea.vmem [#allocation2], 8
          %1125 = vst.msk [vmem:[%s1124] sm:$0xff] %vm523, %v1123
          %v1126 = vsel %vm523, %v1123, 0.0
          %1127 = vadd.xlane.f32.xlu0 %v1126
          %v1128 = vpop.xlane.xlu0 %1127
          %v1129 = vmul.f32 %v1128, %v681
          %v1130 = vsub.f32 %v1123, %v1129
          %v1132 = vsel %vm523, %v1130, 0
          %1134 = vmatpush.xpose.msra.mxu0 0.0
          %1135 = vmatpush.xpose.msra.mxu0 0.0
          %1136 = vmatpush.xpose.msra.mxu0 0.0
          %1137 = vmatpush.xpose.msra.mxu0 0.0
          %1138 = vmatpush.xpose.msra.mxu0 0.0
          %1139 = vmatpush.xpose.msra.mxu0 0.0
          %1140 = vmatpush.xpose.msra.mxu0 0.0
          %1141 = vmatpush.xpose.msra.mxu0 0.0
          %1142 = vmatpush.xpose.msra.mxu0 0.0
          %1143 = vmatpush.xpose.msra.mxu0 0.0
          %1144 = vmatpush.xpose.msra.mxu0 0.0
          %1145 = vmatpush.xpose.msra.mxu0 0.0
          %1146 = vmatpush.xpose.msra.mxu0 0.0
          %1147 = vmatpush.xpose.msra.mxu0 0.0
          %1148 = vmatpush.xpose.msra.mxu0 0.0
          %1149 = vmatpush.xpose.msra.mxu0 %v1132
          %1150 = vmatmul.f32.gmra.mxu0 %v1132
          %v1151 = vpop.f32.mrf.mxu0
          %v1152 = vadd.f32 0.0, %v1151
          %1153 = vdwg.mxu0
          %v1154 = vmul.f32 %v1130, %v1130
          %v1155 = vsel %vm523, %v1154, 0.0
          %1156 = vadd.xlane.f32.xlu0 %v1155
          %v1157 = vpop.xlane.xlu0 %1156
          %v1158 = vrsqrt.pop %v1157
          %v1159 = vmul.f32 %v1158, %v1157
          %v1160 = vmul.f32 %v1159, %v1158
          %v1161 = vmul.f32 0.5, %v1160
          %v1162 = vsub.f32 1.5, %v1161
          %v1163 = vmul.f32 %v1158, %v1162
          %v1164 = vmul.f32 %v1157, %v1163
          %vm1165 = vcmp.eq.f32.partialorder %v1157, inf
          %v1166 = vsel %vm1165, %v1157, %v1164
          %vm1167 = vcmp.eq.f32.partialorder %v1157, 0.0
          %v1168 = vand.u32 %v1157, 2147483648
          %v1169 = vsel %vm1167, %v1168, %v1166
          %v1171 = vsel %vm808, %v1169, 0
          %1173 = vmatpush.xpose.msra.mxu0 0.0
          %1174 = vmatpush.xpose.msra.mxu0 0.0
          %1175 = vmatpush.xpose.msra.mxu0 0.0
          %1176 = vmatpush.xpose.msra.mxu0 0.0
          %1177 = vmatpush.xpose.msra.mxu0 0.0
          %1178 = vmatpush.xpose.msra.mxu0 0.0
          %1179 = vmatpush.xpose.msra.mxu0 0.0
          %1180 = vmatpush.xpose.msra.mxu0 0.0
          %1181 = vmatpush.xpose.msra.mxu0 0.0
          %1182 = vmatpush.xpose.msra.mxu0 0.0
          %1183 = vmatpush.xpose.msra.mxu0 0.0
          %1184 = vmatpush.xpose.msra.mxu0 0.0
          %1185 = vmatpush.xpose.msra.mxu0 0.0
          %1186 = vmatpush.xpose.msra.mxu0 0.0
          %1187 = vmatpush.xpose.msra.mxu0 0.0
          %1188 = vmatpush.xpose.msra.mxu0 %v1171
          %1189 = vmatmul.f32.gmra.mxu0 %v1171
          %v1190 = vpop.f32.mrf.mxu0
          %v1191 = vadd.f32 0.0, %v1190
          %1192 = vdwg.mxu0
          %v1193 = vrcp.pop %v1191
          %v1194 = vmul.f32 %v1191, %v1193
          %v1195 = vsub.f32 1.0, %v1194
          %v1196 = vmul.f32 %v1193, %v1195
          %v1197 = vadd.f32 %v1193, %v1196
          %vm1198 = vweird.f32 %v1191
          %vm1199 = vweird.f32 %v1193
          %vm1200 = vmor %vm1198, %vm1199
          %v1201 = vsel %vm1200, %v1193, %v1197
          %v1202 = vand.u32 2147483647, %v1191
          %vm1203 = vcmp.eq.f32.partialorder %v1202, 8.507059e+37
          %v1204 = vand.u32 %v1191, 2147483648
          %v1205 = vor.u32 1.1754944e-38, %v1204
          %v1206 = vsel %vm1203, %v1205, %v1201
          %v1207 = vmul.f32 %v1152, %v1206
          %s1208 = scalar_lea.vmem [#allocation3], 8
          %1209 = vst.msk [vmem:[%s1208] sm:$0xff] %vm684, %v1207
          %v1210 = vmul.f32 %v1123, %v1123
          %v1211 = vsel %vm523, %v1210, 0.0
          %1212 = vadd.xlane.f32.xlu0 %v1211
          %v1213 = vpop.xlane.xlu0 %1212
          %v1214 = vrsqrt.pop %v1213
          %v1215 = vmul.f32 %v1214, %v1213
          %v1216 = vmul.f32 %v1215, %v1214
          %v1217 = vmul.f32 0.5, %v1216
          %v1218 = vsub.f32 1.5, %v1217
          %v1219 = vmul.f32 %v1214, %v1218
          %v1220 = vmul.f32 %v1213, %v1219
          %vm1221 = vcmp.eq.f32.partialorder %v1213, inf
          %v1222 = vsel %vm1221, %v1213, %v1220
          %vm1223 = vcmp.eq.f32.partialorder %v1213, 0.0
          %v1224 = vand.u32 %v1213, 2147483648
          %v1225 = vsel %vm1223, %v1224, %v1222
          %v1226 = vmax.f32 %v1225, 1e-08
          %v1227 = vrcp.pop %v1226
          %v1228 = vmul.f32 %v1226, %v1227
          %v1229 = vsub.f32 1.0, %v1228
          %v1230 = vmul.f32 %v1227, %v1229
          %v1231 = vadd.f32 %v1227, %v1230
          %vm1232 = vweird.f32 %v1226
          %vm1233 = vweird.f32 %v1227
          %vm1234 = vmor %vm1232, %vm1233
          %v1235 = vsel %vm1234, %v1227, %v1231
          %v1236 = vand.u32 2147483647, %v1226
          %vm1237 = vcmp.eq.f32.partialorder %v1236, 8.507059e+37
          %v1238 = vand.u32 %v1226, 2147483648
          %v1239 = vor.u32 1.1754944e-38, %v1238
          %v1240 = vsel %vm1237, %v1239, %v1235
          %v1241 = vmul.f32 %v1123, %v1240
          %v1243 = vsel %vm523, %v1241, 0
          %1245 = vmatpush.xpose.msra.mxu0 0.0
          %1246 = vmatpush.xpose.msra.mxu0 0.0
          %1247 = vmatpush.xpose.msra.mxu0 0.0
          %1248 = vmatpush.xpose.msra.mxu0 0.0
          %1249 = vmatpush.xpose.msra.mxu0 0.0
          %1250 = vmatpush.xpose.msra.mxu0 0.0
          %1251 = vmatpush.xpose.msra.mxu0 0.0
          %1252 = vmatpush.xpose.msra.mxu0 0.0
          %1253 = vmatpush.xpose.msra.mxu0 0.0
          %1254 = vmatpush.xpose.msra.mxu0 0.0
          %1255 = vmatpush.xpose.msra.mxu0 0.0
          %1256 = vmatpush.xpose.msra.mxu0 0.0
          %1257 = vmatpush.xpose.msra.mxu0 0.0
          %1258 = vmatpush.xpose.msra.mxu0 0.0
          %1259 = vmatpush.xpose.msra.mxu0 0.0
          %1260 = vmatpush.xpose.msra.mxu0 %v1243
          %1261 = vmatmul.f32.gmra.mxu0 %v1243
          %v1262 = vpop.f32.mrf.mxu0
          %v1263 = vadd.f32 0.0, %v1262
          %1264 = vdwg.mxu0
          %s1265 = scalar_lea.vmem [#allocation4], 8
          %1266 = vst.msk [vmem:[%s1265] sm:$0xff] %vm684, %v1263
          %v1267 = vld [vmem:[#allocation2] sm:$0xff]
          %v1268 = vld [vmem:[#allocation2 + $0x8] sm:$0xff]
          %v1269 = vsel %vm523, %v1267, 0.0
          %v1270 = vsel %vm523, %v1268, 0.0
          %v1271 = vadd.f32 %v1269, %v1270
          %v1272 = vrcp.pop 2.0
          %v1273 = vmul.f32 2.0, %v1272
          %v1274 = vsub.f32 1.0, %v1273
          %v1275 = vmul.f32 %v1272, %v1274
          %v1276 = vadd.f32 %v1272, %v1275
          %vm1277 = vweird.f32 %v1272
          %v1278 = vsel %vm1277, %v1272, %v1276
          %v1279 = vmul.f32 %v1271, %v1278
          %v1280 = vsel %vm523, %v1279, 0.0
          %v1281 = vrot.slane %v1280, 4
          %v1282 = vadd.f32 %v1280, %v1281
          %v1283 = vrot.slane %v1282, 2
          %v1284 = vadd.f32 %v1282, %v1283
          %v1285 = vrot.slane %v1284, 1
          %v1286 = vadd.f32 %v1284, %v1285
          %v1287 = vmul.f32 %v1286, %v537
          %v1288 = vsub.f32 %v1267, %v1287
          %v1289 = vsub.f32 %v1268, %v1287
          %v1290 = vmul.f32 %v1288, %v1288
          %v1291 = vmul.f32 %v1289, %v1289
          %v1292 = vsel %vm523, %v1290, 0.0
          %v1293 = vsel %vm523, %v1291, 0.0
          %v1294 = vadd.f32 %v1292, %v1293
          %v1295 = vmul.f32 %v1294, %v1278
          %v1296 = vsel %vm523, %v1295, 0.0
          %v1297 = vrot.slane %v1296, 4
          %v1298 = vadd.f32 %v1296, %v1297
          %v1299 = vrot.slane %v1298, 2
          %v1300 = vadd.f32 %v1298, %v1299
          %v1301 = vrot.slane %v1300, 1
          %v1302 = vadd.f32 %v1300, %v1301
          %v1303 = vmul.f32 %v1302, %v537
          %vm1304 = vcmask 319488
          %1305 = vst.msk [vmem:[#allocation5] sm:$0x1] %vm1304, %v1287
          %v1306 = vadd.f32 %v1303, 1e-05
          %v1307 = vrsqrt.pop %v1306
          %v1308 = vmul.f32 %v1307, %v1306
          %v1309 = vmul.f32 %v1308, %v1307
          %v1310 = vmul.f32 0.5, %v1309
          %v1311 = vsub.f32 1.5, %v1310
          %v1312 = vmul.f32 %v1307, %v1311
          %vm1313 = vweird.f32 %v1306
          %vm1314 = vweird.f32 %v1307
          %vm1315 = vmor %vm1313, %vm1314
          %v1316 = vsel %vm1315, %v1307, %v1312
          %1317 = vst.msk [vmem:[#allocation6] sm:$0x1] %vm1304, %v1316
        $region84: #{magcn_forward.2} parent=67 // pred_fallthru
          _
        %v1318 = vlaneseq
        %v1319 = vshrl.u32 %v1318, 7
        %v1320 = vlaneseq
        %v1321 = vand.u32 %v1320, 127
        %vm1322 = vcmp.ne.s32.totalorder %v1319, %v1321
        %v1323 = vsel %vm1322, 1, 0
        %v1324 = vcvt.s32.f32 %v1323
        %s1325 = scalar_select %p518, 1, 0
        %s1326 = scvt.s32.f32 %s1325
        %p1327 = scmp.eq.s32.totalorder %s25, 1
        %s1328 = scalar_select %p1327, 1, 0
        %s1329 = scvt.s32.f32 %s1328
        %s1330 = ssub.f32 1.0, %s1326
        %s1331 = ssub.f32 %s1330, %s1329
        %v1332 = vld [vmem:[#allocation3] sm:$0xff]
        %v1333 = vld [vmem:[#allocation3 + $0x8] sm:$0xff]
        %v1334 = vstv %s1326
        %v1335 = vmul.f32 %v1334, %v1332
        %v1336 = vmul.f32 %v1334, %v1333
        %v1337 = vld [vmem:[#allocation4] sm:$0xff]
        %v1338 = vld [vmem:[#allocation4 + $0x8] sm:$0xff]
        %v1339 = vstv %s1329
        %v1340 = vmul.f32 %v1339, %v1337
        %v1341 = vmul.f32 %v1339, %v1338
        %v1342 = vadd.f32 %v1335, %v1340
        %v1343 = vadd.f32 %v1336, %v1341
        %v1344 = vld [vmem:[#allocation12] sm:$0xff]
        %v1345 = vstv %s1331
        %v1346 = vmul.f32 %v1345, %v1344
        %v1347 = vadd.f32 %v1342, %v1346
        %v1348 = vadd.f32 %v1343, %v1346
        %v1349 = vld [vmem:[%s498] sm:$0xff]
        %v1350 = vld [vmem:[%s502] sm:$0xff]
        %vm1351 = vcmask 64512
        %v1353 = vsel %vm1351, %v1347, 0
        %1355 = vmatpush.msra.mxu0 0.0
        %1356 = vmatpush.msra.mxu0 0.0
        %1357 = vmatpush.msra.mxu0 0.0
        %1358 = vmatpush.msra.mxu0 0.0
        %1359 = vmatpush.msra.mxu0 0.0
        %1360 = vmatpush.msra.mxu0 0.0
        %1361 = vmatpush.msra.mxu0 0.0
        %1362 = vmatpush.msra.mxu0 0.0
        %1363 = vmatpush.msra.mxu0 0.0
        %1364 = vmatpush.msra.mxu0 0.0
        %1365 = vmatpush.msra.mxu0 0.0
        %1366 = vmatpush.msra.mxu0 0.0
        %1367 = vmatpush.msra.mxu0 0.0
        %1368 = vmatpush.msra.mxu0 0.0
        %1369 = vmatpush.msra.mxu0 0.0
        %1370 = vmatpush.msra.mxu0 %v1349
        %1371 = vmatmul.f32.gmra.mxu0 %v1353
        %v1372 = vpop.f32.mrf.mxu0
        %v1373 = vadd.f32 0.0, %v1372
        %1374 = vdwg.mxu0
        %v1376 = vsel %vm1351, %v1348, 0
        %1378 = vmatpush.msra.mxu0 0.0
        %1379 = vmatpush.msra.mxu0 0.0
        %1380 = vmatpush.msra.mxu0 0.0
        %1381 = vmatpush.msra.mxu0 0.0
        %1382 = vmatpush.msra.mxu0 0.0
        %1383 = vmatpush.msra.mxu0 0.0
        %1384 = vmatpush.msra.mxu0 0.0
        %1385 = vmatpush.msra.mxu0 0.0
        %1386 = vmatpush.msra.mxu0 0.0
        %1387 = vmatpush.msra.mxu0 0.0
        %1388 = vmatpush.msra.mxu0 0.0
        %1389 = vmatpush.msra.mxu0 0.0
        %1390 = vmatpush.msra.mxu0 0.0
        %1391 = vmatpush.msra.mxu0 0.0
        %1392 = vmatpush.msra.mxu0 0.0
        %1393 = vmatpush.msra.mxu0 %v1349
        %1394 = vmatmul.f32.gmra.mxu0 %v1376
        %v1395 = vpop.f32.mrf.mxu0
        %v1396 = vadd.f32 0.0, %v1395
        %1397 = vdwg.mxu0
        %v1398 = vmax.f32 %v1373, 0.0
        %v1399 = vmax.f32 %v1396, 0.0
        %v1400 = vmul.f32 %v1398, %v1324
        %v1401 = vmul.f32 %v1399, %v1324
        %v1403 = vsel %vm1351, %v1350, 0
        %1405 = vmatpush.msra.mxu0 0.0
        %1406 = vmatpush.msra.mxu0 0.0
        %1407 = vmatpush.msra.mxu0 0.0
        %1408 = vmatpush.msra.mxu0 0.0
        %1409 = vmatpush.msra.mxu0 0.0
        %1410 = vmatpush.msra.mxu0 0.0
        %1411 = vmatpush.msra.mxu0 0.0
        %1412 = vmatpush.msra.mxu0 0.0
        %1413 = vmatpush.msra.mxu0 0.0
        %1414 = vmatpush.msra.mxu0 0.0
        %1415 = vmatpush.msra.mxu0 0.0
        %1416 = vmatpush.msra.mxu0 0.0
        %1417 = vmatpush.msra.mxu0 0.0
        %1418 = vmatpush.msra.mxu0 0.0
        %1419 = vmatpush.msra.mxu0 0.0
        %1420 = vmatpush.msra.mxu0 %v1347
        %1421 = vmatmul.f32.gmra.mxu0 %v1403
        %v1422 = vpop.f32.mrf.mxu0
        %v1423 = vadd.f32 0.0, %v1422
        %1424 = vdwg.mxu0
        %1425 = vmatpush.msra.mxu0 0.0
        %1426 = vmatpush.msra.mxu0 0.0
        %1427 = vmatpush.msra.mxu0 0.0
        %1428 = vmatpush.msra.mxu0 0.0
        %1429 = vmatpush.msra.mxu0 0.0
        %1430 = vmatpush.msra.mxu0 0.0
        %1431 = vmatpush.msra.mxu0 0.0
        %1432 = vmatpush.msra.mxu0 0.0
        %1433 = vmatpush.msra.mxu0 0.0
        %1434 = vmatpush.msra.mxu0 0.0
        %1435 = vmatpush.msra.mxu0 0.0
        %1436 = vmatpush.msra.mxu0 0.0
        %1437 = vmatpush.msra.mxu0 0.0
        %1438 = vmatpush.msra.mxu0 0.0
        %1439 = vmatpush.msra.mxu0 0.0
        %1440 = vmatpush.msra.mxu0 %v1348
        %1441 = vmatmul.f32.gmra.mxu0 %v1403
        %v1442 = vpop.f32.mrf.mxu0
        %v1443 = vadd.f32 0.0, %v1442
        %1444 = vdwg.mxu0
        %v1445 = vmax.f32 %v1423, 0.0
        %v1446 = vmax.f32 %v1443, 0.0
        %v1447 = vmul.f32 %v1445, %v1324
        %v1448 = vmul.f32 %v1446, %v1324
        %v1449 = vadd.f32 %v1400, %v1447
        %v1450 = vadd.f32 %v1401, %v1448
        %v1451 = vsel %vm1351, %v1449, 0.0
        %1452 = vadd.xlane.f32.xlu0 %v1451
        %v1453 = vpop.xlane.xlu0 %1452
        %v1454 = vsel %vm1351, %v1450, 0.0
        %1455 = vadd.xlane.f32.xlu0 %v1454
        %v1456 = vpop.xlane.xlu0 %1455
        %v1457 = vadd.f32 %v1453, 1e-10
        %v1458 = vadd.f32 %v1456, 1e-10
        %v1459 = vrsqrt.pop %v1457
        %v1460 = vmul.f32 %v1459, %v1457
        %v1461 = vmul.f32 %v1460, %v1459
        %v1462 = vmul.f32 0.5, %v1461
        %v1463 = vsub.f32 1.5, %v1462
        %v1464 = vmul.f32 %v1459, %v1463
        %vm1465 = vweird.f32 %v1457
        %vm1466 = vweird.f32 %v1459
        %vm1467 = vmor %vm1465, %vm1466
        %v1468 = vsel %vm1467, %v1459, %v1464
        %v1469 = vrsqrt.pop %v1458
        %v1470 = vmul.f32 %v1469, %v1458
        %v1471 = vmul.f32 %v1470, %v1469
        %v1472 = vmul.f32 0.5, %v1471
        %v1473 = vsub.f32 1.5, %v1472
        %v1474 = vmul.f32 %v1469, %v1473
        %vm1475 = vweird.f32 %v1458
        %vm1476 = vweird.f32 %v1469
        %vm1477 = vmor %vm1475, %vm1476
        %v1478 = vsel %vm1477, %v1469, %v1474
        %v1479 = vrot.slane %v1451, 4
        %v1480 = vadd.f32 %v1451, %v1479
        %v1481 = vrot.slane %v1480, 2
        %v1482 = vadd.f32 %v1480, %v1481
        %v1483 = vrot.slane %v1482, 1
        %v1484 = vadd.f32 %v1482, %v1483
        %v1485 = vrot.slane %v1454, 4
        %v1486 = vadd.f32 %v1454, %v1485
        %v1487 = vrot.slane %v1486, 2
        %v1488 = vadd.f32 %v1486, %v1487
        %v1489 = vrot.slane %v1488, 1
        %v1490 = vadd.f32 %v1488, %v1489
        %v1491 = vadd.f32 %v1484, 1e-10
        %v1492 = vadd.f32 %v1490, 1e-10
        %v1493 = vrsqrt.pop %v1491
        %v1494 = vmul.f32 %v1493, %v1491
        %v1495 = vmul.f32 %v1494, %v1493
        %v1496 = vmul.f32 0.5, %v1495
        %v1497 = vsub.f32 1.5, %v1496
        %v1498 = vmul.f32 %v1493, %v1497
        %vm1499 = vweird.f32 %v1491
        %vm1500 = vweird.f32 %v1493
        %vm1501 = vmor %vm1499, %vm1500
        %v1502 = vsel %vm1501, %v1493, %v1498
        %v1503 = vrsqrt.pop %v1492
        %v1504 = vmul.f32 %v1503, %v1492
        %v1505 = vmul.f32 %v1504, %v1503
        %v1506 = vmul.f32 0.5, %v1505
        %v1507 = vsub.f32 1.5, %v1506
        %v1508 = vmul.f32 %v1503, %v1507
        %vm1509 = vweird.f32 %v1492
        %vm1510 = vweird.f32 %v1503
        %vm1511 = vmor %vm1509, %vm1510
        %v1512 = vsel %vm1511, %v1503, %v1508
        %v1513 = vmul.f32 %v1468, %v1449
        %v1514 = vmul.f32 %v1478, %v1450
        %v1515 = vmul.f32 %v1513, %v1502
        %v1516 = vmul.f32 %v1514, %v1512
        %v1517 = vsub.f32 0.0, %v1515
        %v1518 = vsub.f32 0.0, %v1516
        %v1519 = vld [vmem:[%s505] sm:$0x1]
        %v1520 = vld [vmem:[#allocation6] sm:$0x1]
        %v1521 = vmul.f32 %v1519, %v1520
        %v1522 = vld [vmem:[%s508] sm:$0x1]
        %v1523 = vld [vmem:[#allocation5] sm:$0x1]
        %v1524 = vmul.f32 %v1523, %v1521
        %v1525 = vsub.f32 %v1522, %v1524
        %v1526 = vld [vmem:[#allocation2] sm:$0xff]
        %v1527 = vld [vmem:[#allocation2 + $0x8] sm:$0xff]
        %v1529 = vperm.slane %v1521, 0
        %v1531 = vmul.f32 %v1526, %v1529
        %v1532 = vmul.f32 %v1527, %v1529
        %v1534 = vperm.slane %v1525, 0
        %v1536 = vadd.f32 %v1531, %v1534
        %v1537 = vadd.f32 %v1532, %v1534
        %vm1538 = vcmask 326656
        %1539 = vst.msk [vmem:[#allocation7] sm:$0xff] %vm1538, %v1536
        %1540 = vst.msk [vmem:[#allocation7 + $0x8] sm:$0xff] %vm1538, %v1537
        %v1542 = vsel %vm1351, %v1517, 0
        %1544 = vmatpush.msra.mxu0 0.0
        %1545 = vmatpush.msra.mxu0 0.0
        %1546 = vmatpush.msra.mxu0 0.0
        %1547 = vmatpush.msra.mxu0 0.0
        %1548 = vmatpush.msra.mxu0 0.0
        %1549 = vmatpush.msra.mxu0 0.0
        %1550 = vmatpush.msra.mxu0 0.0
        %1551 = vmatpush.msra.mxu0 0.0
        %1552 = vmatpush.msra.mxu0 0.0
        %1553 = vmatpush.msra.mxu0 0.0
        %1554 = vmatpush.msra.mxu0 0.0
        %1555 = vmatpush.msra.mxu0 0.0
        %1556 = vmatpush.msra.mxu0 0.0
        %1557 = vmatpush.msra.mxu0 0.0
        %1558 = vmatpush.msra.mxu0 0.0
        %1559 = vmatpush.msra.mxu0 %v1536
        %1560 = vmatmul.f32.gmra.mxu0 %v1542
        %v1561 = vpop.f32.mrf.mxu0
        %v1562 = vadd.f32 0.0, %v1561
        %1563 = vdwg.mxu0
        %v1565 = vsel %vm1351, %v1518, 0
        %1567 = vmatpush.msra.mxu0 0.0
        %1568 = vmatpush.msra.mxu0 0.0
        %1569 = vmatpush.msra.mxu0 0.0
        %1570 = vmatpush.msra.mxu0 0.0
        %1571 = vmatpush.msra.mxu0 0.0
        %1572 = vmatpush.msra.mxu0 0.0
        %1573 = vmatpush.msra.mxu0 0.0
        %1574 = vmatpush.msra.mxu0 0.0
        %1575 = vmatpush.msra.mxu0 0.0
        %1576 = vmatpush.msra.mxu0 0.0
        %1577 = vmatpush.msra.mxu0 0.0
        %1578 = vmatpush.msra.mxu0 0.0
        %1579 = vmatpush.msra.mxu0 0.0
        %1580 = vmatpush.msra.mxu0 0.0
        %1581 = vmatpush.msra.mxu0 0.0
        %1582 = vmatpush.msra.mxu0 %v1537
        %1583 = vmatmul.f32.gmra.mxu0 %v1565
        %v1584 = vpop.f32.mrf.mxu0
        %v1585 = vadd.f32 0.0, %v1584
        %1586 = vdwg.mxu0
        %1588 = vrot.lane.b32.xlu0 %v1562, 40
        %v1589 = vpop.permute.xlu0 %1588
        %vm1591 = vcmask 654656
        %1592 = vst.msk [vmem:[#allocation7] sm:$0xff] %vm1591, %v1589
        %1594 = vrot.lane.b32.xlu0 %v1585, 40
        %v1595 = vpop.permute.xlu0 %1594
        %1597 = vst.msk [vmem:[#allocation7 + $0x8] sm:$0xff] %vm1591, %v1595
        %1598 = vmatpush.msra.mxu0 0.0
        %1599 = vmatpush.msra.mxu0 0.0
        %1600 = vmatpush.msra.mxu0 0.0
        %1601 = vmatpush.msra.mxu0 0.0
        %1602 = vmatpush.msra.mxu0 0.0
        %1603 = vmatpush.msra.mxu0 0.0
        %1604 = vmatpush.msra.mxu0 0.0
        %1605 = vmatpush.msra.mxu0 0.0
        %1606 = vmatpush.msra.mxu0 0.0
        %1607 = vmatpush.msra.mxu0 0.0
        %1608 = vmatpush.msra.mxu0 0.0
        %1609 = vmatpush.msra.mxu0 0.0
        %1610 = vmatpush.msra.mxu0 0.0
        %1611 = vmatpush.msra.mxu0 0.0
        %1612 = vmatpush.msra.mxu0 0.0
        %1613 = vmatpush.msra.mxu0 %v1562
        %1614 = vmatmul.f32.gmra.mxu0 %v1542
        %v1615 = vpop.f32.mrf.mxu0
        %v1616 = vadd.f32 0.0, %v1615
        %1617 = vdwg.mxu0
        %1618 = vmatpush.msra.mxu0 0.0
        %1619 = vmatpush.msra.mxu0 0.0
        %1620 = vmatpush.msra.mxu0 0.0
        %1621 = vmatpush.msra.mxu0 0.0
        %1622 = vmatpush.msra.mxu0 0.0
        %1623 = vmatpush.msra.mxu0 0.0
        %1624 = vmatpush.msra.mxu0 0.0
        %1625 = vmatpush.msra.mxu0 0.0
        %1626 = vmatpush.msra.mxu0 0.0
        %1627 = vmatpush.msra.mxu0 0.0
        %1628 = vmatpush.msra.mxu0 0.0
        %1629 = vmatpush.msra.mxu0 0.0
        %1630 = vmatpush.msra.mxu0 0.0
        %1631 = vmatpush.msra.mxu0 0.0
        %1632 = vmatpush.msra.mxu0 0.0
        %1633 = vmatpush.msra.mxu0 %v1585
        %1634 = vmatmul.f32.gmra.mxu0 %v1565
        %v1635 = vpop.f32.mrf.mxu0
        %v1636 = vadd.f32 0.0, %v1635
        %1637 = vdwg.mxu0
        %1639 = vrot.lane.b32.xlu0 %v1616, 80
        %v1640 = vpop.permute.xlu0 %1639
        %vm1642 = vcmask 982656
        %1643 = vst.msk [vmem:[#allocation7] sm:$0xff] %vm1642, %v1640
        %1645 = vrot.lane.b32.xlu0 %v1636, 80
        %v1646 = vpop.permute.xlu0 %1645
        %1648 = vst.msk [vmem:[#allocation7 + $0x8] sm:$0xff] %vm1642, %v1646
        %v1649 = vld [vmem:[#allocation7] sm:$0xff]
        %v1650 = vld [vmem:[#allocation7 + $0x8] sm:$0xff]
        %v1651 = vld [vmem:[%s513] sm:$0xff]
        %v1652 = vld [vmem:[%s513 + $0x8] sm:$0xff]
        %v1653 = vld [vmem:[%s513 + $0x10] sm:$0xff]
        %v1654 = vld [vmem:[%s513 + $0x18] sm:$0xff]
        %v1655 = vld [vmem:[%s513 + $0x20] sm:$0xff]
        %v1656 = vld [vmem:[%s513 + $0x28] sm:$0xff]
        %v1657 = vld [vmem:[%s513 + $0x30] sm:$0xff]
        %v1658 = vld [vmem:[%s513 + $0x38] sm:$0xff]
        %v1659 = vld [vmem:[%s513 + $0x40] sm:$0xff]
        %v1660 = vld [vmem:[%s513 + $0x48] sm:$0xff]
        %v1661 = vld [vmem:[%s513 + $0x50] sm:$0xff]
        %v1662 = vld [vmem:[%s513 + $0x58] sm:$0xff]
        %v1663 = vld [vmem:[%s513 + $0x60] sm:$0xff]
        %v1664 = vld [vmem:[%s513 + $0x68] sm:$0xff]
        %v1665 = vld [vmem:[%s513 + $0x70] sm:$0xff]
        %vm1666 = vcmask 982016
        %v1668 = vsel %vm1666, %v1649, 0
        %v1671 = vsel %vm1666, %v1650, 0
        %1673 = vmatpush.msra.mxu0 0.0
        %1674 = vmatpush.msra.mxu0 %v1665
        %1675 = vmatpush.msra.mxu0 %v1664
        %1676 = vmatpush.msra.mxu0 %v1663
        %1677 = vmatpush.msra.mxu0 %v1662
        %1678 = vmatpush.msra.mxu0 %v1661
        %1679 = vmatpush.msra.mxu0 %v1660
        %1680 = vmatpush.msra.mxu0 %v1659
        %1681 = vmatpush.msra.mxu0 %v1658
        %1682 = vmatpush.msra.mxu0 %v1657
        %1683 = vmatpush.msra.mxu0 %v1656
        %1684 = vmatpush.msra.mxu0 %v1655
        %1685 = vmatpush.msra.mxu0 %v1654
        %1686 = vmatpush.msra.mxu0 %v1653
        %1687 = vmatpush.msra.mxu0 %v1652
        %1688 = vmatpush.msra.mxu0 %v1651
        %1689 = vmatmul.f32.gmra.mxu0 %v1668
        %v1690 = vpop.f32.mrf.mxu0
        %v1691 = vadd.f32 0.0, %v1690
        %1692 = vmatmul.f32.gmra.mxu0 %v1671
        %v1693 = vpop.f32.mrf.mxu0
        %v1694 = vadd.f32 0.0, %v1693
        %1695 = vdwg.mxu0
        %v1696 = vmax.f32 %v1691, 0.0
        %v1697 = vmax.f32 %v1694, 0.0
        %vm1698 = vcmask 122880
        %1699 = vst.msk [vmem:[%s517] sm:$0x1] %vm1698, %v1696
        %1701 = vrot.lane.b32.xlu0 %v1696, 16
        %v1702 = vpop.permute.xlu0 %1701
        %vm1704 = vcmask 255105
        %1705 = vst.msk [vmem:[%s517 - $0x1] sm:$0x2] %vm1704, %v1702
        %1706 = vrot.lane.b32.xlu0 %v1696, 32
        %v1707 = vpop.permute.xlu0 %1706
        %vm1709 = vcmask 387330
        %1710 = vst.msk [vmem:[%s517 - $0x2] sm:$0x4] %vm1709, %v1707
        %1711 = vrot.lane.b32.xlu0 %v1696, 48
        %v1712 = vpop.permute.xlu0 %1711
        %vm1714 = vcmask 519555
        %1715 = vst.msk [vmem:[%s517 - $0x3] sm:$0x8] %vm1714, %v1712
        %1716 = vrot.lane.b32.xlu0 %v1696, 64
        %v1717 = vpop.permute.xlu0 %1716
        %vm1719 = vcmask 651780
        %1720 = vst.msk [vmem:[%s517 - $0x4] sm:$0x10] %vm1719, %v1717
        %1721 = vrot.lane.b32.xlu0 %v1696, 80
        %v1722 = vpop.permute.xlu0 %1721
        %vm1724 = vcmask 784005
        %1725 = vst.msk [vmem:[%s517 - $0x5] sm:$0x20] %vm1724, %v1722
        %1726 = vrot.lane.b32.xlu0 %v1696, 96
        %v1727 = vpop.permute.xlu0 %1726
        %vm1729 = vcmask 916230
        %1730 = vst.msk [vmem:[%s517 - $0x6] sm:$0x40] %vm1729, %v1727
        %1731 = vrot.lane.b32.xlu0 %v1696, 112
        %v1732 = vpop.permute.xlu0 %1731
        %vm1734 = vcmask 1048455
        %1735 = vst.msk [vmem:[%s517 - $0x7] sm:$0x80] %vm1734, %v1732
        %1736 = vst.msk [vmem:[%s517 + $0x1] sm:$0x1] %vm1698, %v1697
        %1738 = vrot.lane.b32.xlu0 %v1697, 16
        %v1739 = vpop.permute.xlu0 %1738
        %1741 = vst.msk [vmem:[%s517] sm:$0x2] %vm1704, %v1739
        %1742 = vrot.lane.b32.xlu0 %v1697, 32
        %v1743 = vpop.permute.xlu0 %1742
        %1745 = vst.msk [vmem:[%s517 - $0x1] sm:$0x4] %vm1709, %v1743
        %1746 = vrot.lane.b32.xlu0 %v1697, 48
        %v1747 = vpop.permute.xlu0 %1746
        %1749 = vst.msk [vmem:[%s517 - $0x2] sm:$0x8] %vm1714, %v1747
        %1750 = vrot.lane.b32.xlu0 %v1697, 64
        %v1751 = vpop.permute.xlu0 %1750
        %1753 = vst.msk [vmem:[%s517 - $0x3] sm:$0x10] %vm1719, %v1751
        %1754 = vrot.lane.b32.xlu0 %v1697, 80
        %v1755 = vpop.permute.xlu0 %1754
        %1757 = vst.msk [vmem:[%s517 - $0x4] sm:$0x20] %vm1724, %v1755
        %1758 = vrot.lane.b32.xlu0 %v1697, 96
        %v1759 = vpop.permute.xlu0 %1758
        %1761 = vst.msk [vmem:[%s517 - $0x5] sm:$0x40] %vm1729, %v1759
        %1762 = vrot.lane.b32.xlu0 %v1697, 112
        %v1763 = vpop.permute.xlu0 %1762
        %1765 = vst.msk [vmem:[%s517 - $0x6] sm:$0x80] %vm1734, %v1763
        %p1766 = scmp.lt.s32.totalorder %s25, 2
        %s1767 = scalar_select %p1766, %s25, 2
        %s1768 = smul.addr %s1767, 2
        %s1769 = scalar_lea.vmem %s12, %s1768
        // Predicated region
        $region85: #{magcn_forward.2} parent=67 // pred_check
          %p1770 = pneg %p320
        $region86: #{magcn_forward.2} parent=67 // pred_check_branch
          %1772 = sbr.rel (%p1770) target = $region88
        $region87: #{magcn_forward.2} parent=67 // pred_region
          _
        $region88: #{magcn_forward.2} parent=67 // pred_fallthru
          _
      $region68: #{magcn_forward.2} parent=5 // pred_fallthru
        _
      %p1773 = scmp.le.s32.totalorder 2, %s20
      // Predicated region
      $region89: #{magcn_forward.2} parent=5 // pred_check
        %p1774 = pneg %p1773
      $region90: #{magcn_forward.2} parent=5 // pred_check_branch
        %1776 = sbr.rel (%p1774) target = $region92
      $region91: #{magcn_forward.2} parent=5 // pred_region
        %s1777 = ssub.s32 %s20, 2
        // Predicated region
        $region93: #{magcn_forward.2} parent=91 // pred_check
          %p1778 = pneg %p326
        $region94: #{magcn_forward.2} parent=91 // pred_check_branch
          %1780 = sbr.rel (%p1778) target = $region96
        $region95: #{magcn_forward.2} parent=91 // pred_region
          %p1781 = scmp.lt.s32.totalorder %s26, 2
          %s1782 = scalar_select %p1781, %s26, 2
          %s1783 = smul.addr %s1782, 2
          %s1784 = scalar_lea.vmem %s12, %s1783
        $region96: #{magcn_forward.2} parent=91 // pred_fallthru
          _
      $region92: #{magcn_forward.2} parent=5 // pred_fallthru
        _
    $region6: #{magcn_forward.2} parent=1 // loop_footer
      %s24 = sadd.s32 1, %s20
    $region7: #{magcn_forward.2} parent=1 // loop_footer_branch
      %19 = sbr.rel target = $region3
    $region8: #{magcn_forward.2} parent=1 // loop_exit
      _
    %1785 = vsyncpa [#allocation9], 1
    %s1786 = scalar_lea.sflag [#allocation9], 1
    %1787 = vsyncpa %s1786, 1
    %1788 = vsyncpa [#allocation11], 1

// kernel: magcn_forward.3
$region0: #{magcn_forward.3}
  #allocation0 [shape = 'u32[]', space=smem, size = 0x4, offset = 0x4, fixed_abs, tag = 'smem constant byte address 0x4 - core index']
  #allocation1 [shape = 'u32[72,128]{1,0:T(1,128)}', space=vmem, size = 0x9000, scoped, tag = 'internal scratch']
  %s0 = inlined_call_operand.vmem [shape: f32[2,384], index: 0, kind: input, shape index: {}]
  %s1 = inlined_call_operand.hbm [shape: bf16[384,4096], index: 1, kind: input, shape index: {}]
  %s2 = inlined_call_operand.hbm [shape: f32[1,4096], index: 2, kind: input, shape index: {}]
  %s3 = inlined_call_operand.hbm [shape: bf16[3,4096], index: 3, kind: input, shape index: {}]
  %s4 = inlined_call_operand.hbm [shape: f32[1,3], index: 4, kind: input, shape index: {}]
  %s5 = inlined_call_operand.hbm [shape: f32[2,3], index: 5, kind: output, shape index: {}]
  %s6 = sld [smem:[#allocation0]]
  $region73: #{magcn_forward.3} parent=0
    _
  %s8 = ssub.s32 1, %s6
  %s9 = scalar_select 0, %s8, %s6
  $region1: #{magcn_forward.3} parent=0
    #allocation2 [shape = 'u8[3145728]{0}', space=vmem, size = 0x300000, scoped, tag = 'input window, operand 1']
    #allocation3 [shape = 's32[2]{0}', space=sflag, size = 0x8, scoped, tag = 'scoped memory for magcn_forward.3']
    #allocation4 [shape = 's32[2]{0}', space=sflag, size = 0x8, scoped, tag = 'scoped memory for magcn_forward.3']
    #allocation5 [shape = 'u8[16384]{0}', space=vmem, size = 0x4000, scoped, tag = 'input window, operand 2']
    #allocation6 [shape = 's32[2]{0}', space=sflag, size = 0x8, scoped, tag = 'scoped memory for magcn_forward.3']
    #allocation7 [shape = 'u8[32768]{0}', space=vmem, size = 0x8000, scoped, tag = 'input window, operand 3']
    #allocation8 [shape = 'u8[512]{0}', space=vmem, size = 0x400, scoped, tag = 'input window, operand 4, single buffered']
    #allocation9 [shape = 's32[1]{0}', space=sflag, size = 0x4, scoped, tag = 'scoped memory for magcn_forward.3']
    #allocation10 [shape = 'u8[1024]{0}', space=vmem, size = 0x400, scoped, tag = 'output window, operand 0, single buffered']
    %10 = vsyncpa [#allocation3], 0
    %s11 = scalar_lea.sflag [#allocation3], 1
    %12 = vsyncpa %s11, 0
    %13 = vsyncpa [#allocation6], 0
    %s14 = scalar_lea.sflag [#allocation6], 1
    %15 = vsyncpa %s14, 0
    %16 = vsyncpa [#allocation9], 0
    %17 = vsyncpa [#allocation4], 0
    loop: start=0, step=1, limit=4
    $region2: #{magcn_forward.3} parent=1 // loop_pre_header
      _
    $region3: #{magcn_forward.3} parent=1 // loop_header
      %s19 = sphi 0, %s23
      %p20 = scmp.ge.s32.totalorder %s19, 4
      %s27 = sphi 0, %s27
      %s29 = sphi 0, %s27
      %s30 = sphi 0, %s29
      %s44 = sphi 0, %s30
      %s50 = sphi 0, %s52
      %s53 = sphi 0, %s50
      %s54 = sphi 0, %s53
      %s70 = sphi 0, %s54
      %s76 = sphi 0, %s78
      %s79 = sphi 0, %s76
      %s80 = sphi 0, %s79
      %s96 = sphi 0, %s80
      %s102 = sphi 0, %s104
      %s105 = sphi 0, %s102
      %s106 = sphi 0, %s105
      %s122 = sphi 0, %s106
      %s126 = sphi 0, %s126
      %s128 = sphi 0, %s126
      %s129 = sphi 0, %s128
      %s143 = sphi 0, %s129
      %s147 = sphi 0, %s147
      %s149 = sphi 0, %s147
      %s150 = sphi 0, %s149
      %s164 = sphi 0, %s150
    $region4: #{magcn_forward.3} parent=1 // loop_header_branch
      %22 = sbr.rel (%p20) target = $region8
    $region5: #{magcn_forward.3} parent=1 // loop_body
      %s24 = ssub.s32 %s19, 1
      %s25 = ssub.s32 %s19, 2
      %s26 = sadd.s32 %s19, 1
      %s28 = sadd.s32 %s27, 1
      %p31 = scmp.eq.s32.totalorder %s19, 1
      %p32 = scmp.ne.s32.totalorder %s27, %s29
      %p33 = scmp.eq.s32.totalorder %s19, 0
      %p34 = por %p32, %p33
      %p35 = scmp.ne.s32.totalorder %s27, %s29
      %p36 = scmp.eq.s32.totalorder %s24, 1
      %p37 = por %p35, %p36
      %p38 = scmp.ne.s32.totalorder %s29, %s30
      %p39 = scmp.eq.s32.totalorder %s24, 0
      %p40 = por %p38, %p39
      %p41 = scmp.ne.s32.totalorder %s29, %s30
      %p42 = scmp.eq.s32.totalorder %s25, 1
      %p43 = por %p41, %p42
      %p45 = scmp.ne.s32.totalorder %s30, %s44
      %p46 = scmp.eq.s32.totalorder %s25, 0
      %p47 = por %p45, %p46
      %s48 = ssub.s32 %s19, %s26
      %p49 = scmp.eq.s32.totalorder %s48, 0
      %s51 = sadd.s32 %s50, 1
      %s52 = scalar_select %p49, %s50, %s51
      %p55 = pneg %p49
      %p56 = scmp.eq.s32.totalorder %s19, 1
      %p57 = por %p55, %p56
      %p58 = scmp.ne.s32.totalorder %s50, %s53
      %p59 = scmp.eq.s32.totalorder %s19, 0
      %p60 = por %p58, %p59
      %p61 = scmp.ne.s32.totalorder %s50, %s53
      %p62 = scmp.eq.s32.totalorder %s24, 1
      %p63 = por %p61, %p62
      %p64 = scmp.ne.s32.totalorder %s53, %s54
      %p65 = scmp.eq.s32.totalorder %s24, 0
      %p66 = por %p64, %p65
      %p67 = scmp.ne.s32.totalorder %s53, %s54
      %p68 = scmp.eq.s32.totalorder %s25, 1
      %p69 = por %p67, %p68
      %p71 = scmp.ne.s32.totalorder %s54, %s70
      %p72 = scmp.eq.s32.totalorder %s25, 0
      %p73 = por %p71, %p72
      %s74 = ssub.s32 %s19, %s26
      %p75 = scmp.eq.s32.totalorder %s74, 0
      %s77 = sadd.s32 %s76, 1
      %s78 = scalar_select %p75, %s76, %s77
      %p81 = pneg %p75
      %p82 = scmp.eq.s32.totalorder %s19, 1
      %p83 = por %p81, %p82
      %p84 = scmp.ne.s32.totalorder %s76, %s79
      %p85 = scmp.eq.s32.totalorder %s19, 0
      %p86 = por %p84, %p85
      %p87 = scmp.ne.s32.totalorder %s76, %s79
      %p88 = scmp.eq.s32.totalorder %s24, 1
      %p89 = por %p87, %p88
      %p90 = scmp.ne.s32.totalorder %s79, %s80
      %p91 = scmp.eq.s32.totalorder %s24, 0
      %p92 = por %p90, %p91
      %p93 = scmp.ne.s32.totalorder %s79, %s80
      %p94 = scmp.eq.s32.totalorder %s25, 1
      %p95 = por %p93, %p94
      %p97 = scmp.ne.s32.totalorder %s80, %s96
      %p98 = scmp.eq.s32.totalorder %s25, 0
      %p99 = por %p97, %p98
      %s100 = ssub.s32 %s19, %s26
      %p101 = scmp.eq.s32.totalorder %s100, 0
      %s103 = sadd.s32 %s102, 1
      %s104 = scalar_select %p101, %s102, %s103
      %p107 = pneg %p101
      %p108 = scmp.eq.s32.totalorder %s19, 1
      %p109 = por %p107, %p108
      %p110 = scmp.ne.s32.totalorder %s102, %s105
      %p111 = scmp.eq.s32.totalorder %s19, 0
      %p112 = por %p110, %p111
      %p113 = scmp.ne.s32.totalorder %s102, %s105
      %p114 = scmp.eq.s32.totalorder %s24, 1
      %p115 = por %p113, %p114
      %p116 = scmp.ne.s32.totalorder %s105, %s106
      %p117 = scmp.eq.s32.totalorder %s24, 0
      %p118 = por %p116, %p117
      %p119 = scmp.ne.s32.totalorder %s105, %s106
      %p120 = scmp.eq.s32.totalorder %s25, 1
      %p121 = por %p119, %p120
      %p123 = scmp.ne.s32.totalorder %s106, %s122
      %p124 = scmp.eq.s32.totalorder %s25, 0
      %p125 = por %p123, %p124
      %s127 = sadd.s32 %s126, 1
      %p130 = scmp.eq.s32.totalorder %s19, 1
      %p131 = scmp.ne.s32.totalorder %s126, %s128
      %p132 = scmp.eq.s32.totalorder %s19, 0
      %p133 = por %p131, %p132
      %p134 = scmp.ne.s32.totalorder %s126, %s128
      %p135 = scmp.eq.s32.totalorder %s24, 1
      %p136 = por %p134, %p135
      %p137 = scmp.ne.s32.totalorder %s128, %s129
      %p138 = scmp.eq.s32.totalorder %s24, 0
      %p139 = por %p137, %p138
      %p140 = scmp.ne.s32.totalorder %s128, %s129
      %p141 = scmp.eq.s32.totalorder %s25, 1
      %p142 = por %p140, %p141
      %p144 = scmp.ne.s32.totalorder %s129, %s143
      %p145 = scmp.eq.s32.totalorder %s25, 0
      %p146 = por %p144, %p145
      %s148 = sadd.s32 %s147, 1
      %p151 = scmp.eq.s32.totalorder %s19, 1
      %p152 = scmp.ne.s32.totalorder %s147, %s149
      %p153 = scmp.eq.s32.totalorder %s19, 0
      %p154 = por %p152, %p153
      %p155 = scmp.ne.s32.totalorder %s147, %s149
      %p156 = scmp.eq.s32.totalorder %s24, 1
      %p157 = por %p155, %p156
      %p158 = scmp.ne.s32.totalorder %s149, %s150
      %p159 = scmp.eq.s32.totalorder %s24, 0
      %p160 = por %p158, %p159
      %p161 = scmp.ne.s32.totalorder %s149, %s150
      %p162 = scmp.eq.s32.totalorder %s25, 1
      %p163 = por %p161, %p162
      %p165 = scmp.ne.s32.totalorder %s150, %s164
      %p166 = scmp.eq.s32.totalorder %s25, 0
      %p167 = por %p165, %p166
      %p168 = scmp.le.s32.totalorder 1, %s19
      %p169 = scmp.lt.s32.totalorder %s19, 3
      %p170 = pnand %p168, %p169
      %p171 = pneg %p170
      // Predicated region
      $region9: #{magcn_forward.3} parent=5 // pred_check
        _
      $region10: #{magcn_forward.3} parent=5 // pred_check_branch
        %173 = sbr.rel (%p170) target = $region12
      $region11: #{magcn_forward.3} parent=5 // pred_region
        %s174 = ssub.s32 %s19, 1
        // Predicated region
        $region13: #{magcn_forward.3} parent=11 // pred_check
          %p175 = pneg %p40
        $region14: #{magcn_forward.3} parent=11 // pred_check_branch
          %177 = sbr.rel (%p175) target = $region16
        $region15: #{magcn_forward.3} parent=11 // pred_region
          _
        $region16: #{magcn_forward.3} parent=11 // pred_fallthru
          _
        // Predicated region
        $region17: #{magcn_forward.3} parent=11 // pred_check
          %p178 = pneg %p139
        $region18: #{magcn_forward.3} parent=11 // pred_check_branch
          %180 = sbr.rel (%p178) target = $region20
        $region19: #{magcn_forward.3} parent=11 // pred_region
          %182 = vsyncadd [#allocation9], 0
          %s184 = sshll.u32 %s4, 4
          %s185 = int_to_ptr.hbm [resolvable:$true] %s184
          %s186 = sshll.u32 [#allocation8], 4
          %s187 = int_to_ptr.vmem [resolvable:$true] %s186
          %189 = dma.hbm_to_vmem [thread:$0]  %s185, 16, %s187, [#allocation9]
        $region20: #{magcn_forward.3} parent=11 // pred_fallthru
          _
      $region12: #{magcn_forward.3} parent=5 // pred_fallthru
        _
      %p190 = scmp.lt.s32.totalorder %s19, 2
      // Predicated region
      $region21: #{magcn_forward.3} parent=5 // pred_check
        %p191 = pneg %p190
      $region22: #{magcn_forward.3} parent=5 // pred_check_branch
        %193 = sbr.rel (%p191) target = $region24
      $region23: #{magcn_forward.3} parent=5 // pred_region
        // Predicated region
        $region25: #{magcn_forward.3} parent=23 // pred_check
          %p194 = pneg %p60
        $region26: #{magcn_forward.3} parent=23 // pred_check_branch
          %196 = sbr.rel (%p194) target = $region28
        $region27: #{magcn_forward.3} parent=23 // pred_region
          %s197 = sand.u32 %s50, 1
          %s198 = scalar_lea.sflag [#allocation3], %s197
          %s199 = sand.u32 %s50, 1
          %s200 = smul.addr %s199, 3072
          %s201 = scalar_lea.vmem [#allocation2], %s200
          %s202 = smul.u32 16, %s19
          %204 = vsyncadd %s198, 0
          %s205 = smul.addr %s202, 4
          %s206 = scalar_lea.hbm %s1, %s205
          %s207 = sshll.u32 %s206, 4
          %s208 = int_to_ptr.hbm [resolvable:$true] %s207
          %s209 = sshll.u32 %s201, 4
          %s210 = int_to_ptr.vmem [resolvable:$true] %s209
          %215 = dma.hbm_to_vmem [thread:$0]  %s208, 49152, %s210, %s198, 2048, 1024, 64
        $region28: #{magcn_forward.3} parent=23 // pred_fallthru
          _
        // Predicated region
        $region29: #{magcn_forward.3} parent=23 // pred_check
          %p216 = pneg %p86
        $region30: #{magcn_forward.3} parent=23 // pred_check_branch
          %218 = sbr.rel (%p216) target = $region32
        $region31: #{magcn_forward.3} parent=23 // pred_region
          %s219 = sand.u32 %s19, 1
          %s220 = scalar_lea.sflag [#allocation6], %s219
          %s221 = sand.u32 %s76, 1
          %s222 = smul.addr %s221, 16
          %s223 = scalar_lea.vmem [#allocation5], %s222
          %s224 = smul.u32 16, %s19
          %226 = vsyncadd %s220, 0
          %s227 = scalar_lea.hbm %s2, %s224
          %s229 = sshll.u32 %s227, 4
          %s230 = int_to_ptr.hbm [resolvable:$true] %s229
          %s231 = sshll.u32 %s223, 4
          %s232 = int_to_ptr.vmem [resolvable:$true] %s231
          %234 = dma.hbm_to_vmem [thread:$0]  %s230, 256, %s232, %s220
        $region32: #{magcn_forward.3} parent=23 // pred_fallthru
          _
        // Predicated region
        $region33: #{magcn_forward.3} parent=23 // pred_check
          %p235 = pneg %p112
        $region34: #{magcn_forward.3} parent=23 // pred_check_branch
          %237 = sbr.rel (%p235) target = $region36
        $region35: #{magcn_forward.3} parent=23 // pred_region
          %s238 = sand.u32 %s19, 1
          %s239 = scalar_lea.sflag [#allocation6], %s238
          %s240 = sand.u32 %s102, 1
          %s241 = smul.addr %s240, 32
          %s242 = scalar_lea.vmem [#allocation7], %s241
          %s243 = smul.u32 16, %s19
          %245 = vsyncadd %s239, 0
          %s246 = smul.addr %s243, 2
          %s247 = scalar_lea.hbm %s3, %s246
          %s249 = sshll.u32 %s247, 4
          %s250 = int_to_ptr.hbm [resolvable:$true] %s249
          %s251 = sshll.u32 %s242, 4
          %s252 = int_to_ptr.vmem [resolvable:$true] %s251
          %254 = dma.hbm_to_vmem [thread:$0]  %s250, 512, %s252, %s239
        $region36: #{magcn_forward.3} parent=23 // pred_fallthru
          _
      $region24: #{magcn_forward.3} parent=5 // pred_fallthru
        _
      %p255 = scmp.le.s32.totalorder 1, %s19
      %p256 = scmp.lt.s32.totalorder %s19, 3
      %p257 = pnand %p255, %p256
      %p258 = pneg %p257
      // Predicated region
      $region37: #{magcn_forward.3} parent=5 // pred_check
        _
      $region38: #{magcn_forward.3} parent=5 // pred_check_branch
        %260 = sbr.rel (%p257) target = $region40
      $region39: #{magcn_forward.3} parent=5 // pred_region
        %s261 = ssub.s32 %s19, 1
        %s262 = sand.u32 %s53, 1
        %s263 = scalar_lea.sflag [#allocation3], %s262
        %s264 = sand.u32 %s53, 1
        %s265 = smul.addr %s264, 3072
        %s266 = scalar_lea.vmem [#allocation2], %s265
        // Predicated region
        $region41: #{magcn_forward.3} parent=39 // pred_check
          %p267 = pneg %p66
        $region42: #{magcn_forward.3} parent=39 // pred_check_branch
          %269 = sbr.rel (%p267) target = $region44
        $region43: #{magcn_forward.3} parent=39 // pred_region
          %271 = dma.done %s263, 49152
        $region44: #{magcn_forward.3} parent=39 // pred_fallthru
          _
        %s272 = sand.u32 %s24, 1
        %s273 = scalar_lea.sflag [#allocation6], %s272
        %s274 = sand.u32 %s79, 1
        %s275 = smul.addr %s274, 16
        %s276 = scalar_lea.vmem [#allocation5], %s275
        // Predicated region
        $region45: #{magcn_forward.3} parent=39 // pred_check
          %p277 = pneg %p92
        $region46: #{magcn_forward.3} parent=39 // pred_check_branch
          %279 = sbr.rel (%p277) target = $region48
        $region47: #{magcn_forward.3} parent=39 // pred_region
          %281 = dma.done %s273, 256
        $region48: #{magcn_forward.3} parent=39 // pred_fallthru
          _
        %s282 = sand.u32 %s24, 1
        %s283 = scalar_lea.sflag [#allocation6], %s282
        %s284 = sand.u32 %s105, 1
        %s285 = smul.addr %s284, 32
        %s286 = scalar_lea.vmem [#allocation7], %s285
        // Predicated region
        $region49: #{magcn_forward.3} parent=39 // pred_check
          %p287 = pneg %p118
        $region50: #{magcn_forward.3} parent=39 // pred_check_branch
          %289 = sbr.rel (%p287) target = $region52
        $region51: #{magcn_forward.3} parent=39 // pred_region
          %291 = dma.done %s283, 512
        $region52: #{magcn_forward.3} parent=39 // pred_fallthru
          _
        // Predicated region
        $region53: #{magcn_forward.3} parent=39 // pred_check
          %p292 = pneg %p139
        $region54: #{magcn_forward.3} parent=39 // pred_check_branch
          %294 = sbr.rel (%p292) target = $region56
        $region55: #{magcn_forward.3} parent=39 // pred_region
          %296 = dma.done [#allocation9], 16
        $region56: #{magcn_forward.3} parent=39 // pred_fallthru
          _
        %p297 = pneg %p40
        %p298 = pneg %p37
        %s299 = sand.u32 %s53, 1
        %s300 = scalar_lea.sflag [#allocation3], %s299
        %s301 = sand.u32 %s53, 1
        %s302 = smul.addr %s301, 3072
        %s303 = scalar_lea.vmem [#allocation2], %s302
        %p304 = pneg %p66
        %p305 = pneg %p63
        %s306 = sand.u32 %s24, 1
        %s307 = scalar_lea.sflag [#allocation6], %s306
        %s308 = sand.u32 %s79, 1
        %s309 = smul.addr %s308, 16
        %s310 = scalar_lea.vmem [#allocation5], %s309
        %p311 = pneg %p92
        %p312 = pneg %p89
        %s313 = sand.u32 %s24, 1
        %s314 = scalar_lea.sflag [#allocation6], %s313
        %s315 = sand.u32 %s105, 1
        %s316 = smul.addr %s315, 32
        %s317 = scalar_lea.vmem [#allocation7], %s316
        %p318 = pneg %p118
        %p319 = pneg %p115
        %p320 = pneg %p139
        %p321 = pneg %p136
        %p322 = pneg %p160
        %p323 = pneg %p157
        %s324 = smul.u32 16, %s24
        %s325 = smul.u32 16, %s24
        %s326 = smul.u32 16, %s24
        %v328 = vld [vmem:[%s0] sm:$0x3f]
        %330 = vst [vmem:[#allocation1] ss:$4 sm:$0xff] %v328
        %v331 = vld.sshfl [vmem:[#allocation1] sm:$0xff pattern:$0x73625140]
        %v332 = vld.sshfl [vmem:[#allocation1 + $0x8] sm:$0xff pattern:$0x73625140]
        %v333 = vld.sshfl [vmem:[#allocation1 + $0x10] sm:$0xff pattern:$0x73625140]
        %v337 = vpack.c.bf16 %v331, %v331
        %v338 = vpack.c.bf16 %v332, %v332
        %v339 = vpack.c.bf16 %v333, %v333
        %v340 = vld [vmem:[%s266] sm:$0xff]
        %v341 = vld [vmem:[%s266 + $0x8] sm:$0xff]
        %v342 = vld [vmem:[%s266 + $0x10] sm:$0xff]
        %v343 = vld [vmem:[%s266 + $0x18] sm:$0xff]
        %v344 = vld [vmem:[%s266 + $0x20] sm:$0xff]
        %v345 = vld [vmem:[%s266 + $0x28] sm:$0xff]
        %v346 = vld [vmem:[%s266 + $0x30] sm:$0xff]
        %v347 = vld [vmem:[%s266 + $0x38] sm:$0xff]
        %v348 = vld [vmem:[%s266 + $0x40] sm:$0xff]
        %v349 = vld [vmem:[%s266 + $0x48] sm:$0xff]
        %v350 = vld [vmem:[%s266 + $0x50] sm:$0xff]
        %v351 = vld [vmem:[%s266 + $0x58] sm:$0xff]
        %v352 = vld [vmem:[%s266 + $0x60] sm:$0xff]
        %v353 = vld [vmem:[%s266 + $0x68] sm:$0xff]
        %v354 = vld [vmem:[%s266 + $0x70] sm:$0xff]
        %v355 = vld [vmem:[%s266 + $0x78] sm:$0xff]
        %v356 = vld [vmem:[%s266 + $0x80] sm:$0xff]
        %v357 = vld [vmem:[%s266 + $0x88] sm:$0xff]
        %v358 = vld [vmem:[%s266 + $0x90] sm:$0xff]
        %v359 = vld [vmem:[%s266 + $0x98] sm:$0xff]
        %v360 = vld [vmem:[%s266 + $0xa0] sm:$0xff]
        %v361 = vld [vmem:[%s266 + $0xa8] sm:$0xff]
        %v362 = vld [vmem:[%s266 + $0xb0] sm:$0xff]
        %v363 = vld [vmem:[%s266 + $0xb8] sm:$0xff]
        %v364 = vld [vmem:[%s266 + $0xc0] sm:$0xff]
        %v365 = vld [vmem:[%s266 + $0xc8] sm:$0xff]
        %v366 = vld [vmem:[%s266 + $0xd0] sm:$0xff]
        %v367 = vld [vmem:[%s266 + $0xd8] sm:$0xff]
        %v368 = vld [vmem:[%s266 + $0xe0] sm:$0xff]
        %v369 = vld [vmem:[%s266 + $0xe8] sm:$0xff]
        %v370 = vld [vmem:[%s266 + $0xf0] sm:$0xff]
        %v371 = vld [vmem:[%s266 + $0xf8] sm:$0xff]
        %v372 = vld [vmem:[%s266 + $0x100] sm:$0xff]
        %v373 = vld [vmem:[%s266 + $0x108] sm:$0xff]
        %v374 = vld [vmem:[%s266 + $0x110] sm:$0xff]
        %v375 = vld [vmem:[%s266 + $0x118] sm:$0xff]
        %v376 = vld [vmem:[%s266 + $0x120] sm:$0xff]
        %v377 = vld [vmem:[%s266 + $0x128] sm:$0xff]
        %v378 = vld [vmem:[%s266 + $0x130] sm:$0xff]
        %v379 = vld [vmem:[%s266 + $0x138] sm:$0xff]
        %v380 = vld [vmem:[%s266 + $0x140] sm:$0xff]
        %v381 = vld [vmem:[%s266 + $0x148] sm:$0xff]
        %v382 = vld [vmem:[%s266 + $0x150] sm:$0xff]
        %v383 = vld [vmem:[%s266 + $0x158] sm:$0xff]
        %v384 = vld [vmem:[%s266 + $0x160] sm:$0xff]
        %v385 = vld [vmem:[%s266 + $0x168] sm:$0xff]
        %v386 = vld [vmem:[%s266 + $0x170] sm:$0xff]
        %v387 = vld [vmem:[%s266 + $0x178] sm:$0xff]
        %v388 = vld [vmem:[%s266 + $0x180] sm:$0xff]
        %v389 = vld [vmem:[%s266 + $0x188] sm:$0xff]
        %v390 = vld [vmem:[%s266 + $0x190] sm:$0xff]
        %v391 = vld [vmem:[%s266 + $0x198] sm:$0xff]
        %v392 = vld [vmem:[%s266 + $0x1a0] sm:$0xff]
        %v393 = vld [vmem:[%s266 + $0x1a8] sm:$0xff]
        %v394 = vld [vmem:[%s266 + $0x1b0] sm:$0xff]
        %v395 = vld [vmem:[%s266 + $0x1b8] sm:$0xff]
        %v396 = vld [vmem:[%s266 + $0x1c0] sm:$0xff]
        %v397 = vld [vmem:[%s266 + $0x1c8] sm:$0xff]
        %v398 = vld [vmem:[%s266 + $0x1d0] sm:$0xff]
        %v399 = vld [vmem:[%s266 + $0x1d8] sm:$0xff]
        %v400 = vld [vmem:[%s266 + $0x1e0] sm:$0xff]
        %v401 = vld [vmem:[%s266 + $0x1e8] sm:$0xff]
        %v402 = vld [vmem:[%s266 + $0x1f0] sm:$0xff]
        %v403 = vld [vmem:[%s266 + $0x1f8] sm:$0xff]
        %v404 = vld [vmem:[%s266 + $0x200] sm:$0xff]
        %v405 = vld [vmem:[%s266 + $0x208] sm:$0xff]
        %v406 = vld [vmem:[%s266 + $0x210] sm:$0xff]
        %v407 = vld [vmem:[%s266 + $0x218] sm:$0xff]
        %v408 = vld [vmem:[%s266 + $0x220] sm:$0xff]
        %v409 = vld [vmem:[%s266 + $0x228] sm:$0xff]
        %v410 = vld [vmem:[%s266 + $0x230] sm:$0xff]
        %v411 = vld [vmem:[%s266 + $0x238] sm:$0xff]
        %v412 = vld [vmem:[%s266 + $0x240] sm:$0xff]
        %v413 = vld [vmem:[%s266 + $0x248] sm:$0xff]
        %v414 = vld [vmem:[%s266 + $0x250] sm:$0xff]
        %v415 = vld [vmem:[%s266 + $0x258] sm:$0xff]
        %v416 = vld [vmem:[%s266 + $0x260] sm:$0xff]
        %v417 = vld [vmem:[%s266 + $0x268] sm:$0xff]
        %v418 = vld [vmem:[%s266 + $0x270] sm:$0xff]
        %v419 = vld [vmem:[%s266 + $0x278] sm:$0xff]
        %v420 = vld [vmem:[%s266 + $0x280] sm:$0xff]
        %v421 = vld [vmem:[%s266 + $0x288] sm:$0xff]
        %v422 = vld [vmem:[%s266 + $0x290] sm:$0xff]
        %v423 = vld [vmem:[%s266 + $0x298] sm:$0xff]
        %v424 = vld [vmem:[%s266 + $0x2a0] sm:$0xff]
        %v425 = vld [vmem:[%s266 + $0x2a8] sm:$0xff]
        %v426 = vld [vmem:[%s266 + $0x2b0] sm:$0xff]
        %v427 = vld [vmem:[%s266 + $0x2b8] sm:$0xff]
        %v428 = vld [vmem:[%s266 + $0x2c0] sm:$0xff]
        %v429 = vld [vmem:[%s266 + $0x2c8] sm:$0xff]
        %v430 = vld [vmem:[%s266 + $0x2d0] sm:$0xff]
        %v431 = vld [vmem:[%s266 + $0x2d8] sm:$0xff]
        %v432 = vld [vmem:[%s266 + $0x2e0] sm:$0xff]
        %v433 = vld [vmem:[%s266 + $0x2e8] sm:$0xff]
        %v434 = vld [vmem:[%s266 + $0x2f0] sm:$0xff]
        %v435 = vld [vmem:[%s266 + $0x2f8] sm:$0xff]
        %v436 = vld [vmem:[%s266 + $0x300] sm:$0xff]
        %v437 = vld [vmem:[%s266 + $0x308] sm:$0xff]
        %v438 = vld [vmem:[%s266 + $0x310] sm:$0xff]
        %v439 = vld [vmem:[%s266 + $0x318] sm:$0xff]
        %v440 = vld [vmem:[%s266 + $0x320] sm:$0xff]
        %v441 = vld [vmem:[%s266 + $0x328] sm:$0xff]
        %v442 = vld [vmem:[%s266 + $0x330] sm:$0xff]
        %v443 = vld [vmem:[%s266 + $0x338] sm:$0xff]
        %v444 = vld [vmem:[%s266 + $0x340] sm:$0xff]
        %v445 = vld [vmem:[%s266 + $0x348] sm:$0xff]
        %v446 = vld [vmem:[%s266 + $0x350] sm:$0xff]
        %v447 = vld [vmem:[%s266 + $0x358] sm:$0xff]
        %v448 = vld [vmem:[%s266 + $0x360] sm:$0xff]
        %v449 = vld [vmem:[%s266 + $0x368] sm:$0xff]
        %v450 = vld [vmem:[%s266 + $0x370] sm:$0xff]
        %v451 = vld [vmem:[%s266 + $0x378] sm:$0xff]
        %v452 = vld [vmem:[%s266 + $0x380] sm:$0xff]
        %v453 = vld [vmem:[%s266 + $0x388] sm:$0xff]
        %v454 = vld [vmem:[%s266 + $0x390] sm:$0xff]
        %v455 = vld [vmem:[%s266 + $0x398] sm:$0xff]
        %v456 = vld [vmem:[%s266 + $0x3a0] sm:$0xff]
        %v457 = vld [vmem:[%s266 + $0x3a8] sm:$0xff]
        %v458 = vld [vmem:[%s266 + $0x3b0] sm:$0xff]
        %v459 = vld [vmem:[%s266 + $0x3b8] sm:$0xff]
        %v460 = vld [vmem:[%s266 + $0x3c0] sm:$0xff]
        %v461 = vld [vmem:[%s266 + $0x3c8] sm:$0xff]
        %v462 = vld [vmem:[%s266 + $0x3d0] sm:$0xff]
        %v463 = vld [vmem:[%s266 + $0x3d8] sm:$0xff]
        %v464 = vld [vmem:[%s266 + $0x3e0] sm:$0xff]
        %v465 = vld [vmem:[%s266 + $0x3e8] sm:$0xff]
        %v466 = vld [vmem:[%s266 + $0x3f0] sm:$0xff]
        %v467 = vld [vmem:[%s266 + $0x3f8] sm:$0xff]
        %v468 = vld [vmem:[%s266 + $0x400] sm:$0xff]
        %v469 = vld [vmem:[%s266 + $0x408] sm:$0xff]
        %v470 = vld [vmem:[%s266 + $0x410] sm:$0xff]
        %v471 = vld [vmem:[%s266 + $0x418] sm:$0xff]
        %v472 = vld [vmem:[%s266 + $0x420] sm:$0xff]
        %v473 = vld [vmem:[%s266 + $0x428] sm:$0xff]
        %v474 = vld [vmem:[%s266 + $0x430] sm:$0xff]
        %v475 = vld [vmem:[%s266 + $0x438] sm:$0xff]
        %v476 = vld [vmem:[%s266 + $0x440] sm:$0xff]
        %v477 = vld [vmem:[%s266 + $0x448] sm:$0xff]
        %v478 = vld [vmem:[%s266 + $0x450] sm:$0xff]
        %v479 = vld [vmem:[%s266 + $0x458] sm:$0xff]
        %v480 = vld [vmem:[%s266 + $0x460] sm:$0xff]
        %v481 = vld [vmem:[%s266 + $0x468] sm:$0xff]
        %v482 = vld [vmem:[%s266 + $0x470] sm:$0xff]
        %v483 = vld [vmem:[%s266 + $0x478] sm:$0xff]
        %v484 = vld [vmem:[%s266 + $0x480] sm:$0xff]
        %v485 = vld [vmem:[%s266 + $0x488] sm:$0xff]
        %v486 = vld [vmem:[%s266 + $0x490] sm:$0xff]
        %v487 = vld [vmem:[%s266 + $0x498] sm:$0xff]
        %v488 = vld [vmem:[%s266 + $0x4a0] sm:$0xff]
        %v489 = vld [vmem:[%s266 + $0x4a8] sm:$0xff]
        %v490 = vld [vmem:[%s266 + $0x4b0] sm:$0xff]
        %v491 = vld [vmem:[%s266 + $0x4b8] sm:$0xff]
        %v492 = vld [vmem:[%s266 + $0x4c0] sm:$0xff]
        %v493 = vld [vmem:[%s266 + $0x4c8] sm:$0xff]
        %v494 = vld [vmem:[%s266 + $0x4d0] sm:$0xff]
        %v495 = vld [vmem:[%s266 + $0x4d8] sm:$0xff]
        %v496 = vld [vmem:[%s266 + $0x4e0] sm:$0xff]
        %v497 = vld [vmem:[%s266 + $0x4e8] sm:$0xff]
        %v498 = vld [vmem:[%s266 + $0x4f0] sm:$0xff]
        %v499 = vld [vmem:[%s266 + $0x4f8] sm:$0xff]
        %v500 = vld [vmem:[%s266 + $0x500] sm:$0xff]
        %v501 = vld [vmem:[%s266 + $0x508] sm:$0xff]
        %v502 = vld [vmem:[%s266 + $0x510] sm:$0xff]
        %v503 = vld [vmem:[%s266 + $0x518] sm:$0xff]
        %v504 = vld [vmem:[%s266 + $0x520] sm:$0xff]
        %v505 = vld [vmem:[%s266 + $0x528] sm:$0xff]
        %v506 = vld [vmem:[%s266 + $0x530] sm:$0xff]
        %v507 = vld [vmem:[%s266 + $0x538] sm:$0xff]
        %v508 = vld [vmem:[%s266 + $0x540] sm:$0xff]
        %v509 = vld [vmem:[%s266 + $0x548] sm:$0xff]
        %v510 = vld [vmem:[%s266 + $0x550] sm:$0xff]
        %v511 = vld [vmem:[%s266 + $0x558] sm:$0xff]
        %v512 = vld [vmem:[%s266 + $0x560] sm:$0xff]
        %v513 = vld [vmem:[%s266 + $0x568] sm:$0xff]
        %v514 = vld [vmem:[%s266 + $0x570] sm:$0xff]
        %v515 = vld [vmem:[%s266 + $0x578] sm:$0xff]
        %v516 = vld [vmem:[%s266 + $0x580] sm:$0xff]
        %v517 = vld [vmem:[%s266 + $0x588] sm:$0xff]
        %v518 = vld [vmem:[%s266 + $0x590] sm:$0xff]
        %v519 = vld [vmem:[%s266 + $0x598] sm:$0xff]
        %v520 = vld [vmem:[%s266 + $0x5a0] sm:$0xff]
        %v521 = vld [vmem:[%s266 + $0x5a8] sm:$0xff]
        %v522 = vld [vmem:[%s266 + $0x5b0] sm:$0xff]
        %v523 = vld [vmem:[%s266 + $0x5b8] sm:$0xff]
        %v524 = vld [vmem:[%s266 + $0x5c0] sm:$0xff]
        %v525 = vld [vmem:[%s266 + $0x5c8] sm:$0xff]
        %v526 = vld [vmem:[%s266 + $0x5d0] sm:$0xff]
        %v527 = vld [vmem:[%s266 + $0x5d8] sm:$0xff]
        %v528 = vld [vmem:[%s266 + $0x5e0] sm:$0xff]
        %v529 = vld [vmem:[%s266 + $0x5e8] sm:$0xff]
        %v530 = vld [vmem:[%s266 + $0x5f0] sm:$0xff]
        %v531 = vld [vmem:[%s266 + $0x5f8] sm:$0xff]
        %v532 = vld [vmem:[%s266 + $0x600] sm:$0xff]
        %v533 = vld [vmem:[%s266 + $0x608] sm:$0xff]
        %v534 = vld [vmem:[%s266 + $0x610] sm:$0xff]
        %v535 = vld [vmem:[%s266 + $0x618] sm:$0xff]
        %v536 = vld [vmem:[%s266 + $0x620] sm:$0xff]
        %v537 = vld [vmem:[%s266 + $0x628] sm:$0xff]
        %v538 = vld [vmem:[%s266 + $0x630] sm:$0xff]
        %v539 = vld [vmem:[%s266 + $0x638] sm:$0xff]
        %v540 = vld [vmem:[%s266 + $0x640] sm:$0xff]
        %v541 = vld [vmem:[%s266 + $0x648] sm:$0xff]
        %v542 = vld [vmem:[%s266 + $0x650] sm:$0xff]
        %v543 = vld [vmem:[%s266 + $0x658] sm:$0xff]
        %v544 = vld [vmem:[%s266 + $0x660] sm:$0xff]
        %v545 = vld [vmem:[%s266 + $0x668] sm:$0xff]
        %v546 = vld [vmem:[%s266 + $0x670] sm:$0xff]
        %v547 = vld [vmem:[%s266 + $0x678] sm:$0xff]
        %v548 = vld [vmem:[%s266 + $0x680] sm:$0xff]
        %v549 = vld [vmem:[%s266 + $0x688] sm:$0xff]
        %v550 = vld [vmem:[%s266 + $0x690] sm:$0xff]
        %v551 = vld [vmem:[%s266 + $0x698] sm:$0xff]
        %v552 = vld [vmem:[%s266 + $0x6a0] sm:$0xff]
        %v553 = vld [vmem:[%s266 + $0x6a8] sm:$0xff]
        %v554 = vld [vmem:[%s266 + $0x6b0] sm:$0xff]
        %v555 = vld [vmem:[%s266 + $0x6b8] sm:$0xff]
        %v556 = vld [vmem:[%s266 + $0x6c0] sm:$0xff]
        %v557 = vld [vmem:[%s266 + $0x6c8] sm:$0xff]
        %v558 = vld [vmem:[%s266 + $0x6d0] sm:$0xff]
        %v559 = vld [vmem:[%s266 + $0x6d8] sm:$0xff]
        %v560 = vld [vmem:[%s266 + $0x6e0] sm:$0xff]
        %v561 = vld [vmem:[%s266 + $0x6e8] sm:$0xff]
        %v562 = vld [vmem:[%s266 + $0x6f0] sm:$0xff]
        %v563 = vld [vmem:[%s266 + $0x6f8] sm:$0xff]
        %v564 = vld [vmem:[%s266 + $0x700] sm:$0xff]
        %v565 = vld [vmem:[%s266 + $0x708] sm:$0xff]
        %v566 = vld [vmem:[%s266 + $0x710] sm:$0xff]
        %v567 = vld [vmem:[%s266 + $0x718] sm:$0xff]
        %v568 = vld [vmem:[%s266 + $0x720] sm:$0xff]
        %v569 = vld [vmem:[%s266 + $0x728] sm:$0xff]
        %v570 = vld [vmem:[%s266 + $0x730] sm:$0xff]
        %v571 = vld [vmem:[%s266 + $0x738] sm:$0xff]
        %v572 = vld [vmem:[%s266 + $0x740] sm:$0xff]
        %v573 = vld [vmem:[%s266 + $0x748] sm:$0xff]
        %v574 = vld [vmem:[%s266 + $0x750] sm:$0xff]
        %v575 = vld [vmem:[%s266 + $0x758] sm:$0xff]
        %v576 = vld [vmem:[%s266 + $0x760] sm:$0xff]
        %v577 = vld [vmem:[%s266 + $0x768] sm:$0xff]
        %v578 = vld [vmem:[%s266 + $0x770] sm:$0xff]
        %v579 = vld [vmem:[%s266 + $0x778] sm:$0xff]
        %v580 = vld [vmem:[%s266 + $0x780] sm:$0xff]
        %v581 = vld [vmem:[%s266 + $0x788] sm:$0xff]
        %v582 = vld [vmem:[%s266 + $0x790] sm:$0xff]
        %v583 = vld [vmem:[%s266 + $0x798] sm:$0xff]
        %v584 = vld [vmem:[%s266 + $0x7a0] sm:$0xff]
        %v585 = vld [vmem:[%s266 + $0x7a8] sm:$0xff]
        %v586 = vld [vmem:[%s266 + $0x7b0] sm:$0xff]
        %v587 = vld [vmem:[%s266 + $0x7b8] sm:$0xff]
        %v588 = vld [vmem:[%s266 + $0x7c0] sm:$0xff]
        %v589 = vld [vmem:[%s266 + $0x7c8] sm:$0xff]
        %v590 = vld [vmem:[%s266 + $0x7d0] sm:$0xff]
        %v591 = vld [vmem:[%s266 + $0x7d8] sm:$0xff]
        %v592 = vld [vmem:[%s266 + $0x7e0] sm:$0xff]
        %v593 = vld [vmem:[%s266 + $0x7e8] sm:$0xff]
        %v594 = vld [vmem:[%s266 + $0x7f0] sm:$0xff]
        %v595 = vld [vmem:[%s266 + $0x7f8] sm:$0xff]
        %v596 = vld [vmem:[%s266 + $0x800] sm:$0xff]
        %v597 = vld [vmem:[%s266 + $0x808] sm:$0xff]
        %v598 = vld [vmem:[%s266 + $0x810] sm:$0xff]
        %v599 = vld [vmem:[%s266 + $0x818] sm:$0xff]
        %v600 = vld [vmem:[%s266 + $0x820] sm:$0xff]
        %v601 = vld [vmem:[%s266 + $0x828] sm:$0xff]
        %v602 = vld [vmem:[%s266 + $0x830] sm:$0xff]
        %v603 = vld [vmem:[%s266 + $0x838] sm:$0xff]
        %v604 = vld [vmem:[%s266 + $0x840] sm:$0xff]
        %v605 = vld [vmem:[%s266 + $0x848] sm:$0xff]
        %v606 = vld [vmem:[%s266 + $0x850] sm:$0xff]
        %v607 = vld [vmem:[%s266 + $0x858] sm:$0xff]
        %v608 = vld [vmem:[%s266 + $0x860] sm:$0xff]
        %v609 = vld [vmem:[%s266 + $0x868] sm:$0xff]
        %v610 = vld [vmem:[%s266 + $0x870] sm:$0xff]
        %v611 = vld [vmem:[%s266 + $0x878] sm:$0xff]
        %v612 = vld [vmem:[%s266 + $0x880] sm:$0xff]
        %v613 = vld [vmem:[%s266 + $0x888] sm:$0xff]
        %v614 = vld [vmem:[%s266 + $0x890] sm:$0xff]
        %v615 = vld [vmem:[%s266 + $0x898] sm:$0xff]
        %v616 = vld [vmem:[%s266 + $0x8a0] sm:$0xff]
        %v617 = vld [vmem:[%s266 + $0x8a8] sm:$0xff]
        %v618 = vld [vmem:[%s266 + $0x8b0] sm:$0xff]
        %v619 = vld [vmem:[%s266 + $0x8b8] sm:$0xff]
        %v620 = vld [vmem:[%s266 + $0x8c0] sm:$0xff]
        %v621 = vld [vmem:[%s266 + $0x8c8] sm:$0xff]
        %v622 = vld [vmem:[%s266 + $0x8d0] sm:$0xff]
        %v623 = vld [vmem:[%s266 + $0x8d8] sm:$0xff]
        %v624 = vld [vmem:[%s266 + $0x8e0] sm:$0xff]
        %v625 = vld [vmem:[%s266 + $0x8e8] sm:$0xff]
        %v626 = vld [vmem:[%s266 + $0x8f0] sm:$0xff]
        %v627 = vld [vmem:[%s266 + $0x8f8] sm:$0xff]
        %v628 = vld [vmem:[%s266 + $0x900] sm:$0xff]
        %v629 = vld [vmem:[%s266 + $0x908] sm:$0xff]
        %v630 = vld [vmem:[%s266 + $0x910] sm:$0xff]
        %v631 = vld [vmem:[%s266 + $0x918] sm:$0xff]
        %v632 = vld [vmem:[%s266 + $0x920] sm:$0xff]
        %v633 = vld [vmem:[%s266 + $0x928] sm:$0xff]
        %v634 = vld [vmem:[%s266 + $0x930] sm:$0xff]
        %v635 = vld [vmem:[%s266 + $0x938] sm:$0xff]
        %v636 = vld [vmem:[%s266 + $0x940] sm:$0xff]
        %v637 = vld [vmem:[%s266 + $0x948] sm:$0xff]
        %v638 = vld [vmem:[%s266 + $0x950] sm:$0xff]
        %v639 = vld [vmem:[%s266 + $0x958] sm:$0xff]
        %v640 = vld [vmem:[%s266 + $0x960] sm:$0xff]
        %v641 = vld [vmem:[%s266 + $0x968] sm:$0xff]
        %v642 = vld [vmem:[%s266 + $0x970] sm:$0xff]
        %v643 = vld [vmem:[%s266 + $0x978] sm:$0xff]
        %v644 = vld [vmem:[%s266 + $0x980] sm:$0xff]
        %v645 = vld [vmem:[%s266 + $0x988] sm:$0xff]
        %v646 = vld [vmem:[%s266 + $0x990] sm:$0xff]
        %v647 = vld [vmem:[%s266 + $0x998] sm:$0xff]
        %v648 = vld [vmem:[%s266 + $0x9a0] sm:$0xff]
        %v649 = vld [vmem:[%s266 + $0x9a8] sm:$0xff]
        %v650 = vld [vmem:[%s266 + $0x9b0] sm:$0xff]
        %v651 = vld [vmem:[%s266 + $0x9b8] sm:$0xff]
        %v652 = vld [vmem:[%s266 + $0x9c0] sm:$0xff]
        %v653 = vld [vmem:[%s266 + $0x9c8] sm:$0xff]
        %v654 = vld [vmem:[%s266 + $0x9d0] sm:$0xff]
        %v655 = vld [vmem:[%s266 + $0x9d8] sm:$0xff]
        %v656 = vld [vmem:[%s266 + $0x9e0] sm:$0xff]
        %v657 = vld [vmem:[%s266 + $0x9e8] sm:$0xff]
        %v658 = vld [vmem:[%s266 + $0x9f0] sm:$0xff]
        %v659 = vld [vmem:[%s266 + $0x9f8] sm:$0xff]
        %v660 = vld [vmem:[%s266 + $0xa00] sm:$0xff]
        %v661 = vld [vmem:[%s266 + $0xa08] sm:$0xff]
        %v662 = vld [vmem:[%s266 + $0xa10] sm:$0xff]
        %v663 = vld [vmem:[%s266 + $0xa18] sm:$0xff]
        %v664 = vld [vmem:[%s266 + $0xa20] sm:$0xff]
        %v665 = vld [vmem:[%s266 + $0xa28] sm:$0xff]
        %v666 = vld [vmem:[%s266 + $0xa30] sm:$0xff]
        %v667 = vld [vmem:[%s266 + $0xa38] sm:$0xff]
        %v668 = vld [vmem:[%s266 + $0xa40] sm:$0xff]
        %v669 = vld [vmem:[%s266 + $0xa48] sm:$0xff]
        %v670 = vld [vmem:[%s266 + $0xa50] sm:$0xff]
        %v671 = vld [vmem:[%s266 + $0xa58] sm:$0xff]
        %v672 = vld [vmem:[%s266 + $0xa60] sm:$0xff]
        %v673 = vld [vmem:[%s266 + $0xa68] sm:$0xff]
        %v674 = vld [vmem:[%s266 + $0xa70] sm:$0xff]
        %v675 = vld [vmem:[%s266 + $0xa78] sm:$0xff]
        %v676 = vld [vmem:[%s266 + $0xa80] sm:$0xff]
        %v677 = vld [vmem:[%s266 + $0xa88] sm:$0xff]
        %v678 = vld [vmem:[%s266 + $0xa90] sm:$0xff]
        %v679 = vld [vmem:[%s266 + $0xa98] sm:$0xff]
        %v680 = vld [vmem:[%s266 + $0xaa0] sm:$0xff]
        %v681 = vld [vmem:[%s266 + $0xaa8] sm:$0xff]
        %v682 = vld [vmem:[%s266 + $0xab0] sm:$0xff]
        %v683 = vld [vmem:[%s266 + $0xab8] sm:$0xff]
        %v684 = vld [vmem:[%s266 + $0xac0] sm:$0xff]
        %v685 = vld [vmem:[%s266 + $0xac8] sm:$0xff]
        %v686 = vld [vmem:[%s266 + $0xad0] sm:$0xff]
        %v687 = vld [vmem:[%s266 + $0xad8] sm:$0xff]
        %v688 = vld [vmem:[%s266 + $0xae0] sm:$0xff]
        %v689 = vld [vmem:[%s266 + $0xae8] sm:$0xff]
        %v690 = vld [vmem:[%s266 + $0xaf0] sm:$0xff]
        %v691 = vld [vmem:[%s266 + $0xaf8] sm:$0xff]
        %v692 = vld [vmem:[%s266 + $0xb00] sm:$0xff]
        %v693 = vld [vmem:[%s266 + $0xb08] sm:$0xff]
        %v694 = vld [vmem:[%s266 + $0xb10] sm:$0xff]
        %v695 = vld [vmem:[%s266 + $0xb18] sm:$0xff]
        %v696 = vld [vmem:[%s266 + $0xb20] sm:$0xff]
        %v697 = vld [vmem:[%s266 + $0xb28] sm:$0xff]
        %v698 = vld [vmem:[%s266 + $0xb30] sm:$0xff]
        %v699 = vld [vmem:[%s266 + $0xb38] sm:$0xff]
        %v700 = vld [vmem:[%s266 + $0xb40] sm:$0xff]
        %v701 = vld [vmem:[%s266 + $0xb48] sm:$0xff]
        %v702 = vld [vmem:[%s266 + $0xb50] sm:$0xff]
        %v703 = vld [vmem:[%s266 + $0xb58] sm:$0xff]
        %v704 = vld [vmem:[%s266 + $0xb60] sm:$0xff]
        %v705 = vld [vmem:[%s266 + $0xb68] sm:$0xff]
        %v706 = vld [vmem:[%s266 + $0xb70] sm:$0xff]
        %v707 = vld [vmem:[%s266 + $0xb78] sm:$0xff]
        %v708 = vld [vmem:[%s266 + $0xb80] sm:$0xff]
        %v709 = vld [vmem:[%s266 + $0xb88] sm:$0xff]
        %v710 = vld [vmem:[%s266 + $0xb90] sm:$0xff]
        %v711 = vld [vmem:[%s266 + $0xb98] sm:$0xff]
        %v712 = vld [vmem:[%s266 + $0xba0] sm:$0xff]
        %v713 = vld [vmem:[%s266 + $0xba8] sm:$0xff]
        %v714 = vld [vmem:[%s266 + $0xbb0] sm:$0xff]
        %v715 = vld [vmem:[%s266 + $0xbb8] sm:$0xff]
        %v716 = vld [vmem:[%s266 + $0xbc0] sm:$0xff]
        %v717 = vld [vmem:[%s266 + $0xbc8] sm:$0xff]
        %v718 = vld [vmem:[%s266 + $0xbd0] sm:$0xff]
        %v719 = vld [vmem:[%s266 + $0xbd8] sm:$0xff]
        %v720 = vld [vmem:[%s266 + $0xbe0] sm:$0xff]
        %v721 = vld [vmem:[%s266 + $0xbe8] sm:$0xff]
        %v722 = vld [vmem:[%s266 + $0xbf0] sm:$0xff]
        %v723 = vld [vmem:[%s266 + $0xbf8] sm:$0xff]
        %v724 = vld [vmem:[%s276] sm:$0xff]
        %v725 = vld [vmem:[%s276 + $0x8] sm:$0xff]
        %v728 = vperm.slane %v724, 0
        %v729 = vperm.slane %v724, 1
        %v730 = vperm.slane %v724, 2
        %v731 = vperm.slane %v724, 3
        %v732 = vperm.slane %v724, 4
        %v733 = vperm.slane %v724, 5
        %v734 = vperm.slane %v724, 6
        %v735 = vperm.slane %v724, 7
        %v736 = vperm.slane %v725, 0
        %v737 = vperm.slane %v725, 1
        %v738 = vperm.slane %v725, 2
        %v739 = vperm.slane %v725, 3
        %v740 = vperm.slane %v725, 4
        %v741 = vperm.slane %v725, 5
        %v742 = vperm.slane %v725, 6
        %v743 = vperm.slane %v725, 7
        %v1144 = vunpack.c.l.b16 %v340
        %v1145 = vunpack.c.h.b16 %v340
        %v1146 = vunpack.c.l.b16 %v341
        %v1147 = vunpack.c.h.b16 %v341
        %v1148 = vunpack.c.l.b16 %v342
        %v1149 = vunpack.c.h.b16 %v342
        %v1150 = vunpack.c.l.b16 %v343
        %v1151 = vunpack.c.h.b16 %v343
        %v1152 = vunpack.c.l.b16 %v344
        %v1153 = vunpack.c.h.b16 %v344
        %v1154 = vunpack.c.l.b16 %v345
        %v1155 = vunpack.c.h.b16 %v345
        %v1156 = vunpack.c.l.b16 %v346
        %v1157 = vunpack.c.h.b16 %v346
        %v1158 = vunpack.c.l.b16 %v347
        %v1159 = vunpack.c.h.b16 %v347
        %v1160 = vunpack.c.l.b16 %v348
        %v1161 = vunpack.c.h.b16 %v348
        %v1162 = vunpack.c.l.b16 %v349
        %v1163 = vunpack.c.h.b16 %v349
        %v1164 = vunpack.c.l.b16 %v350
        %v1165 = vunpack.c.h.b16 %v350
        %v1166 = vunpack.c.l.b16 %v351
        %v1167 = vunpack.c.h.b16 %v351
        %v1168 = vunpack.c.l.b16 %v352
        %v1169 = vunpack.c.h.b16 %v352
        %v1170 = vunpack.c.l.b16 %v353
        %v1171 = vunpack.c.h.b16 %v353
        %v1172 = vunpack.c.l.b16 %v354
        %v1173 = vunpack.c.h.b16 %v354
        %v1174 = vunpack.c.l.b16 %v355
        %v1175 = vunpack.c.h.b16 %v355
        %v1176 = vunpack.c.l.b16 %v356
        %v1177 = vunpack.c.h.b16 %v356
        %v1178 = vunpack.c.l.b16 %v357
        %v1179 = vunpack.c.h.b16 %v357
        %v1180 = vunpack.c.l.b16 %v358
        %v1181 = vunpack.c.h.b16 %v358
        %v1182 = vunpack.c.l.b16 %v359
        %v1183 = vunpack.c.h.b16 %v359
        %v1184 = vunpack.c.l.b16 %v360
        %v1185 = vunpack.c.h.b16 %v360
        %v1186 = vunpack.c.l.b16 %v361
        %v1187 = vunpack.c.h.b16 %v361
        %v1188 = vunpack.c.l.b16 %v362
        %v1189 = vunpack.c.h.b16 %v362
        %v1190 = vunpack.c.l.b16 %v363
        %v1191 = vunpack.c.h.b16 %v363
        %v1192 = vunpack.c.l.b16 %v364
        %v1193 = vunpack.c.h.b16 %v364
        %v1194 = vunpack.c.l.b16 %v365
        %v1195 = vunpack.c.h.b16 %v365
        %v1196 = vunpack.c.l.b16 %v366
        %v1197 = vunpack.c.h.b16 %v366
        %v1198 = vunpack.c.l.b16 %v367
        %v1199 = vunpack.c.h.b16 %v367
        %v1200 = vunpack.c.l.b16 %v368
        %v1201 = vunpack.c.h.b16 %v368
        %v1202 = vunpack.c.l.b16 %v369
        %v1203 = vunpack.c.h.b16 %v369
        %v1204 = vunpack.c.l.b16 %v370
        %v1205 = vunpack.c.h.b16 %v370
        %v1206 = vunpack.c.l.b16 %v371
        %v1207 = vunpack.c.h.b16 %v371
        %v1208 = vunpack.c.l.b16 %v372
        %v1209 = vunpack.c.h.b16 %v372
        %v1210 = vunpack.c.l.b16 %v373
        %v1211 = vunpack.c.h.b16 %v373
        %v1212 = vunpack.c.l.b16 %v374
        %v1213 = vunpack.c.h.b16 %v374
        %v1214 = vunpack.c.l.b16 %v375
        %v1215 = vunpack.c.h.b16 %v375
        %v1216 = vunpack.c.l.b16 %v376
        %v1217 = vunpack.c.h.b16 %v376
        %v1218 = vunpack.c.l.b16 %v377
        %v1219 = vunpack.c.h.b16 %v377
        %v1220 = vunpack.c.l.b16 %v378
        %v1221 = vunpack.c.h.b16 %v378
        %v1222 = vunpack.c.l.b16 %v379
        %v1223 = vunpack.c.h.b16 %v379
        %v1224 = vunpack.c.l.b16 %v380
        %v1225 = vunpack.c.h.b16 %v380
        %v1226 = vunpack.c.l.b16 %v381
        %v1227 = vunpack.c.h.b16 %v381
        %v1228 = vunpack.c.l.b16 %v382
        %v1229 = vunpack.c.h.b16 %v382
        %v1230 = vunpack.c.l.b16 %v383
        %v1231 = vunpack.c.h.b16 %v383
        %v1232 = vunpack.c.l.b16 %v384
        %v1233 = vunpack.c.h.b16 %v384
        %v1234 = vunpack.c.l.b16 %v385
        %v1235 = vunpack.c.h.b16 %v385
        %v1236 = vunpack.c.l.b16 %v386
        %v1237 = vunpack.c.h.b16 %v386
        %v1238 = vunpack.c.l.b16 %v387
        %v1239 = vunpack.c.h.b16 %v387
        %v1240 = vunpack.c.l.b16 %v388
        %v1241 = vunpack.c.h.b16 %v388
        %v1242 = vunpack.c.l.b16 %v389
        %v1243 = vunpack.c.h.b16 %v389
        %v1244 = vunpack.c.l.b16 %v390
        %v1245 = vunpack.c.h.b16 %v390
        %v1246 = vunpack.c.l.b16 %v391
        %v1247 = vunpack.c.h.b16 %v391
        %v1248 = vunpack.c.l.b16 %v392
        %v1249 = vunpack.c.h.b16 %v392
        %v1250 = vunpack.c.l.b16 %v393
        %v1251 = vunpack.c.h.b16 %v393
        %v1252 = vunpack.c.l.b16 %v394
        %v1253 = vunpack.c.h.b16 %v394
        %v1254 = vunpack.c.l.b16 %v395
        %v1255 = vunpack.c.h.b16 %v395
        %v1256 = vunpack.c.l.b16 %v396
        %v1257 = vunpack.c.h.b16 %v396
        %v1258 = vunpack.c.l.b16 %v397
        %v1259 = vunpack.c.h.b16 %v397
        %v1260 = vunpack.c.l.b16 %v398
        %v1261 = vunpack.c.h.b16 %v398
        %v1262 = vunpack.c.l.b16 %v399
        %v1263 = vunpack.c.h.b16 %v399
        %v1264 = vunpack.c.l.b16 %v400
        %v1265 = vunpack.c.h.b16 %v400
        %v1266 = vunpack.c.l.b16 %v401
        %v1267 = vunpack.c.h.b16 %v401
        %v1268 = vunpack.c.l.b16 %v402
        %v1269 = vunpack.c.h.b16 %v402
        %v1270 = vunpack.c.l.b16 %v403
        %v1271 = vunpack.c.h.b16 %v403
        %v1272 = vunpack.c.l.b16 %v404
        %v1273 = vunpack.c.h.b16 %v404
        %v1274 = vunpack.c.l.b16 %v405
        %v1275 = vunpack.c.h.b16 %v405
        %v1276 = vunpack.c.l.b16 %v406
        %v1277 = vunpack.c.h.b16 %v406
        %v1278 = vunpack.c.l.b16 %v407
        %v1279 = vunpack.c.h.b16 %v407
        %v1280 = vunpack.c.l.b16 %v408
        %v1281 = vunpack.c.h.b16 %v408
        %v1282 = vunpack.c.l.b16 %v409
        %v1283 = vunpack.c.h.b16 %v409
        %v1284 = vunpack.c.l.b16 %v410
        %v1285 = vunpack.c.h.b16 %v410
        %v1286 = vunpack.c.l.b16 %v411
        %v1287 = vunpack.c.h.b16 %v411
        %v1288 = vunpack.c.l.b16 %v412
        %v1289 = vunpack.c.h.b16 %v412
        %v1290 = vunpack.c.l.b16 %v413
        %v1291 = vunpack.c.h.b16 %v413
        %v1292 = vunpack.c.l.b16 %v414
        %v1293 = vunpack.c.h.b16 %v414
        %v1294 = vunpack.c.l.b16 %v415
        %v1295 = vunpack.c.h.b16 %v415
        %v1296 = vunpack.c.l.b16 %v416
        %v1297 = vunpack.c.h.b16 %v416
        %v1298 = vunpack.c.l.b16 %v417
        %v1299 = vunpack.c.h.b16 %v417
        %v1300 = vunpack.c.l.b16 %v418
        %v1301 = vunpack.c.h.b16 %v418
        %v1302 = vunpack.c.l.b16 %v419
        %v1303 = vunpack.c.h.b16 %v419
        %v1304 = vunpack.c.l.b16 %v420
        %v1305 = vunpack.c.h.b16 %v420
        %v1306 = vunpack.c.l.b16 %v421
        %v1307 = vunpack.c.h.b16 %v421
        %v1308 = vunpack.c.l.b16 %v422
        %v1309 = vunpack.c.h.b16 %v422
        %v1310 = vunpack.c.l.b16 %v423
        %v1311 = vunpack.c.h.b16 %v423
        %v1312 = vunpack.c.l.b16 %v424
        %v1313 = vunpack.c.h.b16 %v424
        %v1314 = vunpack.c.l.b16 %v425
        %v1315 = vunpack.c.h.b16 %v425
        %v1316 = vunpack.c.l.b16 %v426
        %v1317 = vunpack.c.h.b16 %v426
        %v1318 = vunpack.c.l.b16 %v427
        %v1319 = vunpack.c.h.b16 %v427
        %v1320 = vunpack.c.l.b16 %v428
        %v1321 = vunpack.c.h.b16 %v428
        %v1322 = vunpack.c.l.b16 %v429
        %v1323 = vunpack.c.h.b16 %v429
        %v1324 = vunpack.c.l.b16 %v430
        %v1325 = vunpack.c.h.b16 %v430
        %v1326 = vunpack.c.l.b16 %v431
        %v1327 = vunpack.c.h.b16 %v431
        %v1328 = vunpack.c.l.b16 %v432
        %v1329 = vunpack.c.h.b16 %v432
        %v1330 = vunpack.c.l.b16 %v433
        %v1331 = vunpack.c.h.b16 %v433
        %v1332 = vunpack.c.l.b16 %v434
        %v1333 = vunpack.c.h.b16 %v434
        %v1334 = vunpack.c.l.b16 %v435
        %v1335 = vunpack.c.h.b16 %v435
        %v1336 = vunpack.c.l.b16 %v436
        %v1337 = vunpack.c.h.b16 %v436
        %v1338 = vunpack.c.l.b16 %v437
        %v1339 = vunpack.c.h.b16 %v437
        %v1340 = vunpack.c.l.b16 %v438
        %v1341 = vunpack.c.h.b16 %v438
        %v1342 = vunpack.c.l.b16 %v439
        %v1343 = vunpack.c.h.b16 %v439
        %v1344 = vunpack.c.l.b16 %v440
        %v1345 = vunpack.c.h.b16 %v440
        %v1346 = vunpack.c.l.b16 %v441
        %v1347 = vunpack.c.h.b16 %v441
        %v1348 = vunpack.c.l.b16 %v442
        %v1349 = vunpack.c.h.b16 %v442
        %v1350 = vunpack.c.l.b16 %v443
        %v1351 = vunpack.c.h.b16 %v443
        %v1352 = vunpack.c.l.b16 %v444
        %v1353 = vunpack.c.h.b16 %v444
        %v1354 = vunpack.c.l.b16 %v445
        %v1355 = vunpack.c.h.b16 %v445
        %v1356 = vunpack.c.l.b16 %v446
        %v1357 = vunpack.c.h.b16 %v446
        %v1358 = vunpack.c.l.b16 %v447
        %v1359 = vunpack.c.h.b16 %v447
        %v1360 = vunpack.c.l.b16 %v448
        %v1361 = vunpack.c.h.b16 %v448
        %v1362 = vunpack.c.l.b16 %v449
        %v1363 = vunpack.c.h.b16 %v449
        %v1364 = vunpack.c.l.b16 %v450
        %v1365 = vunpack.c.h.b16 %v450
        %v1366 = vunpack.c.l.b16 %v451
        %v1367 = vunpack.c.h.b16 %v451
        %v1368 = vunpack.c.l.b16 %v452
        %v1369 = vunpack.c.h.b16 %v452
        %v1370 = vunpack.c.l.b16 %v453
        %v1371 = vunpack.c.h.b16 %v453
        %v1372 = vunpack.c.l.b16 %v454
        %v1373 = vunpack.c.h.b16 %v454
        %v1374 = vunpack.c.l.b16 %v455
        %v1375 = vunpack.c.h.b16 %v455
        %v1376 = vunpack.c.l.b16 %v456
        %v1377 = vunpack.c.h.b16 %v456
        %v1378 = vunpack.c.l.b16 %v457
        %v1379 = vunpack.c.h.b16 %v457
        %v1380 = vunpack.c.l.b16 %v458
        %v1381 = vunpack.c.h.b16 %v458
        %v1382 = vunpack.c.l.b16 %v459
        %v1383 = vunpack.c.h.b16 %v459
        %v1384 = vunpack.c.l.b16 %v460
        %v1385 = vunpack.c.h.b16 %v460
        %v1386 = vunpack.c.l.b16 %v461
        %v1387 = vunpack.c.h.b16 %v461
        %v1388 = vunpack.c.l.b16 %v462
        %v1389 = vunpack.c.h.b16 %v462
        %v1390 = vunpack.c.l.b16 %v463
        %v1391 = vunpack.c.h.b16 %v463
        %v1392 = vunpack.c.l.b16 %v464
        %v1393 = vunpack.c.h.b16 %v464
        %v1394 = vunpack.c.l.b16 %v465
        %v1395 = vunpack.c.h.b16 %v465
        %v1396 = vunpack.c.l.b16 %v466
        %v1397 = vunpack.c.h.b16 %v466
        %v1398 = vunpack.c.l.b16 %v467
        %v1399 = vunpack.c.h.b16 %v467
        %v1400 = vunpack.c.l.b16 %v468
        %v1401 = vunpack.c.h.b16 %v468
        %v1402 = vunpack.c.l.b16 %v469
        %v1403 = vunpack.c.h.b16 %v469
        %v1404 = vunpack.c.l.b16 %v470
        %v1405 = vunpack.c.h.b16 %v470
        %v1406 = vunpack.c.l.b16 %v471
        %v1407 = vunpack.c.h.b16 %v471
        %v1408 = vunpack.c.l.b16 %v472
        %v1409 = vunpack.c.h.b16 %v472
        %v1410 = vunpack.c.l.b16 %v473
        %v1411 = vunpack.c.h.b16 %v473
        %v1412 = vunpack.c.l.b16 %v474
        %v1413 = vunpack.c.h.b16 %v474
        %v1414 = vunpack.c.l.b16 %v475
        %v1415 = vunpack.c.h.b16 %v475
        %v1416 = vunpack.c.l.b16 %v476
        %v1417 = vunpack.c.h.b16 %v476
        %v1418 = vunpack.c.l.b16 %v477
        %v1419 = vunpack.c.h.b16 %v477
        %v1420 = vunpack.c.l.b16 %v478
        %v1421 = vunpack.c.h.b16 %v478
        %v1422 = vunpack.c.l.b16 %v479
        %v1423 = vunpack.c.h.b16 %v479
        %v1424 = vunpack.c.l.b16 %v480
        %v1425 = vunpack.c.h.b16 %v480
        %v1426 = vunpack.c.l.b16 %v481
        %v1427 = vunpack.c.h.b16 %v481
        %v1428 = vunpack.c.l.b16 %v482
        %v1429 = vunpack.c.h.b16 %v482
        %v1430 = vunpack.c.l.b16 %v483
        %v1431 = vunpack.c.h.b16 %v483
        %v1432 = vunpack.c.l.b16 %v484
        %v1433 = vunpack.c.h.b16 %v484
        %v1434 = vunpack.c.l.b16 %v485
        %v1435 = vunpack.c.h.b16 %v485
        %v1436 = vunpack.c.l.b16 %v486
        %v1437 = vunpack.c.h.b16 %v486
        %v1438 = vunpack.c.l.b16 %v487
        %v1439 = vunpack.c.h.b16 %v487
        %v1440 = vunpack.c.l.b16 %v488
        %v1441 = vunpack.c.h.b16 %v488
        %v1442 = vunpack.c.l.b16 %v489
        %v1443 = vunpack.c.h.b16 %v489
        %v1444 = vunpack.c.l.b16 %v490
        %v1445 = vunpack.c.h.b16 %v490
        %v1446 = vunpack.c.l.b16 %v491
        %v1447 = vunpack.c.h.b16 %v491
        %v1448 = vunpack.c.l.b16 %v492
        %v1449 = vunpack.c.h.b16 %v492
        %v1450 = vunpack.c.l.b16 %v493
        %v1451 = vunpack.c.h.b16 %v493
        %v1452 = vunpack.c.l.b16 %v494
        %v1453 = vunpack.c.h.b16 %v494
        %v1454 = vunpack.c.l.b16 %v495
        %v1455 = vunpack.c.h.b16 %v495
        %v1456 = vunpack.c.l.b16 %v496
        %v1457 = vunpack.c.h.b16 %v496
        %v1458 = vunpack.c.l.b16 %v497
        %v1459 = vunpack.c.h.b16 %v497
        %v1460 = vunpack.c.l.b16 %v498
        %v1461 = vunpack.c.h.b16 %v498
        %v1462 = vunpack.c.l.b16 %v499
        %v1463 = vunpack.c.h.b16 %v499
        %v1464 = vunpack.c.l.b16 %v500
        %v1465 = vunpack.c.h.b16 %v500
        %v1466 = vunpack.c.l.b16 %v501
        %v1467 = vunpack.c.h.b16 %v501
        %v1468 = vunpack.c.l.b16 %v502
        %v1469 = vunpack.c.h.b16 %v502
        %v1470 = vunpack.c.l.b16 %v503
        %v1471 = vunpack.c.h.b16 %v503
        %v1472 = vunpack.c.l.b16 %v504
        %v1473 = vunpack.c.h.b16 %v504
        %v1474 = vunpack.c.l.b16 %v505
        %v1475 = vunpack.c.h.b16 %v505
        %v1476 = vunpack.c.l.b16 %v506
        %v1477 = vunpack.c.h.b16 %v506
        %v1478 = vunpack.c.l.b16 %v507
        %v1479 = vunpack.c.h.b16 %v507
        %v1480 = vunpack.c.l.b16 %v508
        %v1481 = vunpack.c.h.b16 %v508
        %v1482 = vunpack.c.l.b16 %v509
        %v1483 = vunpack.c.h.b16 %v509
        %v1484 = vunpack.c.l.b16 %v510
        %v1485 = vunpack.c.h.b16 %v510
        %v1486 = vunpack.c.l.b16 %v511
        %v1487 = vunpack.c.h.b16 %v511
        %v1488 = vunpack.c.l.b16 %v512
        %v1489 = vunpack.c.h.b16 %v512
        %v1490 = vunpack.c.l.b16 %v513
        %v1491 = vunpack.c.h.b16 %v513
        %v1492 = vunpack.c.l.b16 %v514
        %v1493 = vunpack.c.h.b16 %v514
        %v1494 = vunpack.c.l.b16 %v515
        %v1495 = vunpack.c.h.b16 %v515
        %v1496 = vunpack.c.l.b16 %v516
        %v1497 = vunpack.c.h.b16 %v516
        %v1498 = vunpack.c.l.b16 %v517
        %v1499 = vunpack.c.h.b16 %v517
        %v1500 = vunpack.c.l.b16 %v518
        %v1501 = vunpack.c.h.b16 %v518
        %v1502 = vunpack.c.l.b16 %v519
        %v1503 = vunpack.c.h.b16 %v519
        %v1504 = vunpack.c.l.b16 %v520
        %v1505 = vunpack.c.h.b16 %v520
        %v1506 = vunpack.c.l.b16 %v521
        %v1507 = vunpack.c.h.b16 %v521
        %v1508 = vunpack.c.l.b16 %v522
        %v1509 = vunpack.c.h.b16 %v522
        %v1510 = vunpack.c.l.b16 %v523
        %v1511 = vunpack.c.h.b16 %v523
        %v1512 = vunpack.c.l.b16 %v524
        %v1513 = vunpack.c.h.b16 %v524
        %v1514 = vunpack.c.l.b16 %v525
        %v1515 = vunpack.c.h.b16 %v525
        %v1516 = vunpack.c.l.b16 %v526
        %v1517 = vunpack.c.h.b16 %v526
        %v1518 = vunpack.c.l.b16 %v527
        %v1519 = vunpack.c.h.b16 %v527
        %v1520 = vunpack.c.l.b16 %v528
        %v1521 = vunpack.c.h.b16 %v528
        %v1522 = vunpack.c.l.b16 %v529
        %v1523 = vunpack.c.h.b16 %v529
        %v1524 = vunpack.c.l.b16 %v530
        %v1525 = vunpack.c.h.b16 %v530
        %v1526 = vunpack.c.l.b16 %v531
        %v1527 = vunpack.c.h.b16 %v531
        %v1528 = vunpack.c.l.b16 %v532
        %v1529 = vunpack.c.h.b16 %v532
        %v1530 = vunpack.c.l.b16 %v533
        %v1531 = vunpack.c.h.b16 %v533
        %v1532 = vunpack.c.l.b16 %v534
        %v1533 = vunpack.c.h.b16 %v534
        %v1534 = vunpack.c.l.b16 %v535
        %v1535 = vunpack.c.h.b16 %v535
        %v1536 = vunpack.c.l.b16 %v536
        %v1537 = vunpack.c.h.b16 %v536
        %v1538 = vunpack.c.l.b16 %v537
        %v1539 = vunpack.c.h.b16 %v537
        %v1540 = vunpack.c.l.b16 %v538
        %v1541 = vunpack.c.h.b16 %v538
        %v1542 = vunpack.c.l.b16 %v539
        %v1543 = vunpack.c.h.b16 %v539
        %v1544 = vunpack.c.l.b16 %v540
        %v1545 = vunpack.c.h.b16 %v540
        %v1546 = vunpack.c.l.b16 %v541
        %v1547 = vunpack.c.h.b16 %v541
        %v1548 = vunpack.c.l.b16 %v542
        %v1549 = vunpack.c.h.b16 %v542
        %v1550 = vunpack.c.l.b16 %v543
        %v1551 = vunpack.c.h.b16 %v543
        %v1552 = vunpack.c.l.b16 %v544
        %v1553 = vunpack.c.h.b16 %v544
        %v1554 = vunpack.c.l.b16 %v545
        %v1555 = vunpack.c.h.b16 %v545
        %v1556 = vunpack.c.l.b16 %v546
        %v1557 = vunpack.c.h.b16 %v546
        %v1558 = vunpack.c.l.b16 %v547
        %v1559 = vunpack.c.h.b16 %v547
        %v1560 = vunpack.c.l.b16 %v548
        %v1561 = vunpack.c.h.b16 %v548
        %v1562 = vunpack.c.l.b16 %v549
        %v1563 = vunpack.c.h.b16 %v549
        %v1564 = vunpack.c.l.b16 %v550
        %v1565 = vunpack.c.h.b16 %v550
        %v1566 = vunpack.c.l.b16 %v551
        %v1567 = vunpack.c.h.b16 %v551
        %v1568 = vunpack.c.l.b16 %v552
        %v1569 = vunpack.c.h.b16 %v552
        %v1570 = vunpack.c.l.b16 %v553
        %v1571 = vunpack.c.h.b16 %v553
        %v1572 = vunpack.c.l.b16 %v554
        %v1573 = vunpack.c.h.b16 %v554
        %v1574 = vunpack.c.l.b16 %v555
        %v1575 = vunpack.c.h.b16 %v555
        %v1576 = vunpack.c.l.b16 %v556
        %v1577 = vunpack.c.h.b16 %v556
        %v1578 = vunpack.c.l.b16 %v557
        %v1579 = vunpack.c.h.b16 %v557
        %v1580 = vunpack.c.l.b16 %v558
        %v1581 = vunpack.c.h.b16 %v558
        %v1582 = vunpack.c.l.b16 %v559
        %v1583 = vunpack.c.h.b16 %v559
        %v1584 = vunpack.c.l.b16 %v560
        %v1585 = vunpack.c.h.b16 %v560
        %v1586 = vunpack.c.l.b16 %v561
        %v1587 = vunpack.c.h.b16 %v561
        %v1588 = vunpack.c.l.b16 %v562
        %v1589 = vunpack.c.h.b16 %v562
        %v1590 = vunpack.c.l.b16 %v563
        %v1591 = vunpack.c.h.b16 %v563
        %v1592 = vunpack.c.l.b16 %v564
        %v1593 = vunpack.c.h.b16 %v564
        %v1594 = vunpack.c.l.b16 %v565
        %v1595 = vunpack.c.h.b16 %v565
        %v1596 = vunpack.c.l.b16 %v566
        %v1597 = vunpack.c.h.b16 %v566
        %v1598 = vunpack.c.l.b16 %v567
        %v1599 = vunpack.c.h.b16 %v567
        %v1600 = vunpack.c.l.b16 %v568
        %v1601 = vunpack.c.h.b16 %v568
        %v1602 = vunpack.c.l.b16 %v569
        %v1603 = vunpack.c.h.b16 %v569
        %v1604 = vunpack.c.l.b16 %v570
        %v1605 = vunpack.c.h.b16 %v570
        %v1606 = vunpack.c.l.b16 %v571
        %v1607 = vunpack.c.h.b16 %v571
        %v1608 = vunpack.c.l.b16 %v572
        %v1609 = vunpack.c.h.b16 %v572
        %v1610 = vunpack.c.l.b16 %v573
        %v1611 = vunpack.c.h.b16 %v573
        %v1612 = vunpack.c.l.b16 %v574
        %v1613 = vunpack.c.h.b16 %v574
        %v1614 = vunpack.c.l.b16 %v575
        %v1615 = vunpack.c.h.b16 %v575
        %v1616 = vunpack.c.l.b16 %v576
        %v1617 = vunpack.c.h.b16 %v576
        %v1618 = vunpack.c.l.b16 %v577
        %v1619 = vunpack.c.h.b16 %v577
        %v1620 = vunpack.c.l.b16 %v578
        %v1621 = vunpack.c.h.b16 %v578
        %v1622 = vunpack.c.l.b16 %v579
        %v1623 = vunpack.c.h.b16 %v579
        %v1624 = vunpack.c.l.b16 %v580
        %v1625 = vunpack.c.h.b16 %v580
        %v1626 = vunpack.c.l.b16 %v581
        %v1627 = vunpack.c.h.b16 %v581
        %v1628 = vunpack.c.l.b16 %v582
        %v1629 = vunpack.c.h.b16 %v582
        %v1630 = vunpack.c.l.b16 %v583
        %v1631 = vunpack.c.h.b16 %v583
        %v1632 = vunpack.c.l.b16 %v584
        %v1633 = vunpack.c.h.b16 %v584
        %v1634 = vunpack.c.l.b16 %v585
        %v1635 = vunpack.c.h.b16 %v585
        %v1636 = vunpack.c.l.b16 %v586
        %v1637 = vunpack.c.h.b16 %v586
        %v1638 = vunpack.c.l.b16 %v587
        %v1639 = vunpack.c.h.b16 %v587
        %v1640 = vunpack.c.l.b16 %v588
        %v1641 = vunpack.c.h.b16 %v588
        %v1642 = vunpack.c.l.b16 %v589
        %v1643 = vunpack.c.h.b16 %v589
        %v1644 = vunpack.c.l.b16 %v590
        %v1645 = vunpack.c.h.b16 %v590
        %v1646 = vunpack.c.l.b16 %v591
        %v1647 = vunpack.c.h.b16 %v591
        %v1648 = vunpack.c.l.b16 %v592
        %v1649 = vunpack.c.h.b16 %v592
        %v1650 = vunpack.c.l.b16 %v593
        %v1651 = vunpack.c.h.b16 %v593
        %v1652 = vunpack.c.l.b16 %v594
        %v1653 = vunpack.c.h.b16 %v594
        %v1654 = vunpack.c.l.b16 %v595
        %v1655 = vunpack.c.h.b16 %v595
        %v1656 = vunpack.c.l.b16 %v596
        %v1657 = vunpack.c.h.b16 %v596
        %v1658 = vunpack.c.l.b16 %v597
        %v1659 = vunpack.c.h.b16 %v597
        %v1660 = vunpack.c.l.b16 %v598
        %v1661 = vunpack.c.h.b16 %v598
        %v1662 = vunpack.c.l.b16 %v599
        %v1663 = vunpack.c.h.b16 %v599
        %v1664 = vunpack.c.l.b16 %v600
        %v1665 = vunpack.c.h.b16 %v600
        %v1666 = vunpack.c.l.b16 %v601
        %v1667 = vunpack.c.h.b16 %v601
        %v1668 = vunpack.c.l.b16 %v602
        %v1669 = vunpack.c.h.b16 %v602
        %v1670 = vunpack.c.l.b16 %v603
        %v1671 = vunpack.c.h.b16 %v603
        %v1672 = vunpack.c.l.b16 %v604
        %v1673 = vunpack.c.h.b16 %v604
        %v1674 = vunpack.c.l.b16 %v605
        %v1675 = vunpack.c.h.b16 %v605
        %v1676 = vunpack.c.l.b16 %v606
        %v1677 = vunpack.c.h.b16 %v606
        %v1678 = vunpack.c.l.b16 %v607
        %v1679 = vunpack.c.h.b16 %v607
        %v1680 = vunpack.c.l.b16 %v608
        %v1681 = vunpack.c.h.b16 %v608
        %v1682 = vunpack.c.l.b16 %v609
        %v1683 = vunpack.c.h.b16 %v609
        %v1684 = vunpack.c.l.b16 %v610
        %v1685 = vunpack.c.h.b16 %v610
        %v1686 = vunpack.c.l.b16 %v611
        %v1687 = vunpack.c.h.b16 %v611
        %v1688 = vunpack.c.l.b16 %v612
        %v1689 = vunpack.c.h.b16 %v612
        %v1690 = vunpack.c.l.b16 %v613
        %v1691 = vunpack.c.h.b16 %v613
        %v1692 = vunpack.c.l.b16 %v614
        %v1693 = vunpack.c.h.b16 %v614
        %v1694 = vunpack.c.l.b16 %v615
        %v1695 = vunpack.c.h.b16 %v615
        %v1696 = vunpack.c.l.b16 %v616
        %v1697 = vunpack.c.h.b16 %v616
        %v1698 = vunpack.c.l.b16 %v617
        %v1699 = vunpack.c.h.b16 %v617
        %v1700 = vunpack.c.l.b16 %v618
        %v1701 = vunpack.c.h.b16 %v618
        %v1702 = vunpack.c.l.b16 %v619
        %v1703 = vunpack.c.h.b16 %v619
        %v1704 = vunpack.c.l.b16 %v620
        %v1705 = vunpack.c.h.b16 %v620
        %v1706 = vunpack.c.l.b16 %v621
        %v1707 = vunpack.c.h.b16 %v621
        %v1708 = vunpack.c.l.b16 %v622
        %v1709 = vunpack.c.h.b16 %v622
        %v1710 = vunpack.c.l.b16 %v623
        %v1711 = vunpack.c.h.b16 %v623
        %v1712 = vunpack.c.l.b16 %v624
        %v1713 = vunpack.c.h.b16 %v624
        %v1714 = vunpack.c.l.b16 %v625
        %v1715 = vunpack.c.h.b16 %v625
        %v1716 = vunpack.c.l.b16 %v626
        %v1717 = vunpack.c.h.b16 %v626
        %v1718 = vunpack.c.l.b16 %v627
        %v1719 = vunpack.c.h.b16 %v627
        %v1720 = vunpack.c.l.b16 %v628
        %v1721 = vunpack.c.h.b16 %v628
        %v1722 = vunpack.c.l.b16 %v629
        %v1723 = vunpack.c.h.b16 %v629
        %v1724 = vunpack.c.l.b16 %v630
        %v1725 = vunpack.c.h.b16 %v630
        %v1726 = vunpack.c.l.b16 %v631
        %v1727 = vunpack.c.h.b16 %v631
        %v1728 = vunpack.c.l.b16 %v632
        %v1729 = vunpack.c.h.b16 %v632
        %v1730 = vunpack.c.l.b16 %v633
        %v1731 = vunpack.c.h.b16 %v633
        %v1732 = vunpack.c.l.b16 %v634
        %v1733 = vunpack.c.h.b16 %v634
        %v1734 = vunpack.c.l.b16 %v635
        %v1735 = vunpack.c.h.b16 %v635
        %v1736 = vunpack.c.l.b16 %v636
        %v1737 = vunpack.c.h.b16 %v636
        %v1738 = vunpack.c.l.b16 %v637
        %v1739 = vunpack.c.h.b16 %v637
        %v1740 = vunpack.c.l.b16 %v638
        %v1741 = vunpack.c.h.b16 %v638
        %v1742 = vunpack.c.l.b16 %v639
        %v1743 = vunpack.c.h.b16 %v639
        %v1744 = vunpack.c.l.b16 %v640
        %v1745 = vunpack.c.h.b16 %v640
        %v1746 = vunpack.c.l.b16 %v641
        %v1747 = vunpack.c.h.b16 %v641
        %v1748 = vunpack.c.l.b16 %v642
        %v1749 = vunpack.c.h.b16 %v642
        %v1750 = vunpack.c.l.b16 %v643
        %v1751 = vunpack.c.h.b16 %v643
        %v1752 = vunpack.c.l.b16 %v644
        %v1753 = vunpack.c.h.b16 %v644
        %v1754 = vunpack.c.l.b16 %v645
        %v1755 = vunpack.c.h.b16 %v645
        %v1756 = vunpack.c.l.b16 %v646
        %v1757 = vunpack.c.h.b16 %v646
        %v1758 = vunpack.c.l.b16 %v647
        %v1759 = vunpack.c.h.b16 %v647
        %v1760 = vunpack.c.l.b16 %v648
        %v1761 = vunpack.c.h.b16 %v648
        %v1762 = vunpack.c.l.b16 %v649
        %v1763 = vunpack.c.h.b16 %v649
        %v1764 = vunpack.c.l.b16 %v650
        %v1765 = vunpack.c.h.b16 %v650
        %v1766 = vunpack.c.l.b16 %v651
        %v1767 = vunpack.c.h.b16 %v651
        %v1768 = vunpack.c.l.b16 %v652
        %v1769 = vunpack.c.h.b16 %v652
        %v1770 = vunpack.c.l.b16 %v653
        %v1771 = vunpack.c.h.b16 %v653
        %v1772 = vunpack.c.l.b16 %v654
        %v1773 = vunpack.c.h.b16 %v654
        %v1774 = vunpack.c.l.b16 %v655
        %v1775 = vunpack.c.h.b16 %v655
        %v1776 = vunpack.c.l.b16 %v656
        %v1777 = vunpack.c.h.b16 %v656
        %v1778 = vunpack.c.l.b16 %v657
        %v1779 = vunpack.c.h.b16 %v657
        %v1780 = vunpack.c.l.b16 %v658
        %v1781 = vunpack.c.h.b16 %v658
        %v1782 = vunpack.c.l.b16 %v659
        %v1783 = vunpack.c.h.b16 %v659
        %v1784 = vunpack.c.l.b16 %v660
        %v1785 = vunpack.c.h.b16 %v660
        %v1786 = vunpack.c.l.b16 %v661
        %v1787 = vunpack.c.h.b16 %v661
        %v1788 = vunpack.c.l.b16 %v662
        %v1789 = vunpack.c.h.b16 %v662
        %v1790 = vunpack.c.l.b16 %v663
        %v1791 = vunpack.c.h.b16 %v663
        %v1792 = vunpack.c.l.b16 %v664
        %v1793 = vunpack.c.h.b16 %v664
        %v1794 = vunpack.c.l.b16 %v665
        %v1795 = vunpack.c.h.b16 %v665
        %v1796 = vunpack.c.l.b16 %v666
        %v1797 = vunpack.c.h.b16 %v666
        %v1798 = vunpack.c.l.b16 %v667
        %v1799 = vunpack.c.h.b16 %v667
        %v1800 = vunpack.c.l.b16 %v668
        %v1801 = vunpack.c.h.b16 %v668
        %v1802 = vunpack.c.l.b16 %v669
        %v1803 = vunpack.c.h.b16 %v669
        %v1804 = vunpack.c.l.b16 %v670
        %v1805 = vunpack.c.h.b16 %v670
        %v1806 = vunpack.c.l.b16 %v671
        %v1807 = vunpack.c.h.b16 %v671
        %v1808 = vunpack.c.l.b16 %v672
        %v1809 = vunpack.c.h.b16 %v672
        %v1810 = vunpack.c.l.b16 %v673
        %v1811 = vunpack.c.h.b16 %v673
        %v1812 = vunpack.c.l.b16 %v674
        %v1813 = vunpack.c.h.b16 %v674
        %v1814 = vunpack.c.l.b16 %v675
        %v1815 = vunpack.c.h.b16 %v675
        %v1816 = vunpack.c.l.b16 %v676
        %v1817 = vunpack.c.h.b16 %v676
        %v1818 = vunpack.c.l.b16 %v677
        %v1819 = vunpack.c.h.b16 %v677
        %v1820 = vunpack.c.l.b16 %v678
        %v1821 = vunpack.c.h.b16 %v678
        %v1822 = vunpack.c.l.b16 %v679
        %v1823 = vunpack.c.h.b16 %v679
        %v1824 = vunpack.c.l.b16 %v680
        %v1825 = vunpack.c.h.b16 %v680
        %v1826 = vunpack.c.l.b16 %v681
        %v1827 = vunpack.c.h.b16 %v681
        %v1828 = vunpack.c.l.b16 %v682
        %v1829 = vunpack.c.h.b16 %v682
        %v1830 = vunpack.c.l.b16 %v683
        %v1831 = vunpack.c.h.b16 %v683
        %v1832 = vunpack.c.l.b16 %v684
        %v1833 = vunpack.c.h.b16 %v684
        %v1834 = vunpack.c.l.b16 %v685
        %v1835 = vunpack.c.h.b16 %v685
        %v1836 = vunpack.c.l.b16 %v686
        %v1837 = vunpack.c.h.b16 %v686
        %v1838 = vunpack.c.l.b16 %v687
        %v1839 = vunpack.c.h.b16 %v687
        %v1840 = vunpack.c.l.b16 %v688
        %v1841 = vunpack.c.h.b16 %v688
        %v1842 = vunpack.c.l.b16 %v689
        %v1843 = vunpack.c.h.b16 %v689
        %v1844 = vunpack.c.l.b16 %v690
        %v1845 = vunpack.c.h.b16 %v690
        %v1846 = vunpack.c.l.b16 %v691
        %v1847 = vunpack.c.h.b16 %v691
        %v1848 = vunpack.c.l.b16 %v692
        %v1849 = vunpack.c.h.b16 %v692
        %v1850 = vunpack.c.l.b16 %v693
        %v1851 = vunpack.c.h.b16 %v693
        %v1852 = vunpack.c.l.b16 %v694
        %v1853 = vunpack.c.h.b16 %v694
        %v1854 = vunpack.c.l.b16 %v695
        %v1855 = vunpack.c.h.b16 %v695
        %v1856 = vunpack.c.l.b16 %v696
        %v1857 = vunpack.c.h.b16 %v696
        %v1858 = vunpack.c.l.b16 %v697
        %v1859 = vunpack.c.h.b16 %v697
        %v1860 = vunpack.c.l.b16 %v698
        %v1861 = vunpack.c.h.b16 %v698
        %v1862 = vunpack.c.l.b16 %v699
        %v1863 = vunpack.c.h.b16 %v699
        %v1864 = vunpack.c.l.b16 %v700
        %v1865 = vunpack.c.h.b16 %v700
        %v1866 = vunpack.c.l.b16 %v701
        %v1867 = vunpack.c.h.b16 %v701
        %v1868 = vunpack.c.l.b16 %v702
        %v1869 = vunpack.c.h.b16 %v702
        %v1870 = vunpack.c.l.b16 %v703
        %v1871 = vunpack.c.h.b16 %v703
        %v1872 = vunpack.c.l.b16 %v704
        %v1873 = vunpack.c.h.b16 %v704
        %v1874 = vunpack.c.l.b16 %v705
        %v1875 = vunpack.c.h.b16 %v705
        %v1876 = vunpack.c.l.b16 %v706
        %v1877 = vunpack.c.h.b16 %v706
        %v1878 = vunpack.c.l.b16 %v707
        %v1879 = vunpack.c.h.b16 %v707
        %v1880 = vunpack.c.l.b16 %v708
        %v1881 = vunpack.c.h.b16 %v708
        %v1882 = vunpack.c.l.b16 %v709
        %v1883 = vunpack.c.h.b16 %v709
        %v1884 = vunpack.c.l.b16 %v710
        %v1885 = vunpack.c.h.b16 %v710
        %v1886 = vunpack.c.l.b16 %v711
        %v1887 = vunpack.c.h.b16 %v711
        %v1888 = vunpack.c.l.b16 %v712
        %v1889 = vunpack.c.h.b16 %v712
        %v1890 = vunpack.c.l.b16 %v713
        %v1891 = vunpack.c.h.b16 %v713
        %v1892 = vunpack.c.l.b16 %v714
        %v1893 = vunpack.c.h.b16 %v714
        %v1894 = vunpack.c.l.b16 %v715
        %v1895 = vunpack.c.h.b16 %v715
        %v1896 = vunpack.c.l.b16 %v716
        %v1897 = vunpack.c.h.b16 %v716
        %v1898 = vunpack.c.l.b16 %v717
        %v1899 = vunpack.c.h.b16 %v717
        %v1900 = vunpack.c.l.b16 %v718
        %v1901 = vunpack.c.h.b16 %v718
        %v1902 = vunpack.c.l.b16 %v719
        %v1903 = vunpack.c.h.b16 %v719
        %v1904 = vunpack.c.l.b16 %v720
        %v1905 = vunpack.c.h.b16 %v720
        %v1906 = vunpack.c.l.b16 %v721
        %v1907 = vunpack.c.h.b16 %v721
        %v1908 = vunpack.c.l.b16 %v722
        %v1909 = vunpack.c.h.b16 %v722
        %v1910 = vunpack.c.l.b16 %v723
        %v1911 = vunpack.c.h.b16 %v723
        %v1912 = vpack.c.b16 %v1160, %v1144
        %v1913 = vpack.c.b16 %v1161, %v1145
        %v1914 = vpack.c.b16 %v1162, %v1146
        %v1915 = vpack.c.b16 %v1163, %v1147
        %v1916 = vpack.c.b16 %v1164, %v1148
        %v1917 = vpack.c.b16 %v1165, %v1149
        %v1918 = vpack.c.b16 %v1166, %v1150
        %v1919 = vpack.c.b16 %v1167, %v1151
        %v1920 = vpack.c.b16 %v1168, %v1152
        %v1921 = vpack.c.b16 %v1169, %v1153
        %v1922 = vpack.c.b16 %v1170, %v1154
        %v1923 = vpack.c.b16 %v1171, %v1155
        %v1924 = vpack.c.b16 %v1172, %v1156
        %v1925 = vpack.c.b16 %v1173, %v1157
        %v1926 = vpack.c.b16 %v1174, %v1158
        %v1927 = vpack.c.b16 %v1175, %v1159
        %v1928 = vpack.c.b16 %v1192, %v1176
        %v1929 = vpack.c.b16 %v1193, %v1177
        %v1930 = vpack.c.b16 %v1194, %v1178
        %v1931 = vpack.c.b16 %v1195, %v1179
        %v1932 = vpack.c.b16 %v1196, %v1180
        %v1933 = vpack.c.b16 %v1197, %v1181
        %v1934 = vpack.c.b16 %v1198, %v1182
        %v1935 = vpack.c.b16 %v1199, %v1183
        %v1936 = vpack.c.b16 %v1200, %v1184
        %v1937 = vpack.c.b16 %v1201, %v1185
        %v1938 = vpack.c.b16 %v1202, %v1186
        %v1939 = vpack.c.b16 %v1203, %v1187
        %v1940 = vpack.c.b16 %v1204, %v1188
        %v1941 = vpack.c.b16 %v1205, %v1189
        %v1942 = vpack.c.b16 %v1206, %v1190
        %v1943 = vpack.c.b16 %v1207, %v1191
        %v1944 = vpack.c.b16 %v1224, %v1208
        %v1945 = vpack.c.b16 %v1225, %v1209
        %v1946 = vpack.c.b16 %v1226, %v1210
        %v1947 = vpack.c.b16 %v1227, %v1211
        %v1948 = vpack.c.b16 %v1228, %v1212
        %v1949 = vpack.c.b16 %v1229, %v1213
        %v1950 = vpack.c.b16 %v1230, %v1214
        %v1951 = vpack.c.b16 %v1231, %v1215
        %v1952 = vpack.c.b16 %v1232, %v1216
        %v1953 = vpack.c.b16 %v1233, %v1217
        %v1954 = vpack.c.b16 %v1234, %v1218
        %v1955 = vpack.c.b16 %v1235, %v1219
        %v1956 = vpack.c.b16 %v1236, %v1220
        %v1957 = vpack.c.b16 %v1237, %v1221
        %v1958 = vpack.c.b16 %v1238, %v1222
        %v1959 = vpack.c.b16 %v1239, %v1223
        %v1960 = vpack.c.b16 %v1256, %v1240
        %v1961 = vpack.c.b16 %v1257, %v1241
        %v1962 = vpack.c.b16 %v1258, %v1242
        %v1963 = vpack.c.b16 %v1259, %v1243
        %v1964 = vpack.c.b16 %v1260, %v1244
        %v1965 = vpack.c.b16 %v1261, %v1245
        %v1966 = vpack.c.b16 %v1262, %v1246
        %v1967 = vpack.c.b16 %v1263, %v1247
        %v1968 = vpack.c.b16 %v1264, %v1248
        %v1969 = vpack.c.b16 %v1265, %v1249
        %v1970 = vpack.c.b16 %v1266, %v1250
        %v1971 = vpack.c.b16 %v1267, %v1251
        %v1972 = vpack.c.b16 %v1268, %v1252
        %v1973 = vpack.c.b16 %v1269, %v1253
        %v1974 = vpack.c.b16 %v1270, %v1254
        %v1975 = vpack.c.b16 %v1271, %v1255
        %v1976 = vpack.c.b16 %v1288, %v1272
        %v1977 = vpack.c.b16 %v1289, %v1273
        %v1978 = vpack.c.b16 %v1290, %v1274
        %v1979 = vpack.c.b16 %v1291, %v1275
        %v1980 = vpack.c.b16 %v1292, %v1276
        %v1981 = vpack.c.b16 %v1293, %v1277
        %v1982 = vpack.c.b16 %v1294, %v1278
        %v1983 = vpack.c.b16 %v1295, %v1279
        %v1984 = vpack.c.b16 %v1296, %v1280
        %v1985 = vpack.c.b16 %v1297, %v1281
        %v1986 = vpack.c.b16 %v1298, %v1282
        %v1987 = vpack.c.b16 %v1299, %v1283
        %v1988 = vpack.c.b16 %v1300, %v1284
        %v1989 = vpack.c.b16 %v1301, %v1285
        %v1990 = vpack.c.b16 %v1302, %v1286
        %v1991 = vpack.c.b16 %v1303, %v1287
        %v1992 = vpack.c.b16 %v1320, %v1304
        %v1993 = vpack.c.b16 %v1321, %v1305
        %v1994 = vpack.c.b16 %v1322, %v1306
        %v1995 = vpack.c.b16 %v1323, %v1307
        %v1996 = vpack.c.b16 %v1324, %v1308
        %v1997 = vpack.c.b16 %v1325, %v1309
        %v1998 = vpack.c.b16 %v1326, %v1310
        %v1999 = vpack.c.b16 %v1327, %v1311
        %v2000 = vpack.c.b16 %v1328, %v1312
        %v2001 = vpack.c.b16 %v1329, %v1313
        %v2002 = vpack.c.b16 %v1330, %v1314
        %v2003 = vpack.c.b16 %v1331, %v1315
        %v2004 = vpack.c.b16 %v1332, %v1316
        %v2005 = vpack.c.b16 %v1333, %v1317
        %v2006 = vpack.c.b16 %v1334, %v1318
        %v2007 = vpack.c.b16 %v1335, %v1319
        %v2008 = vpack.c.b16 %v1352, %v1336
        %v2009 = vpack.c.b16 %v1353, %v1337
        %v2010 = vpack.c.b16 %v1354, %v1338
        %v2011 = vpack.c.b16 %v1355, %v1339
        %v2012 = vpack.c.b16 %v1356, %v1340
        %v2013 = vpack.c.b16 %v1357, %v1341
        %v2014 = vpack.c.b16 %v1358, %v1342
        %v2015 = vpack.c.b16 %v1359, %v1343
        %v2016 = vpack.c.b16 %v1360, %v1344
        %v2017 = vpack.c.b16 %v1361, %v1345
        %v2018 = vpack.c.b16 %v1362, %v1346
        %v2019 = vpack.c.b16 %v1363, %v1347
        %v2020 = vpack.c.b16 %v1364, %v1348
        %v2021 = vpack.c.b16 %v1365, %v1349
        %v2022 = vpack.c.b16 %v1366, %v1350
        %v2023 = vpack.c.b16 %v1367, %v1351
        %v2024 = vpack.c.b16 %v1384, %v1368
        %v2025 = vpack.c.b16 %v1385, %v1369
        %v2026 = vpack.c.b16 %v1386, %v1370
        %v2027 = vpack.c.b16 %v1387, %v1371
        %v2028 = vpack.c.b16 %v1388, %v1372
        %v2029 = vpack.c.b16 %v1389, %v1373
        %v2030 = vpack.c.b16 %v1390, %v1374
        %v2031 = vpack.c.b16 %v1391, %v1375
        %v2032 = vpack.c.b16 %v1392, %v1376
        %v2033 = vpack.c.b16 %v1393, %v1377
        %v2034 = vpack.c.b16 %v1394, %v1378
        %v2035 = vpack.c.b16 %v1395, %v1379
        %v2036 = vpack.c.b16 %v1396, %v1380
        %v2037 = vpack.c.b16 %v1397, %v1381
        %v2038 = vpack.c.b16 %v1398, %v1382
        %v2039 = vpack.c.b16 %v1399, %v1383
        %v2040 = vpack.c.b16 %v1416, %v1400
        %v2041 = vpack.c.b16 %v1417, %v1401
        %v2042 = vpack.c.b16 %v1418, %v1402
        %v2043 = vpack.c.b16 %v1419, %v1403
        %v2044 = vpack.c.b16 %v1420, %v1404
        %v2045 = vpack.c.b16 %v1421, %v1405
        %v2046 = vpack.c.b16 %v1422, %v1406
        %v2047 = vpack.c.b16 %v1423, %v1407
        %v2048 = vpack.c.b16 %v1424, %v1408
        %v2049 = vpack.c.b16 %v1425, %v1409
        %v2050 = vpack.c.b16 %v1426, %v1410
        %v2051 = vpack.c.b16 %v1427, %v1411
        %v2052 = vpack.c.b16 %v1428, %v1412
        %v2053 = vpack.c.b16 %v1429, %v1413
        %v2054 = vpack.c.b16 %v1430, %v1414
        %v2055 = vpack.c.b16 %v1431, %v1415
        %v2056 = vpack.c.b16 %v1448, %v1432
        %v2057 = vpack.c.b16 %v1449, %v1433
        %v2058 = vpack.c.b16 %v1450, %v1434
        %v2059 = vpack.c.b16 %v1451, %v1435
        %v2060 = vpack.c.b16 %v1452, %v1436
        %v2061 = vpack.c.b16 %v1453, %v1437
        %v2062 = vpack.c.b16 %v1454, %v1438
        %v2063 = vpack.c.b16 %v1455, %v1439
        %v2064 = vpack.c.b16 %v1456, %v1440
        %v2065 = vpack.c.b16 %v1457, %v1441
        %v2066 = vpack.c.b16 %v1458, %v1442
        %v2067 = vpack.c.b16 %v1459, %v1443
        %v2068 = vpack.c.b16 %v1460, %v1444
        %v2069 = vpack.c.b16 %v1461, %v1445
        %v2070 = vpack.c.b16 %v1462, %v1446
        %v2071 = vpack.c.b16 %v1463, %v1447
        %v2072 = vpack.c.b16 %v1480, %v1464
        %v2073 = vpack.c.b16 %v1481, %v1465
        %v2074 = vpack.c.b16 %v1482, %v1466
        %v2075 = vpack.c.b16 %v1483, %v1467
        %v2076 = vpack.c.b16 %v1484, %v1468
        %v2077 = vpack.c.b16 %v1485, %v1469
        %v2078 = vpack.c.b16 %v1486, %v1470
        %v2079 = vpack.c.b16 %v1487, %v1471
        %v2080 = vpack.c.b16 %v1488, %v1472
        %v2081 = vpack.c.b16 %v1489, %v1473
        %v2082 = vpack.c.b16 %v1490, %v1474
        %v2083 = vpack.c.b16 %v1491, %v1475
        %v2084 = vpack.c.b16 %v1492, %v1476
        %v2085 = vpack.c.b16 %v1493, %v1477
        %v2086 = vpack.c.b16 %v1494, %v1478
        %v2087 = vpack.c.b16 %v1495, %v1479
        %v2088 = vpack.c.b16 %v1512, %v1496
        %v2089 = vpack.c.b16 %v1513, %v1497
        %v2090 = vpack.c.b16 %v1514, %v1498
        %v2091 = vpack.c.b16 %v1515, %v1499
        %v2092 = vpack.c.b16 %v1516, %v1500
        %v2093 = vpack.c.b16 %v1517, %v1501
        %v2094 = vpack.c.b16 %v1518, %v1502
        %v2095 = vpack.c.b16 %v1519, %v1503
        %v2096 = vpack.c.b16 %v1520, %v1504
        %v2097 = vpack.c.b16 %v1521, %v1505
        %v2098 = vpack.c.b16 %v1522, %v1506
        %v2099 = vpack.c.b16 %v1523, %v1507
        %v2100 = vpack.c.b16 %v1524, %v1508
        %v2101 = vpack.c.b16 %v1525, %v1509
        %v2102 = vpack.c.b16 %v1526, %v1510
        %v2103 = vpack.c.b16 %v1527, %v1511
        %v2104 = vpack.c.b16 %v1544, %v1528
        %v2105 = vpack.c.b16 %v1545, %v1529
        %v2106 = vpack.c.b16 %v1546, %v1530
        %v2107 = vpack.c.b16 %v1547, %v1531
        %v2108 = vpack.c.b16 %v1548, %v1532
        %v2109 = vpack.c.b16 %v1549, %v1533
        %v2110 = vpack.c.b16 %v1550, %v1534
        %v2111 = vpack.c.b16 %v1551, %v1535
        %v2112 = vpack.c.b16 %v1552, %v1536
        %v2113 = vpack.c.b16 %v1553, %v1537
        %v2114 = vpack.c.b16 %v1554, %v1538
        %v2115 = vpack.c.b16 %v1555, %v1539
        %v2116 = vpack.c.b16 %v1556, %v1540
        %v2117 = vpack.c.b16 %v1557, %v1541
        %v2118 = vpack.c.b16 %v1558, %v1542
        %v2119 = vpack.c.b16 %v1559, %v1543
        %v2120 = vpack.c.b16 %v1576, %v1560
        %v2121 = vpack.c.b16 %v1577, %v1561
        %v2122 = vpack.c.b16 %v1578, %v1562
        %v2123 = vpack.c.b16 %v1579, %v1563
        %v2124 = vpack.c.b16 %v1580, %v1564
        %v2125 = vpack.c.b16 %v1581, %v1565
        %v2126 = vpack.c.b16 %v1582, %v1566
        %v2127 = vpack.c.b16 %v1583, %v1567
        %v2128 = vpack.c.b16 %v1584, %v1568
        %v2129 = vpack.c.b16 %v1585, %v1569
        %v2130 = vpack.c.b16 %v1586, %v1570
        %v2131 = vpack.c.b16 %v1587, %v1571
        %v2132 = vpack.c.b16 %v1588, %v1572
        %v2133 = vpack.c.b16 %v1589, %v1573
        %v2134 = vpack.c.b16 %v1590, %v1574
        %v2135 = vpack.c.b16 %v1591, %v1575
        %v2136 = vpack.c.b16 %v1608, %v1592
        %v2137 = vpack.c.b16 %v1609, %v1593
        %v2138 = vpack.c.b16 %v1610, %v1594
        %v2139 = vpack.c.b16 %v1611, %v1595
        %v2140 = vpack.c.b16 %v1612, %v1596
        %v2141 = vpack.c.b16 %v1613, %v1597
        %v2142 = vpack.c.b16 %v1614, %v1598
        %v2143 = vpack.c.b16 %v1615, %v1599
        %v2144 = vpack.c.b16 %v1616, %v1600
        %v2145 = vpack.c.b16 %v1617, %v1601
        %v2146 = vpack.c.b16 %v1618, %v1602
        %v2147 = vpack.c.b16 %v1619, %v1603
        %v2148 = vpack.c.b16 %v1620, %v1604
        %v2149 = vpack.c.b16 %v1621, %v1605
        %v2150 = vpack.c.b16 %v1622, %v1606
        %v2151 = vpack.c.b16 %v1623, %v1607
        %v2152 = vpack.c.b16 %v1640, %v1624
        %v2153 = vpack.c.b16 %v1641, %v1625
        %v2154 = vpack.c.b16 %v1642, %v1626
        %v2155 = vpack.c.b16 %v1643, %v1627
        %v2156 = vpack.c.b16 %v1644, %v1628
        %v2157 = vpack.c.b16 %v1645, %v1629
        %v2158 = vpack.c.b16 %v1646, %v1630
        %v2159 = vpack.c.b16 %v1647, %v1631
        %v2160 = vpack.c.b16 %v1648, %v1632
        %v2161 = vpack.c.b16 %v1649, %v1633
        %v2162 = vpack.c.b16 %v1650, %v1634
        %v2163 = vpack.c.b16 %v1651, %v1635
        %v2164 = vpack.c.b16 %v1652, %v1636
        %v2165 = vpack.c.b16 %v1653, %v1637
        %v2166 = vpack.c.b16 %v1654, %v1638
        %v2167 = vpack.c.b16 %v1655, %v1639
        %v2168 = vpack.c.b16 %v1672, %v1656
        %v2169 = vpack.c.b16 %v1673, %v1657
        %v2170 = vpack.c.b16 %v1674, %v1658
        %v2171 = vpack.c.b16 %v1675, %v1659
        %v2172 = vpack.c.b16 %v1676, %v1660
        %v2173 = vpack.c.b16 %v1677, %v1661
        %v2174 = vpack.c.b16 %v1678, %v1662
        %v2175 = vpack.c.b16 %v1679, %v1663
        %v2176 = vpack.c.b16 %v1680, %v1664
        %v2177 = vpack.c.b16 %v1681, %v1665
        %v2178 = vpack.c.b16 %v1682, %v1666
        %v2179 = vpack.c.b16 %v1683, %v1667
        %v2180 = vpack.c.b16 %v1684, %v1668
        %v2181 = vpack.c.b16 %v1685, %v1669
        %v2182 = vpack.c.b16 %v1686, %v1670
        %v2183 = vpack.c.b16 %v1687, %v1671
        %v2184 = vpack.c.b16 %v1704, %v1688
        %v2185 = vpack.c.b16 %v1705, %v1689
        %v2186 = vpack.c.b16 %v1706, %v1690
        %v2187 = vpack.c.b16 %v1707, %v1691
        %v2188 = vpack.c.b16 %v1708, %v1692
        %v2189 = vpack.c.b16 %v1709, %v1693
        %v2190 = vpack.c.b16 %v1710, %v1694
        %v2191 = vpack.c.b16 %v1711, %v1695
        %v2192 = vpack.c.b16 %v1712, %v1696
        %v2193 = vpack.c.b16 %v1713, %v1697
        %v2194 = vpack.c.b16 %v1714, %v1698
        %v2195 = vpack.c.b16 %v1715, %v1699
        %v2196 = vpack.c.b16 %v1716, %v1700
        %v2197 = vpack.c.b16 %v1717, %v1701
        %v2198 = vpack.c.b16 %v1718, %v1702
        %v2199 = vpack.c.b16 %v1719, %v1703
        %v2200 = vpack.c.b16 %v1736, %v1720
        %v2201 = vpack.c.b16 %v1737, %v1721
        %v2202 = vpack.c.b16 %v1738, %v1722
        %v2203 = vpack.c.b16 %v1739, %v1723
        %v2204 = vpack.c.b16 %v1740, %v1724
        %v2205 = vpack.c.b16 %v1741, %v1725
        %v2206 = vpack.c.b16 %v1742, %v1726
        %v2207 = vpack.c.b16 %v1743, %v1727
        %v2208 = vpack.c.b16 %v1744, %v1728
        %v2209 = vpack.c.b16 %v1745, %v1729
        %v2210 = vpack.c.b16 %v1746, %v1730
        %v2211 = vpack.c.b16 %v1747, %v1731
        %v2212 = vpack.c.b16 %v1748, %v1732
        %v2213 = vpack.c.b16 %v1749, %v1733
        %v2214 = vpack.c.b16 %v1750, %v1734
        %v2215 = vpack.c.b16 %v1751, %v1735
        %v2216 = vpack.c.b16 %v1768, %v1752
        %v2217 = vpack.c.b16 %v1769, %v1753
        %v2218 = vpack.c.b16 %v1770, %v1754
        %v2219 = vpack.c.b16 %v1771, %v1755
        %v2220 = vpack.c.b16 %v1772, %v1756
        %v2221 = vpack.c.b16 %v1773, %v1757
        %v2222 = vpack.c.b16 %v1774, %v1758
        %v2223 = vpack.c.b16 %v1775, %v1759
        %v2224 = vpack.c.b16 %v1776, %v1760
        %v2225 = vpack.c.b16 %v1777, %v1761
        %v2226 = vpack.c.b16 %v1778, %v1762
        %v2227 = vpack.c.b16 %v1779, %v1763
        %v2228 = vpack.c.b16 %v1780, %v1764
        %v2229 = vpack.c.b16 %v1781, %v1765
        %v2230 = vpack.c.b16 %v1782, %v1766
        %v2231 = vpack.c.b16 %v1783, %v1767
        %v2232 = vpack.c.b16 %v1800, %v1784
        %v2233 = vpack.c.b16 %v1801, %v1785
        %v2234 = vpack.c.b16 %v1802, %v1786
        %v2235 = vpack.c.b16 %v1803, %v1787
        %v2236 = vpack.c.b16 %v1804, %v1788
        %v2237 = vpack.c.b16 %v1805, %v1789
        %v2238 = vpack.c.b16 %v1806, %v1790
        %v2239 = vpack.c.b16 %v1807, %v1791
        %v2240 = vpack.c.b16 %v1808, %v1792
        %v2241 = vpack.c.b16 %v1809, %v1793
        %v2242 = vpack.c.b16 %v1810, %v1794
        %v2243 = vpack.c.b16 %v1811, %v1795
        %v2244 = vpack.c.b16 %v1812, %v1796
        %v2245 = vpack.c.b16 %v1813, %v1797
        %v2246 = vpack.c.b16 %v1814, %v1798
        %v2247 = vpack.c.b16 %v1815, %v1799
        %v2248 = vpack.c.b16 %v1832, %v1816
        %v2249 = vpack.c.b16 %v1833, %v1817
        %v2250 = vpack.c.b16 %v1834, %v1818
        %v2251 = vpack.c.b16 %v1835, %v1819
        %v2252 = vpack.c.b16 %v1836, %v1820
        %v2253 = vpack.c.b16 %v1837, %v1821
        %v2254 = vpack.c.b16 %v1838, %v1822
        %v2255 = vpack.c.b16 %v1839, %v1823
        %v2256 = vpack.c.b16 %v1840, %v1824
        %v2257 = vpack.c.b16 %v1841, %v1825
        %v2258 = vpack.c.b16 %v1842, %v1826
        %v2259 = vpack.c.b16 %v1843, %v1827
        %v2260 = vpack.c.b16 %v1844, %v1828
        %v2261 = vpack.c.b16 %v1845, %v1829
        %v2262 = vpack.c.b16 %v1846, %v1830
        %v2263 = vpack.c.b16 %v1847, %v1831
        %v2264 = vpack.c.b16 %v1864, %v1848
        %v2265 = vpack.c.b16 %v1865, %v1849
        %v2266 = vpack.c.b16 %v1866, %v1850
        %v2267 = vpack.c.b16 %v1867, %v1851
        %v2268 = vpack.c.b16 %v1868, %v1852
        %v2269 = vpack.c.b16 %v1869, %v1853
        %v2270 = vpack.c.b16 %v1870, %v1854
        %v2271 = vpack.c.b16 %v1871, %v1855
        %v2272 = vpack.c.b16 %v1872, %v1856
        %v2273 = vpack.c.b16 %v1873, %v1857
        %v2274 = vpack.c.b16 %v1874, %v1858
        %v2275 = vpack.c.b16 %v1875, %v1859
        %v2276 = vpack.c.b16 %v1876, %v1860
        %v2277 = vpack.c.b16 %v1877, %v1861
        %v2278 = vpack.c.b16 %v1878, %v1862
        %v2279 = vpack.c.b16 %v1879, %v1863
        %v2280 = vpack.c.b16 %v1896, %v1880
        %v2281 = vpack.c.b16 %v1897, %v1881
        %v2282 = vpack.c.b16 %v1898, %v1882
        %v2283 = vpack.c.b16 %v1899, %v1883
        %v2284 = vpack.c.b16 %v1900, %v1884
        %v2285 = vpack.c.b16 %v1901, %v1885
        %v2286 = vpack.c.b16 %v1902, %v1886
        %v2287 = vpack.c.b16 %v1903, %v1887
        %v2288 = vpack.c.b16 %v1904, %v1888
        %v2289 = vpack.c.b16 %v1905, %v1889
        %v2290 = vpack.c.b16 %v1906, %v1890
        %v2291 = vpack.c.b16 %v1907, %v1891
        %v2292 = vpack.c.b16 %v1908, %v1892
        %v2293 = vpack.c.b16 %v1909, %v1893
        %v2294 = vpack.c.b16 %v1910, %v1894
        %v2295 = vpack.c.b16 %v1911, %v1895
        %2680 = vmatpush.bf16.msra.mxu0 %v2024
        %2681 = vmatpush.bf16.msra.mxu0 %v2008
        %2682 = vmatpush.bf16.msra.mxu0 %v1992
        %2683 = vmatpush.bf16.msra.mxu0 %v1976
        %2684 = vmatpush.bf16.msra.mxu0 %v1960
        %2685 = vmatpush.bf16.msra.mxu0 %v1944
        %2686 = vmatpush.bf16.msra.mxu0 %v1928
        %2687 = vmatpush.bf16.msra.mxu0 %v1912
        %2688 = vmatmul.bf16.gmra.mxu0 %v337
        %v2689 = vpop.f32.mrf.mxu0
        %v2690 = vadd.f32 %v728, %v2689
        %v2691 = vpop.f32.mrf.mxu0
        %2692 = vdwg.mxu0
        %2693 = vmatpush.bf16.msra.mxu0 %v2152
        %2694 = vmatpush.bf16.msra.mxu0 %v2136
        %2695 = vmatpush.bf16.msra.mxu0 %v2120
        %2696 = vmatpush.bf16.msra.mxu0 %v2104
        %2697 = vmatpush.bf16.msra.mxu0 %v2088
        %2698 = vmatpush.bf16.msra.mxu0 %v2072
        %2699 = vmatpush.bf16.msra.mxu0 %v2056
        %2700 = vmatpush.bf16.msra.mxu0 %v2040
        %2701 = vmatmul.bf16.gmra.mxu0 %v338
        %v2702 = vpop.f32.mrf.mxu0
        %v2703 = vadd.f32 %v2690, %v2702
        %v2704 = vpop.f32.mrf.mxu0
        %2705 = vdwg.mxu0
        %2706 = vmatpush.bf16.msra.mxu0 %v2280
        %2707 = vmatpush.bf16.msra.mxu0 %v2264
        %2708 = vmatpush.bf16.msra.mxu0 %v2248
        %2709 = vmatpush.bf16.msra.mxu0 %v2232
        %2710 = vmatpush.bf16.msra.mxu0 %v2216
        %2711 = vmatpush.bf16.msra.mxu0 %v2200
        %2712 = vmatpush.bf16.msra.mxu0 %v2184
        %2713 = vmatpush.bf16.msra.mxu0 %v2168
        %2714 = vmatmul.bf16.gmra.mxu0 %v339
        %v2715 = vpop.f32.mrf.mxu0
        %v2716 = vadd.f32 %v2703, %v2715
        %v2717 = vpop.f32.mrf.mxu0
        %2718 = vdwg.mxu0
        %2719 = vmatpush.bf16.msra.mxu0 %v2025
        %2720 = vmatpush.bf16.msra.mxu0 %v2009
        %2721 = vmatpush.bf16.msra.mxu0 %v1993
        %2722 = vmatpush.bf16.msra.mxu0 %v1977
        %2723 = vmatpush.bf16.msra.mxu0 %v1961
        %2724 = vmatpush.bf16.msra.mxu0 %v1945
        %2725 = vmatpush.bf16.msra.mxu0 %v1929
        %2726 = vmatpush.bf16.msra.mxu0 %v1913
        %2727 = vmatmul.bf16.gmra.mxu0 %v337
        %v2728 = vpop.f32.mrf.mxu0
        %v2729 = vadd.f32 %v729, %v2728
        %v2730 = vpop.f32.mrf.mxu0
        %2731 = vdwg.mxu0
        %2732 = vmatpush.bf16.msra.mxu0 %v2153
        %2733 = vmatpush.bf16.msra.mxu0 %v2137
        %2734 = vmatpush.bf16.msra.mxu0 %v2121
        %2735 = vmatpush.bf16.msra.mxu0 %v2105
        %2736 = vmatpush.bf16.msra.mxu0 %v2089
        %2737 = vmatpush.bf16.msra.mxu0 %v2073
        %2738 = vmatpush.bf16.msra.mxu0 %v2057
        %2739 = vmatpush.bf16.msra.mxu0 %v2041
        %2740 = vmatmul.bf16.gmra.mxu0 %v338
        %v2741 = vpop.f32.mrf.mxu0
        %v2742 = vadd.f32 %v2729, %v2741
        %v2743 = vpop.f32.mrf.mxu0
        %2744 = vdwg.mxu0
        %2745 = vmatpush.bf16.msra.mxu0 %v2281
        %2746 = vmatpush.bf16.msra.mxu0 %v2265
        %2747 = vmatpush.bf16.msra.mxu0 %v2249
        %2748 = vmatpush.bf16.msra.mxu0 %v2233
        %2749 = vmatpush.bf16.msra.mxu0 %v2217
        %2750 = vmatpush.bf16.msra.mxu0 %v2201
        %2751 = vmatpush.bf16.msra.mxu0 %v2185
        %2752 = vmatpush.bf16.msra.mxu0 %v2169
        %2753 = vmatmul.bf16.gmra.mxu0 %v339
        %v2754 = vpop.f32.mrf.mxu0
        %v2755 = vadd.f32 %v2742, %v2754
        %v2756 = vpop.f32.mrf.mxu0
        %2757 = vdwg.mxu0
        %2758 = vmatpush.bf16.msra.mxu0 %v2026
        %2759 = vmatpush.bf16.msra.mxu0 %v2010
        %2760 = vmatpush.bf16.msra.mxu0 %v1994
        %2761 = vmatpush.bf16.msra.mxu0 %v1978
        %2762 = vmatpush.bf16.msra.mxu0 %v1962
        %2763 = vmatpush.bf16.msra.mxu0 %v1946
        %2764 = vmatpush.bf16.msra.mxu0 %v1930
        %2765 = vmatpush.bf16.msra.mxu0 %v1914
        %2766 = vmatmul.bf16.gmra.mxu0 %v337
        %v2767 = vpop.f32.mrf.mxu0
        %v2768 = vadd.f32 %v730, %v2767
        %v2769 = vpop.f32.mrf.mxu0
        %2770 = vdwg.mxu0
        %2771 = vmatpush.bf16.msra.mxu0 %v2154
        %2772 = vmatpush.bf16.msra.mxu0 %v2138
        %2773 = vmatpush.bf16.msra.mxu0 %v2122
        %2774 = vmatpush.bf16.msra.mxu0 %v2106
        %2775 = vmatpush.bf16.msra.mxu0 %v2090
        %2776 = vmatpush.bf16.msra.mxu0 %v2074
        %2777 = vmatpush.bf16.msra.mxu0 %v2058
        %2778 = vmatpush.bf16.msra.mxu0 %v2042
        %2779 = vmatmul.bf16.gmra.mxu0 %v338
        %v2780 = vpop.f32.mrf.mxu0
        %v2781 = vadd.f32 %v2768, %v2780
        %v2782 = vpop.f32.mrf.mxu0
        %2783 = vdwg.mxu0
        %2784 = vmatpush.bf16.msra.mxu0 %v2282
        %2785 = vmatpush.bf16.msra.mxu0 %v2266
        %2786 = vmatpush.bf16.msra.mxu0 %v2250
        %2787 = vmatpush.bf16.msra.mxu0 %v2234
        %2788 = vmatpush.bf16.msra.mxu0 %v2218
        %2789 = vmatpush.bf16.msra.mxu0 %v2202
        %2790 = vmatpush.bf16.msra.mxu0 %v2186
        %2791 = vmatpush.bf16.msra.mxu0 %v2170
        %2792 = vmatmul.bf16.gmra.mxu0 %v339
        %v2793 = vpop.f32.mrf.mxu0
        %v2794 = vadd.f32 %v2781, %v2793
        %v2795 = vpop.f32.mrf.mxu0
        %2796 = vdwg.mxu0
        %2797 = vmatpush.bf16.msra.mxu0 %v2027
        %2798 = vmatpush.bf16.msra.mxu0 %v2011
        %2799 = vmatpush.bf16.msra.mxu0 %v1995
        %2800 = vmatpush.bf16.msra.mxu0 %v1979
        %2801 = vmatpush.bf16.msra.mxu0 %v1963
        %2802 = vmatpush.bf16.msra.mxu0 %v1947
        %2803 = vmatpush.bf16.msra.mxu0 %v1931
        %2804 = vmatpush.bf16.msra.mxu0 %v1915
        %2805 = vmatmul.bf16.gmra.mxu0 %v337
        %v2806 = vpop.f32.mrf.mxu0
        %v2807 = vadd.f32 %v731, %v2806
        %v2808 = vpop.f32.mrf.mxu0
        %2809 = vdwg.mxu0
        %2810 = vmatpush.bf16.msra.mxu0 %v2155
        %2811 = vmatpush.bf16.msra.mxu0 %v2139
        %2812 = vmatpush.bf16.msra.mxu0 %v2123
        %2813 = vmatpush.bf16.msra.mxu0 %v2107
        %2814 = vmatpush.bf16.msra.mxu0 %v2091
        %2815 = vmatpush.bf16.msra.mxu0 %v2075
        %2816 = vmatpush.bf16.msra.mxu0 %v2059
        %2817 = vmatpush.bf16.msra.mxu0 %v2043
        %2818 = vmatmul.bf16.gmra.mxu0 %v338
        %v2819 = vpop.f32.mrf.mxu0
        %v2820 = vadd.f32 %v2807, %v2819
        %v2821 = vpop.f32.mrf.mxu0
        %2822 = vdwg.mxu0
        %2823 = vmatpush.bf16.msra.mxu0 %v2283
        %2824 = vmatpush.bf16.msra.mxu0 %v2267
        %2825 = vmatpush.bf16.msra.mxu0 %v2251
        %2826 = vmatpush.bf16.msra.mxu0 %v2235
        %2827 = vmatpush.bf16.msra.mxu0 %v2219
        %2828 = vmatpush.bf16.msra.mxu0 %v2203
        %2829 = vmatpush.bf16.msra.mxu0 %v2187
        %2830 = vmatpush.bf16.msra.mxu0 %v2171
        %2831 = vmatmul.bf16.gmra.mxu0 %v339
        %v2832 = vpop.f32.mrf.mxu0
        %v2833 = vadd.f32 %v2820, %v2832
        %v2834 = vpop.f32.mrf.mxu0
        %2835 = vdwg.mxu0
        %2836 = vmatpush.bf16.msra.mxu0 %v2028
        %2837 = vmatpush.bf16.msra.mxu0 %v2012
        %2838 = vmatpush.bf16.msra.mxu0 %v1996
        %2839 = vmatpush.bf16.msra.mxu0 %v1980
        %2840 = vmatpush.bf16.msra.mxu0 %v1964
        %2841 = vmatpush.bf16.msra.mxu0 %v1948
        %2842 = vmatpush.bf16.msra.mxu0 %v1932
        %2843 = vmatpush.bf16.msra.mxu0 %v1916
        %2844 = vmatmul.bf16.gmra.mxu0 %v337
        %v2845 = vpop.f32.mrf.mxu0
        %v2846 = vadd.f32 %v732, %v2845
        %v2847 = vpop.f32.mrf.mxu0
        %2848 = vdwg.mxu0
        %2849 = vmatpush.bf16.msra.mxu0 %v2156
        %2850 = vmatpush.bf16.msra.mxu0 %v2140
        %2851 = vmatpush.bf16.msra.mxu0 %v2124
        %2852 = vmatpush.bf16.msra.mxu0 %v2108
        %2853 = vmatpush.bf16.msra.mxu0 %v2092
        %2854 = vmatpush.bf16.msra.mxu0 %v2076
        %2855 = vmatpush.bf16.msra.mxu0 %v2060
        %2856 = vmatpush.bf16.msra.mxu0 %v2044
        %2857 = vmatmul.bf16.gmra.mxu0 %v338
        %v2858 = vpop.f32.mrf.mxu0
        %v2859 = vadd.f32 %v2846, %v2858
        %v2860 = vpop.f32.mrf.mxu0
        %2861 = vdwg.mxu0
        %2862 = vmatpush.bf16.msra.mxu0 %v2284
        %2863 = vmatpush.bf16.msra.mxu0 %v2268
        %2864 = vmatpush.bf16.msra.mxu0 %v2252
        %2865 = vmatpush.bf16.msra.mxu0 %v2236
        %2866 = vmatpush.bf16.msra.mxu0 %v2220
        %2867 = vmatpush.bf16.msra.mxu0 %v2204
        %2868 = vmatpush.bf16.msra.mxu0 %v2188
        %2869 = vmatpush.bf16.msra.mxu0 %v2172
        %2870 = vmatmul.bf16.gmra.mxu0 %v339
        %v2871 = vpop.f32.mrf.mxu0
        %v2872 = vadd.f32 %v2859, %v2871
        %v2873 = vpop.f32.mrf.mxu0
        %2874 = vdwg.mxu0
        %2875 = vmatpush.bf16.msra.mxu0 %v2029
        %2876 = vmatpush.bf16.msra.mxu0 %v2013
        %2877 = vmatpush.bf16.msra.mxu0 %v1997
        %2878 = vmatpush.bf16.msra.mxu0 %v1981
        %2879 = vmatpush.bf16.msra.mxu0 %v1965
        %2880 = vmatpush.bf16.msra.mxu0 %v1949
        %2881 = vmatpush.bf16.msra.mxu0 %v1933
        %2882 = vmatpush.bf16.msra.mxu0 %v1917
        %2883 = vmatmul.bf16.gmra.mxu0 %v337
        %v2884 = vpop.f32.mrf.mxu0
        %v2885 = vadd.f32 %v733, %v2884
        %v2886 = vpop.f32.mrf.mxu0
        %2887 = vdwg.mxu0
        %2888 = vmatpush.bf16.msra.mxu0 %v2157
        %2889 = vmatpush.bf16.msra.mxu0 %v2141
        %2890 = vmatpush.bf16.msra.mxu0 %v2125
        %2891 = vmatpush.bf16.msra.mxu0 %v2109
        %2892 = vmatpush.bf16.msra.mxu0 %v2093
        %2893 = vmatpush.bf16.msra.mxu0 %v2077
        %2894 = vmatpush.bf16.msra.mxu0 %v2061
        %2895 = vmatpush.bf16.msra.mxu0 %v2045
        %2896 = vmatmul.bf16.gmra.mxu0 %v338
        %v2897 = vpop.f32.mrf.mxu0
        %v2898 = vadd.f32 %v2885, %v2897
        %v2899 = vpop.f32.mrf.mxu0
        %2900 = vdwg.mxu0
        %2901 = vmatpush.bf16.msra.mxu0 %v2285
        %2902 = vmatpush.bf16.msra.mxu0 %v2269
        %2903 = vmatpush.bf16.msra.mxu0 %v2253
        %2904 = vmatpush.bf16.msra.mxu0 %v2237
        %2905 = vmatpush.bf16.msra.mxu0 %v2221
        %2906 = vmatpush.bf16.msra.mxu0 %v2205
        %2907 = vmatpush.bf16.msra.mxu0 %v2189
        %2908 = vmatpush.bf16.msra.mxu0 %v2173
        %2909 = vmatmul.bf16.gmra.mxu0 %v339
        %v2910 = vpop.f32.mrf.mxu0
        %v2911 = vadd.f32 %v2898, %v2910
        %v2912 = vpop.f32.mrf.mxu0
        %2913 = vdwg.mxu0
        %2914 = vmatpush.bf16.msra.mxu0 %v2030
        %2915 = vmatpush.bf16.msra.mxu0 %v2014
        %2916 = vmatpush.bf16.msra.mxu0 %v1998
        %2917 = vmatpush.bf16.msra.mxu0 %v1982
        %2918 = vmatpush.bf16.msra.mxu0 %v1966
        %2919 = vmatpush.bf16.msra.mxu0 %v1950
        %2920 = vmatpush.bf16.msra.mxu0 %v1934
        %2921 = vmatpush.bf16.msra.mxu0 %v1918
        %2922 = vmatmul.bf16.gmra.mxu0 %v337
        %v2923 = vpop.f32.mrf.mxu0
        %v2924 = vadd.f32 %v734, %v2923
        %v2925 = vpop.f32.mrf.mxu0
        %2926 = vdwg.mxu0
        %2927 = vmatpush.bf16.msra.mxu0 %v2158
        %2928 = vmatpush.bf16.msra.mxu0 %v2142
        %2929 = vmatpush.bf16.msra.mxu0 %v2126
        %2930 = vmatpush.bf16.msra.mxu0 %v2110
        %2931 = vmatpush.bf16.msra.mxu0 %v2094
        %2932 = vmatpush.bf16.msra.mxu0 %v2078
        %2933 = vmatpush.bf16.msra.mxu0 %v2062
        %2934 = vmatpush.bf16.msra.mxu0 %v2046
        %2935 = vmatmul.bf16.gmra.mxu0 %v338
        %v2936 = vpop.f32.mrf.mxu0
        %v2937 = vadd.f32 %v2924, %v2936
        %v2938 = vpop.f32.mrf.mxu0
        %2939 = vdwg.mxu0
        %2940 = vmatpush.bf16.msra.mxu0 %v2286
        %2941 = vmatpush.bf16.msra.mxu0 %v2270
        %2942 = vmatpush.bf16.msra.mxu0 %v2254
        %2943 = vmatpush.bf16.msra.mxu0 %v2238
        %2944 = vmatpush.bf16.msra.mxu0 %v2222
        %2945 = vmatpush.bf16.msra.mxu0 %v2206
        %2946 = vmatpush.bf16.msra.mxu0 %v2190
        %2947 = vmatpush.bf16.msra.mxu0 %v2174
        %2948 = vmatmul.bf16.gmra.mxu0 %v339
        %v2949 = vpop.f32.mrf.mxu0
        %v2950 = vadd.f32 %v2937, %v2949
        %v2951 = vpop.f32.mrf.mxu0
        %2952 = vdwg.mxu0
        %2953 = vmatpush.bf16.msra.mxu0 %v2031
        %2954 = vmatpush.bf16.msra.mxu0 %v2015
        %2955 = vmatpush.bf16.msra.mxu0 %v1999
        %2956 = vmatpush.bf16.msra.mxu0 %v1983
        %2957 = vmatpush.bf16.msra.mxu0 %v1967
        %2958 = vmatpush.bf16.msra.mxu0 %v1951
        %2959 = vmatpush.bf16.msra.mxu0 %v1935
        %2960 = vmatpush.bf16.msra.mxu0 %v1919
        %2961 = vmatmul.bf16.gmra.mxu0 %v337
        %v2962 = vpop.f32.mrf.mxu0
        %v2963 = vadd.f32 %v735, %v2962
        %v2964 = vpop.f32.mrf.mxu0
        %2965 = vdwg.mxu0
        %2966 = vmatpush.bf16.msra.mxu0 %v2159
        %2967 = vmatpush.bf16.msra.mxu0 %v2143
        %2968 = vmatpush.bf16.msra.mxu0 %v2127
        %2969 = vmatpush.bf16.msra.mxu0 %v2111
        %2970 = vmatpush.bf16.msra.mxu0 %v2095
        %2971 = vmatpush.bf16.msra.mxu0 %v2079
        %2972 = vmatpush.bf16.msra.mxu0 %v2063
        %2973 = vmatpush.bf16.msra.mxu0 %v2047
        %2974 = vmatmul.bf16.gmra.mxu0 %v338
        %v2975 = vpop.f32.mrf.mxu0
        %v2976 = vadd.f32 %v2963, %v2975
        %v2977 = vpop.f32.mrf.mxu0
        %2978 = vdwg.mxu0
        %2979 = vmatpush.bf16.msra.mxu0 %v2287
        %2980 = vmatpush.bf16.msra.mxu0 %v2271
        %2981 = vmatpush.bf16.msra.mxu0 %v2255
        %2982 = vmatpush.bf16.msra.mxu0 %v2239
        %2983 = vmatpush.bf16.msra.mxu0 %v2223
        %2984 = vmatpush.bf16.msra.mxu0 %v2207
        %2985 = vmatpush.bf16.msra.mxu0 %v2191
        %2986 = vmatpush.bf16.msra.mxu0 %v2175
        %2987 = vmatmul.bf16.gmra.mxu0 %v339
        %v2988 = vpop.f32.mrf.mxu0
        %v2989 = vadd.f32 %v2976, %v2988
        %v2990 = vpop.f32.mrf.mxu0
        %2991 = vdwg.mxu0
        %2992 = vmatpush.bf16.msra.mxu0 %v2032
        %2993 = vmatpush.bf16.msra.mxu0 %v2016
        %2994 = vmatpush.bf16.msra.mxu0 %v2000
        %2995 = vmatpush.bf16.msra.mxu0 %v1984
        %2996 = vmatpush.bf16.msra.mxu0 %v1968
        %2997 = vmatpush.bf16.msra.mxu0 %v1952
        %2998 = vmatpush.bf16.msra.mxu0 %v1936
        %2999 = vmatpush.bf16.msra.mxu0 %v1920
        %3000 = vmatmul.bf16.gmra.mxu0 %v337
        %v3001 = vpop.f32.mrf.mxu0
        %v3002 = vadd.f32 %v736, %v3001
        %v3003 = vpop.f32.mrf.mxu0
        %3004 = vdwg.mxu0
        %3005 = vmatpush.bf16.msra.mxu0 %v2160
        %3006 = vmatpush.bf16.msra.mxu0 %v2144
        %3007 = vmatpush.bf16.msra.mxu0 %v2128
        %3008 = vmatpush.bf16.msra.mxu0 %v2112
        %3009 = vmatpush.bf16.msra.mxu0 %v2096
        %3010 = vmatpush.bf16.msra.mxu0 %v2080
        %3011 = vmatpush.bf16.msra.mxu0 %v2064
        %3012 = vmatpush.bf16.msra.mxu0 %v2048
        %3013 = vmatmul.bf16.gmra.mxu0 %v338
        %v3014 = vpop.f32.mrf.mxu0
        %v3015 = vadd.f32 %v3002, %v3014
        %v3016 = vpop.f32.mrf.mxu0
        %3017 = vdwg.mxu0
        %3018 = vmatpush.bf16.msra.mxu0 %v2288
        %3019 = vmatpush.bf16.msra.mxu0 %v2272
        %3020 = vmatpush.bf16.msra.mxu0 %v2256
        %3021 = vmatpush.bf16.msra.mxu0 %v2240
        %3022 = vmatpush.bf16.msra.mxu0 %v2224
        %3023 = vmatpush.bf16.msra.mxu0 %v2208
        %3024 = vmatpush.bf16.msra.mxu0 %v2192
        %3025 = vmatpush.bf16.msra.mxu0 %v2176
        %3026 = vmatmul.bf16.gmra.mxu0 %v339
        %v3027 = vpop.f32.mrf.mxu0
        %v3028 = vadd.f32 %v3015, %v3027
        %v3029 = vpop.f32.mrf.mxu0
        %3030 = vdwg.mxu0
        %3031 = vmatpush.bf16.msra.mxu0 %v2033
        %3032 = vmatpush.bf16.msra.mxu0 %v2017
        %3033 = vmatpush.bf16.msra.mxu0 %v2001
        %3034 = vmatpush.bf16.msra.mxu0 %v1985
        %3035 = vmatpush.bf16.msra.mxu0 %v1969
        %3036 = vmatpush.bf16.msra.mxu0 %v1953
        %3037 = vmatpush.bf16.msra.mxu0 %v1937
        %3038 = vmatpush.bf16.msra.mxu0 %v1921
        %3039 = vmatmul.bf16.gmra.mxu0 %v337
        %v3040 = vpop.f32.mrf.mxu0
        %v3041 = vadd.f32 %v737, %v3040
        %v3042 = vpop.f32.mrf.mxu0
        %3043 = vdwg.mxu0
        %3044 = vmatpush.bf16.msra.mxu0 %v2161
        %3045 = vmatpush.bf16.msra.mxu0 %v2145
        %3046 = vmatpush.bf16.msra.mxu0 %v2129
        %3047 = vmatpush.bf16.msra.mxu0 %v2113
        %3048 = vmatpush.bf16.msra.mxu0 %v2097
        %3049 = vmatpush.bf16.msra.mxu0 %v2081
        %3050 = vmatpush.bf16.msra.mxu0 %v2065
        %3051 = vmatpush.bf16.msra.mxu0 %v2049
        %3052 = vmatmul.bf16.gmra.mxu0 %v338
        %v3053 = vpop.f32.mrf.mxu0
        %v3054 = vadd.f32 %v3041, %v3053
        %v3055 = vpop.f32.mrf.mxu0
        %3056 = vdwg.mxu0
        %3057 = vmatpush.bf16.msra.mxu0 %v2289
        %3058 = vmatpush.bf16.msra.mxu0 %v2273
        %3059 = vmatpush.bf16.msra.mxu0 %v2257
        %3060 = vmatpush.bf16.msra.mxu0 %v2241
        %3061 = vmatpush.bf16.msra.mxu0 %v2225
        %3062 = vmatpush.bf16.msra.mxu0 %v2209
        %3063 = vmatpush.bf16.msra.mxu0 %v2193
        %3064 = vmatpush.bf16.msra.mxu0 %v2177
        %3065 = vmatmul.bf16.gmra.mxu0 %v339
        %v3066 = vpop.f32.mrf.mxu0
        %v3067 = vadd.f32 %v3054, %v3066
        %v3068 = vpop.f32.mrf.mxu0
        %3069 = vdwg.mxu0
        %3070 = vmatpush.bf16.msra.mxu0 %v2034
        %3071 = vmatpush.bf16.msra.mxu0 %v2018
        %3072 = vmatpush.bf16.msra.mxu0 %v2002
        %3073 = vmatpush.bf16.msra.mxu0 %v1986
        %3074 = vmatpush.bf16.msra.mxu0 %v1970
        %3075 = vmatpush.bf16.msra.mxu0 %v1954
        %3076 = vmatpush.bf16.msra.mxu0 %v1938
        %3077 = vmatpush.bf16.msra.mxu0 %v1922
        %3078 = vmatmul.bf16.gmra.mxu0 %v337
        %v3079 = vpop.f32.mrf.mxu0
        %v3080 = vadd.f32 %v738, %v3079
        %v3081 = vpop.f32.mrf.mxu0
        %3082 = vdwg.mxu0
        %3083 = vmatpush.bf16.msra.mxu0 %v2162
        %3084 = vmatpush.bf16.msra.mxu0 %v2146
        %3085 = vmatpush.bf16.msra.mxu0 %v2130
        %3086 = vmatpush.bf16.msra.mxu0 %v2114
        %3087 = vmatpush.bf16.msra.mxu0 %v2098
        %3088 = vmatpush.bf16.msra.mxu0 %v2082
        %3089 = vmatpush.bf16.msra.mxu0 %v2066
        %3090 = vmatpush.bf16.msra.mxu0 %v2050
        %3091 = vmatmul.bf16.gmra.mxu0 %v338
        %v3092 = vpop.f32.mrf.mxu0
        %v3093 = vadd.f32 %v3080, %v3092
        %v3094 = vpop.f32.mrf.mxu0
        %3095 = vdwg.mxu0
        %3096 = vmatpush.bf16.msra.mxu0 %v2290
        %3097 = vmatpush.bf16.msra.mxu0 %v2274
        %3098 = vmatpush.bf16.msra.mxu0 %v2258
        %3099 = vmatpush.bf16.msra.mxu0 %v2242
        %3100 = vmatpush.bf16.msra.mxu0 %v2226
        %3101 = vmatpush.bf16.msra.mxu0 %v2210
        %3102 = vmatpush.bf16.msra.mxu0 %v2194
        %3103 = vmatpush.bf16.msra.mxu0 %v2178
        %3104 = vmatmul.bf16.gmra.mxu0 %v339
        %v3105 = vpop.f32.mrf.mxu0
        %v3106 = vadd.f32 %v3093, %v3105
        %v3107 = vpop.f32.mrf.mxu0
        %3108 = vdwg.mxu0
        %3109 = vmatpush.bf16.msra.mxu0 %v2035
        %3110 = vmatpush.bf16.msra.mxu0 %v2019
        %3111 = vmatpush.bf16.msra.mxu0 %v2003
        %3112 = vmatpush.bf16.msra.mxu0 %v1987
        %3113 = vmatpush.bf16.msra.mxu0 %v1971
        %3114 = vmatpush.bf16.msra.mxu0 %v1955
        %3115 = vmatpush.bf16.msra.mxu0 %v1939
        %3116 = vmatpush.bf16.msra.mxu0 %v1923
        %3117 = vmatmul.bf16.gmra.mxu0 %v337
        %v3118 = vpop.f32.mrf.mxu0
        %v3119 = vadd.f32 %v739, %v3118
        %v3120 = vpop.f32.mrf.mxu0
        %3121 = vdwg.mxu0
        %3122 = vmatpush.bf16.msra.mxu0 %v2163
        %3123 = vmatpush.bf16.msra.mxu0 %v2147
        %3124 = vmatpush.bf16.msra.mxu0 %v2131
        %3125 = vmatpush.bf16.msra.mxu0 %v2115
        %3126 = vmatpush.bf16.msra.mxu0 %v2099
        %3127 = vmatpush.bf16.msra.mxu0 %v2083
        %3128 = vmatpush.bf16.msra.mxu0 %v2067
        %3129 = vmatpush.bf16.msra.mxu0 %v2051
        %3130 = vmatmul.bf16.gmra.mxu0 %v338
        %v3131 = vpop.f32.mrf.mxu0
        %v3132 = vadd.f32 %v3119, %v3131
        %v3133 = vpop.f32.mrf.mxu0
        %3134 = vdwg.mxu0
        %3135 = vmatpush.bf16.msra.mxu0 %v2291
        %3136 = vmatpush.bf16.msra.mxu0 %v2275
        %3137 = vmatpush.bf16.msra.mxu0 %v2259
        %3138 = vmatpush.bf16.msra.mxu0 %v2243
        %3139 = vmatpush.bf16.msra.mxu0 %v2227
        %3140 = vmatpush.bf16.msra.mxu0 %v2211
        %3141 = vmatpush.bf16.msra.mxu0 %v2195
        %3142 = vmatpush.bf16.msra.mxu0 %v2179
        %3143 = vmatmul.bf16.gmra.mxu0 %v339
        %v3144 = vpop.f32.mrf.mxu0
        %v3145 = vadd.f32 %v3132, %v3144
        %v3146 = vpop.f32.mrf.mxu0
        %3147 = vdwg.mxu0
        %3148 = vmatpush.bf16.msra.mxu0 %v2036
        %3149 = vmatpush.bf16.msra.mxu0 %v2020
        %3150 = vmatpush.bf16.msra.mxu0 %v2004
        %3151 = vmatpush.bf16.msra.mxu0 %v1988
        %3152 = vmatpush.bf16.msra.mxu0 %v1972
        %3153 = vmatpush.bf16.msra.mxu0 %v1956
        %3154 = vmatpush.bf16.msra.mxu0 %v1940
        %3155 = vmatpush.bf16.msra.mxu0 %v1924
        %3156 = vmatmul.bf16.gmra.mxu0 %v337
        %v3157 = vpop.f32.mrf.mxu0
        %v3158 = vadd.f32 %v740, %v3157
        %v3159 = vpop.f32.mrf.mxu0
        %3160 = vdwg.mxu0
        %3161 = vmatpush.bf16.msra.mxu0 %v2164
        %3162 = vmatpush.bf16.msra.mxu0 %v2148
        %3163 = vmatpush.bf16.msra.mxu0 %v2132
        %3164 = vmatpush.bf16.msra.mxu0 %v2116
        %3165 = vmatpush.bf16.msra.mxu0 %v2100
        %3166 = vmatpush.bf16.msra.mxu0 %v2084
        %3167 = vmatpush.bf16.msra.mxu0 %v2068
        %3168 = vmatpush.bf16.msra.mxu0 %v2052
        %3169 = vmatmul.bf16.gmra.mxu0 %v338
        %v3170 = vpop.f32.mrf.mxu0
        %v3171 = vadd.f32 %v3158, %v3170
        %v3172 = vpop.f32.mrf.mxu0
        %3173 = vdwg.mxu0
        %3174 = vmatpush.bf16.msra.mxu0 %v2292
        %3175 = vmatpush.bf16.msra.mxu0 %v2276
        %3176 = vmatpush.bf16.msra.mxu0 %v2260
        %3177 = vmatpush.bf16.msra.mxu0 %v2244
        %3178 = vmatpush.bf16.msra.mxu0 %v2228
        %3179 = vmatpush.bf16.msra.mxu0 %v2212
        %3180 = vmatpush.bf16.msra.mxu0 %v2196
        %3181 = vmatpush.bf16.msra.mxu0 %v2180
        %3182 = vmatmul.bf16.gmra.mxu0 %v339
        %v3183 = vpop.f32.mrf.mxu0
        %v3184 = vadd.f32 %v3171, %v3183
        %v3185 = vpop.f32.mrf.mxu0
        %3186 = vdwg.mxu0
        %3187 = vmatpush.bf16.msra.mxu0 %v2037
        %3188 = vmatpush.bf16.msra.mxu0 %v2021
        %3189 = vmatpush.bf16.msra.mxu0 %v2005
        %3190 = vmatpush.bf16.msra.mxu0 %v1989
        %3191 = vmatpush.bf16.msra.mxu0 %v1973
        %3192 = vmatpush.bf16.msra.mxu0 %v1957
        %3193 = vmatpush.bf16.msra.mxu0 %v1941
        %3194 = vmatpush.bf16.msra.mxu0 %v1925
        %3195 = vmatmul.bf16.gmra.mxu0 %v337
        %v3196 = vpop.f32.mrf.mxu0
        %v3197 = vadd.f32 %v741, %v3196
        %v3198 = vpop.f32.mrf.mxu0
        %3199 = vdwg.mxu0
        %3200 = vmatpush.bf16.msra.mxu0 %v2165
        %3201 = vmatpush.bf16.msra.mxu0 %v2149
        %3202 = vmatpush.bf16.msra.mxu0 %v2133
        %3203 = vmatpush.bf16.msra.mxu0 %v2117
        %3204 = vmatpush.bf16.msra.mxu0 %v2101
        %3205 = vmatpush.bf16.msra.mxu0 %v2085
        %3206 = vmatpush.bf16.msra.mxu0 %v2069
        %3207 = vmatpush.bf16.msra.mxu0 %v2053
        %3208 = vmatmul.bf16.gmra.mxu0 %v338
        %v3209 = vpop.f32.mrf.mxu0
        %v3210 = vadd.f32 %v3197, %v3209
        %v3211 = vpop.f32.mrf.mxu0
        %3212 = vdwg.mxu0
        %3213 = vmatpush.bf16.msra.mxu0 %v2293
        %3214 = vmatpush.bf16.msra.mxu0 %v2277
        %3215 = vmatpush.bf16.msra.mxu0 %v2261
        %3216 = vmatpush.bf16.msra.mxu0 %v2245
        %3217 = vmatpush.bf16.msra.mxu0 %v2229
        %3218 = vmatpush.bf16.msra.mxu0 %v2213
        %3219 = vmatpush.bf16.msra.mxu0 %v2197
        %3220 = vmatpush.bf16.msra.mxu0 %v2181
        %3221 = vmatmul.bf16.gmra.mxu0 %v339
        %v3222 = vpop.f32.mrf.mxu0
        %v3223 = vadd.f32 %v3210, %v3222
        %v3224 = vpop.f32.mrf.mxu0
        %3225 = vdwg.mxu0
        %3226 = vmatpush.bf16.msra.mxu0 %v2038
        %3227 = vmatpush.bf16.msra.mxu0 %v2022
        %3228 = vmatpush.bf16.msra.mxu0 %v2006
        %3229 = vmatpush.bf16.msra.mxu0 %v1990
        %3230 = vmatpush.bf16.msra.mxu0 %v1974
        %3231 = vmatpush.bf16.msra.mxu0 %v1958
        %3232 = vmatpush.bf16.msra.mxu0 %v1942
        %3233 = vmatpush.bf16.msra.mxu0 %v1926
        %3234 = vmatmul.bf16.gmra.mxu0 %v337
        %v3235 = vpop.f32.mrf.mxu0
        %v3236 = vadd.f32 %v742, %v3235
        %v3237 = vpop.f32.mrf.mxu0
        %3238 = vdwg.mxu0
        %3239 = vmatpush.bf16.msra.mxu0 %v2166
        %3240 = vmatpush.bf16.msra.mxu0 %v2150
        %3241 = vmatpush.bf16.msra.mxu0 %v2134
        %3242 = vmatpush.bf16.msra.mxu0 %v2118
        %3243 = vmatpush.bf16.msra.mxu0 %v2102
        %3244 = vmatpush.bf16.msra.mxu0 %v2086
        %3245 = vmatpush.bf16.msra.mxu0 %v2070
        %3246 = vmatpush.bf16.msra.mxu0 %v2054
        %3247 = vmatmul.bf16.gmra.mxu0 %v338
        %v3248 = vpop.f32.mrf.mxu0
        %v3249 = vadd.f32 %v3236, %v3248
        %v3250 = vpop.f32.mrf.mxu0
        %3251 = vdwg.mxu0
        %3252 = vmatpush.bf16.msra.mxu0 %v2294
        %3253 = vmatpush.bf16.msra.mxu0 %v2278
        %3254 = vmatpush.bf16.msra.mxu0 %v2262
        %3255 = vmatpush.bf16.msra.mxu0 %v2246
        %3256 = vmatpush.bf16.msra.mxu0 %v2230
        %3257 = vmatpush.bf16.msra.mxu0 %v2214
        %3258 = vmatpush.bf16.msra.mxu0 %v2198
        %3259 = vmatpush.bf16.msra.mxu0 %v2182
        %3260 = vmatmul.bf16.gmra.mxu0 %v339
        %v3261 = vpop.f32.mrf.mxu0
        %v3262 = vadd.f32 %v3249, %v3261
        %v3263 = vpop.f32.mrf.mxu0
        %3264 = vdwg.mxu0
        %3265 = vmatpush.bf16.msra.mxu0 %v2039
        %3266 = vmatpush.bf16.msra.mxu0 %v2023
        %3267 = vmatpush.bf16.msra.mxu0 %v2007
        %3268 = vmatpush.bf16.msra.mxu0 %v1991
        %3269 = vmatpush.bf16.msra.mxu0 %v1975
        %3270 = vmatpush.bf16.msra.mxu0 %v1959
        %3271 = vmatpush.bf16.msra.mxu0 %v1943
        %3272 = vmatpush.bf16.msra.mxu0 %v1927
        %3273 = vmatmul.bf16.gmra.mxu0 %v337
        %v3274 = vpop.f32.mrf.mxu0
        %v3275 = vadd.f32 %v743, %v3274
        %v3276 = vpop.f32.mrf.mxu0
        %3277 = vdwg.mxu0
        %3278 = vmatpush.bf16.msra.mxu0 %v2167
        %3279 = vmatpush.bf16.msra.mxu0 %v2151
        %3280 = vmatpush.bf16.msra.mxu0 %v2135
        %3281 = vmatpush.bf16.msra.mxu0 %v2119
        %3282 = vmatpush.bf16.msra.mxu0 %v2103
        %3283 = vmatpush.bf16.msra.mxu0 %v2087
        %3284 = vmatpush.bf16.msra.mxu0 %v2071
        %3285 = vmatpush.bf16.msra.mxu0 %v2055
        %3286 = vmatmul.bf16.gmra.mxu0 %v338
        %v3287 = vpop.f32.mrf.mxu0
        %v3288 = vadd.f32 %v3275, %v3287
        %v3289 = vpop.f32.mrf.mxu0
        %3290 = vdwg.mxu0
        %3291 = vmatpush.bf16.msra.mxu0 %v2295
        %3292 = vmatpush.bf16.msra.mxu0 %v2279
        %3293 = vmatpush.bf16.msra.mxu0 %v2263
        %3294 = vmatpush.bf16.msra.mxu0 %v2247
        %3295 = vmatpush.bf16.msra.mxu0 %v2231
        %3296 = vmatpush.bf16.msra.mxu0 %v2215
        %3297 = vmatpush.bf16.msra.mxu0 %v2199
        %3298 = vmatpush.bf16.msra.mxu0 %v2183
        %3299 = vmatmul.bf16.gmra.mxu0 %v339
        %v3300 = vpop.f32.mrf.mxu0
        %v3301 = vadd.f32 %v3288, %v3300
        %v3302 = vpop.f32.mrf.mxu0
        %3303 = vdwg.mxu0
        %vm3304 = vcmp.gt.f32.partialorder %v2716, 0.0
        %vm3305 = vcmp.gt.f32.partialorder %v2755, 0.0
        %vm3306 = vcmp.gt.f32.partialorder %v2794, 0.0
        %vm3307 = vcmp.gt.f32.partialorder %v2833, 0.0
        %vm3308 = vcmp.gt.f32.partialorder %v2872, 0.0
        %vm3309 = vcmp.gt.f32.partialorder %v2911, 0.0
        %vm3310 = vcmp.gt.f32.partialorder %v2950, 0.0
        %vm3311 = vcmp.gt.f32.partialorder %v2989, 0.0
        %vm3312 = vcmp.gt.f32.partialorder %v3028, 0.0
        %vm3313 = vcmp.gt.f32.partialorder %v3067, 0.0
        %vm3314 = vcmp.gt.f32.partialorder %v3106, 0.0
        %vm3315 = vcmp.gt.f32.partialorder %v3145, 0.0
        %vm3316 = vcmp.gt.f32.partialorder %v3184, 0.0
        %vm3317 = vcmp.gt.f32.partialorder %v3223, 0.0
        %vm3318 = vcmp.gt.f32.partialorder %v3262, 0.0
        %vm3319 = vcmp.gt.f32.partialorder %v3301, 0.0
        %v3320 = vmul.f32 %v2716, 0.01
        %v3321 = vmul.f32 %v2755, 0.01
        %v3322 = vmul.f32 %v2794, 0.01
        %v3323 = vmul.f32 %v2833, 0.01
        %v3324 = vmul.f32 %v2872, 0.01
        %v3325 = vmul.f32 %v2911, 0.01
        %v3326 = vmul.f32 %v2950, 0.01
        %v3327 = vmul.f32 %v2989, 0.01
        %v3328 = vmul.f32 %v3028, 0.01
        %v3329 = vmul.f32 %v3067, 0.01
        %v3330 = vmul.f32 %v3106, 0.01
        %v3331 = vmul.f32 %v3145, 0.01
        %v3332 = vmul.f32 %v3184, 0.01
        %v3333 = vmul.f32 %v3223, 0.01
        %v3334 = vmul.f32 %v3262, 0.01
        %v3335 = vmul.f32 %v3301, 0.01
        %v3336 = vsel %vm3304, %v2716, %v3320
        %v3337 = vsel %vm3305, %v2755, %v3321
        %v3338 = vsel %vm3306, %v2794, %v3322
        %v3339 = vsel %vm3307, %v2833, %v3323
        %v3340 = vsel %vm3308, %v2872, %v3324
        %v3341 = vsel %vm3309, %v2911, %v3325
        %v3342 = vsel %vm3310, %v2950, %v3326
        %v3343 = vsel %vm3311, %v2989, %v3327
        %v3344 = vsel %vm3312, %v3028, %v3328
        %v3345 = vsel %vm3313, %v3067, %v3329
        %v3346 = vsel %vm3314, %v3106, %v3330
        %v3347 = vsel %vm3315, %v3145, %v3331
        %v3348 = vsel %vm3316, %v3184, %v3332
        %v3349 = vsel %vm3317, %v3223, %v3333
        %v3350 = vsel %vm3318, %v3262, %v3334
        %v3351 = vsel %vm3319, %v3301, %v3335
        %v3352 = vpack.c.bf16 %v3336, %v3336
        %v3353 = vpack.c.bf16 %v3337, %v3337
        %v3354 = vpack.c.bf16 %v3338, %v3338
        %v3355 = vpack.c.bf16 %v3339, %v3339
        %v3356 = vpack.c.bf16 %v3340, %v3340
        %v3357 = vpack.c.bf16 %v3341, %v3341
        %v3358 = vpack.c.bf16 %v3342, %v3342
        %v3359 = vpack.c.bf16 %v3343, %v3343
        %v3360 = vpack.c.bf16 %v3344, %v3344
        %v3361 = vpack.c.bf16 %v3345, %v3345
        %v3362 = vpack.c.bf16 %v3346, %v3346
        %v3363 = vpack.c.bf16 %v3347, %v3347
        %v3364 = vpack.c.bf16 %v3348, %v3348
        %v3365 = vpack.c.bf16 %v3349, %v3349
        %v3366 = vpack.c.bf16 %v3350, %v3350
        %v3367 = vpack.c.bf16 %v3351, %v3351
        %v3368 = vld [vmem:[%s286] sm:$0xff]
        %v3369 = vld [vmem:[%s286 + $0x8] sm:$0xff]
        %v3370 = vld [vmem:[%s286 + $0x10] sm:$0xff]
        %v3371 = vld [vmem:[%s286 + $0x18] sm:$0xff]
        %3373 = vst [vmem:[#allocation1] ss:$4 sm:$0xff] %v3368
        %s3375 = scalar_lea.vmem [#allocation1], 32
        %3376 = vst [vmem:[%s3375] ss:$4 sm:$0xff] %v3369
        %v3377 = vld.sshfl [vmem:[#allocation1] sm:$0xff pattern:$0x73625140]
        %v3378 = vld.sshfl [vmem:[#allocation1 + $0x8] sm:$0xff pattern:$0x73625140]
        %v3379 = vld.sshfl [vmem:[#allocation1 + $0x10] sm:$0xff pattern:$0x73625140]
        %v3380 = vld.sshfl [vmem:[#allocation1 + $0x18] sm:$0xff pattern:$0x73625140]
        %v3381 = vld.sshfl [vmem:[#allocation1 + $0x20] sm:$0xff pattern:$0x73625140]
        %v3382 = vld.sshfl [vmem:[#allocation1 + $0x28] sm:$0xff pattern:$0x73625140]
        %v3383 = vld.sshfl [vmem:[#allocation1 + $0x30] sm:$0xff pattern:$0x73625140]
        %v3384 = vld.sshfl [vmem:[#allocation1 + $0x38] sm:$0xff pattern:$0x73625140]
        %3386 = vst [vmem:[#allocation1] ss:$4 sm:$0xff] %v3370
        %3388 = vst [vmem:[%s3375] ss:$4 sm:$0xff] %v3371
        %v3389 = vld.sshfl [vmem:[#allocation1] sm:$0xff pattern:$0x73625140]
        %v3390 = vld.sshfl [vmem:[#allocation1 + $0x8] sm:$0xff pattern:$0x73625140]
        %v3391 = vld.sshfl [vmem:[#allocation1 + $0x10] sm:$0xff pattern:$0x73625140]
        %v3392 = vld.sshfl [vmem:[#allocation1 + $0x18] sm:$0xff pattern:$0x73625140]
        %v3393 = vld.sshfl [vmem:[#allocation1 + $0x20] sm:$0xff pattern:$0x73625140]
        %v3394 = vld.sshfl [vmem:[#allocation1 + $0x28] sm:$0xff pattern:$0x73625140]
        %v3395 = vld.sshfl [vmem:[#allocation1 + $0x30] sm:$0xff pattern:$0x73625140]
        %v3396 = vld.sshfl [vmem:[#allocation1 + $0x38] sm:$0xff pattern:$0x73625140]
        %3413 = vmatpush.bf16.xpose.msra.mxu0 0
        %3414 = vmatpush.bf16.xpose.msra.mxu0 0
        %3415 = vmatpush.bf16.xpose.msra.mxu0 0
        %3416 = vmatpush.bf16.xpose.msra.mxu0 0
        %3417 = vmatpush.bf16.xpose.msra.mxu0 0
        %3418 = vmatpush.bf16.xpose.msra.mxu0 0
        %3419 = vmatpush.bf16.xpose.msra.mxu0 0
        %3420 = vmatpush.bf16.xpose.msra.mxu0 %v3377
        %3421 = vmatmul.bf16.gmra.mxu0 %v3352
        %v3422 = vpop.f32.mrf.mxu0
        %v3423 = vadd.f32 0.0, %v3422
        %v3424 = vpop.f32.mrf.mxu0
        %3425 = vdwg.mxu0
        %3426 = vmatpush.bf16.xpose.msra.mxu0 0
        %3427 = vmatpush.bf16.xpose.msra.mxu0 0
        %3428 = vmatpush.bf16.xpose.msra.mxu0 0
        %3429 = vmatpush.bf16.xpose.msra.mxu0 0
        %3430 = vmatpush.bf16.xpose.msra.mxu0 0
        %3431 = vmatpush.bf16.xpose.msra.mxu0 0
        %3432 = vmatpush.bf16.xpose.msra.mxu0 0
        %3433 = vmatpush.bf16.xpose.msra.mxu0 %v3378
        %3434 = vmatmul.bf16.gmra.mxu0 %v3353
        %v3435 = vpop.f32.mrf.mxu0
        %v3436 = vadd.f32 %v3423, %v3435
        %v3437 = vpop.f32.mrf.mxu0
        %3438 = vdwg.mxu0
        %3439 = vmatpush.bf16.xpose.msra.mxu0 0
        %3440 = vmatpush.bf16.xpose.msra.mxu0 0
        %3441 = vmatpush.bf16.xpose.msra.mxu0 0
        %3442 = vmatpush.bf16.xpose.msra.mxu0 0
        %3443 = vmatpush.bf16.xpose.msra.mxu0 0
        %3444 = vmatpush.bf16.xpose.msra.mxu0 0
        %3445 = vmatpush.bf16.xpose.msra.mxu0 0
        %3446 = vmatpush.bf16.xpose.msra.mxu0 %v3379
        %3447 = vmatmul.bf16.gmra.mxu0 %v3354
        %v3448 = vpop.f32.mrf.mxu0
        %v3449 = vadd.f32 %v3436, %v3448
        %v3450 = vpop.f32.mrf.mxu0
        %3451 = vdwg.mxu0
        %3452 = vmatpush.bf16.xpose.msra.mxu0 0
        %3453 = vmatpush.bf16.xpose.msra.mxu0 0
        %3454 = vmatpush.bf16.xpose.msra.mxu0 0
        %3455 = vmatpush.bf16.xpose.msra.mxu0 0
        %3456 = vmatpush.bf16.xpose.msra.mxu0 0
        %3457 = vmatpush.bf16.xpose.msra.mxu0 0
        %3458 = vmatpush.bf16.xpose.msra.mxu0 0
        %3459 = vmatpush.bf16.xpose.msra.mxu0 %v3380
        %3460 = vmatmul.bf16.gmra.mxu0 %v3355
        %v3461 = vpop.f32.mrf.mxu0
        %v3462 = vadd.f32 %v3449, %v3461
        %v3463 = vpop.f32.mrf.mxu0
        %3464 = vdwg.mxu0
        %3465 = vmatpush.bf16.xpose.msra.mxu0 0
        %3466 = vmatpush.bf16.xpose.msra.mxu0 0
        %3467 = vmatpush.bf16.xpose.msra.mxu0 0
        %3468 = vmatpush.bf16.xpose.msra.mxu0 0
        %3469 = vmatpush.bf16.xpose.msra.mxu0 0
        %3470 = vmatpush.bf16.xpose.msra.mxu0 0
        %3471 = vmatpush.bf16.xpose.msra.mxu0 0
        %3472 = vmatpush.bf16.xpose.msra.mxu0 %v3381
        %3473 = vmatmul.bf16.gmra.mxu0 %v3356
        %v3474 = vpop.f32.mrf.mxu0
        %v3475 = vadd.f32 %v3462, %v3474
        %v3476 = vpop.f32.mrf.mxu0
        %3477 = vdwg.mxu0
        %3478 = vmatpush.bf16.xpose.msra.mxu0 0
        %3479 = vmatpush.bf16.xpose.msra.mxu0 0
        %3480 = vmatpush.bf16.xpose.msra.mxu0 0
        %3481 = vmatpush.bf16.xpose.msra.mxu0 0
        %3482 = vmatpush.bf16.xpose.msra.mxu0 0
        %3483 = vmatpush.bf16.xpose.msra.mxu0 0
        %3484 = vmatpush.bf16.xpose.msra.mxu0 0
        %3485 = vmatpush.bf16.xpose.msra.mxu0 %v3382
        %3486 = vmatmul.bf16.gmra.mxu0 %v3357
        %v3487 = vpop.f32.mrf.mxu0
        %v3488 = vadd.f32 %v3475, %v3487
        %v3489 = vpop.f32.mrf.mxu0
        %3490 = vdwg.mxu0
        %3491 = vmatpush.bf16.xpose.msra.mxu0 0
        %3492 = vmatpush.bf16.xpose.msra.mxu0 0
        %3493 = vmatpush.bf16.xpose.msra.mxu0 0
        %3494 = vmatpush.bf16.xpose.msra.mxu0 0
        %3495 = vmatpush.bf16.xpose.msra.mxu0 0
        %3496 = vmatpush.bf16.xpose.msra.mxu0 0
        %3497 = vmatpush.bf16.xpose.msra.mxu0 0
        %3498 = vmatpush.bf16.xpose.msra.mxu0 %v3383
        %3499 = vmatmul.bf16.gmra.mxu0 %v3358
        %v3500 = vpop.f32.mrf.mxu0
        %v3501 = vadd.f32 %v3488, %v3500
        %v3502 = vpop.f32.mrf.mxu0
        %3503 = vdwg.mxu0
        %3504 = vmatpush.bf16.xpose.msra.mxu0 0
        %3505 = vmatpush.bf16.xpose.msra.mxu0 0
        %3506 = vmatpush.bf16.xpose.msra.mxu0 0
        %3507 = vmatpush.bf16.xpose.msra.mxu0 0
        %3508 = vmatpush.bf16.xpose.msra.mxu0 0
        %3509 = vmatpush.bf16.xpose.msra.mxu0 0
        %3510 = vmatpush.bf16.xpose.msra.mxu0 0
        %3511 = vmatpush.bf16.xpose.msra.mxu0 %v3384
        %3512 = vmatmul.bf16.gmra.mxu0 %v3359
        %v3513 = vpop.f32.mrf.mxu0
        %v3514 = vadd.f32 %v3501, %v3513
        %v3515 = vpop.f32.mrf.mxu0
        %3516 = vdwg.mxu0
        %3517 = vmatpush.bf16.xpose.msra.mxu0 0
        %3518 = vmatpush.bf16.xpose.msra.mxu0 0
        %3519 = vmatpush.bf16.xpose.msra.mxu0 0
        %3520 = vmatpush.bf16.xpose.msra.mxu0 0
        %3521 = vmatpush.bf16.xpose.msra.mxu0 0
        %3522 = vmatpush.bf16.xpose.msra.mxu0 0
        %3523 = vmatpush.bf16.xpose.msra.mxu0 0
        %3524 = vmatpush.bf16.xpose.msra.mxu0 %v3389
        %3525 = vmatmul.bf16.gmra.mxu0 %v3360
        %v3526 = vpop.f32.mrf.mxu0
        %v3527 = vadd.f32 %v3514, %v3526
        %v3528 = vpop.f32.mrf.mxu0
        %3529 = vdwg.mxu0
        %3530 = vmatpush.bf16.xpose.msra.mxu0 0
        %3531 = vmatpush.bf16.xpose.msra.mxu0 0
        %3532 = vmatpush.bf16.xpose.msra.mxu0 0
        %3533 = vmatpush.bf16.xpose.msra.mxu0 0
        %3534 = vmatpush.bf16.xpose.msra.mxu0 0
        %3535 = vmatpush.bf16.xpose.msra.mxu0 0
        %3536 = vmatpush.bf16.xpose.msra.mxu0 0
        %3537 = vmatpush.bf16.xpose.msra.mxu0 %v3390
        %3538 = vmatmul.bf16.gmra.mxu0 %v3361
        %v3539 = vpop.f32.mrf.mxu0
        %v3540 = vadd.f32 %v3527, %v3539
        %v3541 = vpop.f32.mrf.mxu0
        %3542 = vdwg.mxu0
        %3543 = vmatpush.bf16.xpose.msra.mxu0 0
        %3544 = vmatpush.bf16.xpose.msra.mxu0 0
        %3545 = vmatpush.bf16.xpose.msra.mxu0 0
        %3546 = vmatpush.bf16.xpose.msra.mxu0 0
        %3547 = vmatpush.bf16.xpose.msra.mxu0 0
        %3548 = vmatpush.bf16.xpose.msra.mxu0 0
        %3549 = vmatpush.bf16.xpose.msra.mxu0 0
        %3550 = vmatpush.bf16.xpose.msra.mxu0 %v3391
        %3551 = vmatmul.bf16.gmra.mxu0 %v3362
        %v3552 = vpop.f32.mrf.mxu0
        %v3553 = vadd.f32 %v3540, %v3552
        %v3554 = vpop.f32.mrf.mxu0
        %3555 = vdwg.mxu0
        %3556 = vmatpush.bf16.xpose.msra.mxu0 0
        %3557 = vmatpush.bf16.xpose.msra.mxu0 0
        %3558 = vmatpush.bf16.xpose.msra.mxu0 0
        %3559 = vmatpush.bf16.xpose.msra.mxu0 0
        %3560 = vmatpush.bf16.xpose.msra.mxu0 0
        %3561 = vmatpush.bf16.xpose.msra.mxu0 0
        %3562 = vmatpush.bf16.xpose.msra.mxu0 0
        %3563 = vmatpush.bf16.xpose.msra.mxu0 %v3392
        %3564 = vmatmul.bf16.gmra.mxu0 %v3363
        %v3565 = vpop.f32.mrf.mxu0
        %v3566 = vadd.f32 %v3553, %v3565
        %v3567 = vpop.f32.mrf.mxu0
        %3568 = vdwg.mxu0
        %3569 = vmatpush.bf16.xpose.msra.mxu0 0
        %3570 = vmatpush.bf16.xpose.msra.mxu0 0
        %3571 = vmatpush.bf16.xpose.msra.mxu0 0
        %3572 = vmatpush.bf16.xpose.msra.mxu0 0
        %3573 = vmatpush.bf16.xpose.msra.mxu0 0
        %3574 = vmatpush.bf16.xpose.msra.mxu0 0
        %3575 = vmatpush.bf16.xpose.msra.mxu0 0
        %3576 = vmatpush.bf16.xpose.msra.mxu0 %v3393
        %3577 = vmatmul.bf16.gmra.mxu0 %v3364
        %v3578 = vpop.f32.mrf.mxu0
        %v3579 = vadd.f32 %v3566, %v3578
        %v3580 = vpop.f32.mrf.mxu0
        %3581 = vdwg.mxu0
        %3582 = vmatpush.bf16.xpose.msra.mxu0 0
        %3583 = vmatpush.bf16.xpose.msra.mxu0 0
        %3584 = vmatpush.bf16.xpose.msra.mxu0 0
        %3585 = vmatpush.bf16.xpose.msra.mxu0 0
        %3586 = vmatpush.bf16.xpose.msra.mxu0 0
        %3587 = vmatpush.bf16.xpose.msra.mxu0 0
        %3588 = vmatpush.bf16.xpose.msra.mxu0 0
        %3589 = vmatpush.bf16.xpose.msra.mxu0 %v3394
        %3590 = vmatmul.bf16.gmra.mxu0 %v3365
        %v3591 = vpop.f32.mrf.mxu0
        %v3592 = vadd.f32 %v3579, %v3591
        %v3593 = vpop.f32.mrf.mxu0
        %3594 = vdwg.mxu0
        %3595 = vmatpush.bf16.xpose.msra.mxu0 0
        %3596 = vmatpush.bf16.xpose.msra.mxu0 0
        %3597 = vmatpush.bf16.xpose.msra.mxu0 0
        %3598 = vmatpush.bf16.xpose.msra.mxu0 0
        %3599 = vmatpush.bf16.xpose.msra.mxu0 0
        %3600 = vmatpush.bf16.xpose.msra.mxu0 0
        %3601 = vmatpush.bf16.xpose.msra.mxu0 0
        %3602 = vmatpush.bf16.xpose.msra.mxu0 %v3395
        %3603 = vmatmul.bf16.gmra.mxu0 %v3366
        %v3604 = vpop.f32.mrf.mxu0
        %v3605 = vadd.f32 %v3592, %v3604
        %v3606 = vpop.f32.mrf.mxu0
        %3607 = vdwg.mxu0
        %3608 = vmatpush.bf16.xpose.msra.mxu0 0
        %3609 = vmatpush.bf16.xpose.msra.mxu0 0
        %3610 = vmatpush.bf16.xpose.msra.mxu0 0
        %3611 = vmatpush.bf16.xpose.msra.mxu0 0
        %3612 = vmatpush.bf16.xpose.msra.mxu0 0
        %3613 = vmatpush.bf16.xpose.msra.mxu0 0
        %3614 = vmatpush.bf16.xpose.msra.mxu0 0
        %3615 = vmatpush.bf16.xpose.msra.mxu0 %v3396
        %3616 = vmatmul.bf16.gmra.mxu0 %v3367
        %v3617 = vpop.f32.mrf.mxu0
        %v3618 = vadd.f32 %v3605, %v3617
        %v3619 = vpop.f32.mrf.mxu0
        %3620 = vdwg.mxu0
        %p3621 = scmp.eq.s32.totalorder %s24, 0
        // Predicated region
        $region57: #{magcn_forward.3} parent=39 // pred_check
          %p3622 = pneg %p3621
        $region58: #{magcn_forward.3} parent=39 // pred_check_branch
          %3624 = sbr.rel (%p3622) target = $region60
        $region59: #{magcn_forward.3} parent=39 // pred_region
          %v3625 = vld [vmem:[#allocation8] sm:$0x1]
          %v3627 = vperm.slane %v3625, 0
          %vm3629 = vcmask 17408
          %3630 = vst.msk [vmem:[#allocation10] sm:$0x3] %vm3629, %v3627
        $region60: #{magcn_forward.3} parent=39 // pred_fallthru
          _
        %v3631 = vld [vmem:[#allocation10] sm:$0x3]
        %v3632 = vadd.f32 %v3631, %v3618
        %vm3633 = vcmask 17408
        %3634 = vst.msk [vmem:[#allocation10] sm:$0x3] %vm3633, %v3632
        // Predicated region
        $region61: #{magcn_forward.3} parent=39 // pred_check
          %p3635 = pneg %p157
        $region62: #{magcn_forward.3} parent=39 // pred_check_branch
          %3637 = sbr.rel (%p3635) target = $region64
        $region63: #{magcn_forward.3} parent=39 // pred_region
          %3639 = vsyncadd [#allocation4], 0
          %s3641 = sshll.u32 [#allocation10], 4
          %s3642 = int_to_ptr.vmem [resolvable:$true] %s3641
          %s3643 = sshll.u32 %s5, 4
          %s3644 = int_to_ptr.hbm [resolvable:$true] %s3643
          %3646 = dma.vmem_to_hbm [thread:$0]  %s3642, 32, %s3644, [#allocation4]
        $region64: #{magcn_forward.3} parent=39 // pred_fallthru
          _
        // Predicated region
        $region65: #{magcn_forward.3} parent=39 // pred_check
          %p3647 = pneg %p157
        $region66: #{magcn_forward.3} parent=39 // pred_check_branch
          %3649 = sbr.rel (%p3647) target = $region68
        $region67: #{magcn_forward.3} parent=39 // pred_region
          %3651 = dma.done [#allocation4], 32
        $region68: #{magcn_forward.3} parent=39 // pred_fallthru
          _
      $region40: #{magcn_forward.3} parent=5 // pred_fallthru
        _
      %p3652 = scmp.le.s32.totalorder 2, %s19
      // Predicated region
      $region69: #{magcn_forward.3} parent=5 // pred_check
        %p3653 = pneg %p3652
      $region70: #{magcn_forward.3} parent=5 // pred_check_branch
        %3655 = sbr.rel (%p3653) target = $region72
      $region71: #{magcn_forward.3} parent=5 // pred_region
        %s3656 = ssub.s32 %s19, 2
      $region72: #{magcn_forward.3} parent=5 // pred_fallthru
        _
    $region6: #{magcn_forward.3} parent=1 // loop_footer
      %s23 = sadd.s32 1, %s19
    $region7: #{magcn_forward.3} parent=1 // loop_footer_branch
      %18 = sbr.rel target = $region3
    $region8: #{magcn_forward.3} parent=1 // loop_exit
      _
    %3657 = vsyncpa [#allocation3], 1
    %s3658 = scalar_lea.sflag [#allocation3], 1
    %3659 = vsyncpa %s3658, 1
    %3660 = vsyncpa [#allocation6], 1
    %s3661 = scalar_lea.sflag [#allocation6], 1
    %3662 = vsyncpa %s3661, 1
    %3663 = vsyncpa [#allocation9], 1
    %3664 = vsyncpa [#allocation4], 1
    %s3665 = scalar_lea.sflag [#allocation4], 1
    %3666 = vsyncpa %s3665, 1

</llo_original>
